<compile_context>
chip_gen: v6e
topology: v6e:2x2x1
jax: 0.10.0
libtpu: 0.0.40
codegen_flags: <defaults>
</compile_context>

<pallas_src>
import numpy as np
import jax
import jax.numpy as jnp
from jax.experimental import pallas as pl
from jax.experimental.pallas import tpu as pltpu


# ----------------------------- Pallas kernel --------------------------------
def bilstm_kernel(x_ref, wih_ref, whh_ref, b_ref, len_ref, o_ref):
    """Fused bidirectional LSTM.

    x_ref   : (B, T, D)        input, batch-first
    wih_ref : (D, 8H)          [fwd 4H | bwd 4H], gate order [i, f, o, g]
    whh_ref : (H, 8H)          [fwd 4H | bwd 4H], gate order [i, f, o, g]
    b_ref   : (1, 8H)          b_ih + b_hh, same layout
    len_ref : (B, 1) int32     valid lengths
    o_ref   : (B, T, 2H)       [fwd H | bwd H] per timestep
    """
    B, T, D = x_ref.shape
    H = o_ref.shape[-1] // 2
    G = 4 * H

    mm_dtype = wih_ref.dtype
    x = x_ref[...]                                    # (B, T, D)
    lens = len_ref[...]                               # (B, 1) int32

    # Hoisted input projection for BOTH directions: one MXU matmul, M = B*T.
    gx = jnp.dot(x.reshape(B * T, D).astype(mm_dtype), wih_ref[...],
                 preferred_element_type=jnp.float32)
    gx = (gx + b_ref[...]).reshape(B, T, 2 * G)       # (B, T, [fwd 4H | bwd 4H])

    whh = whh_ref[...]                                # (H, 8H)

    def cell(gates, c_prev):
        # gate order [i, f, o, g]: one sigmoid slab, one tanh slab.
        ifo = jax.nn.sigmoid(gates[:, :3 * H])
        g = jnp.tanh(gates[:, 3 * H:])
        i, f, o = ifo[:, :H], ifo[:, H:2 * H], ifo[:, 2 * H:]
        c_new = f * c_prev + i * g
        h_new = o * jnp.tanh(c_new)
        return h_new, c_new

    def run_direction(time_order, gx_dir, whh_dir, out_lane0):
        h = jnp.zeros((B, H), jnp.float32)
        c = jnp.zeros((B, H), jnp.float32)
        for t in time_order:                          # static unrolled recurrence
            gates = gx_dir[:, t, :] + jnp.dot(
                h.astype(mm_dtype), whh_dir, preferred_element_type=jnp.float32)
            h_new, c_new = cell(gates, c)
            mask = t < lens                           # (B, 1) packed-seq gating
            h = jnp.where(mask, h_new, h)
            c = jnp.where(mask, c_new, c)
            o_ref[:, t, out_lane0:out_lane0 + H] = (
                jnp.where(mask, h_new, 0.0).astype(o_ref.dtype))

    # forward direction: t = 0 .. T-1
    run_direction(range(T), gx[:, :, :G], whh[:, :G], 0)
    # backward direction: walk t = T-1 .. 0; the masked state update means each
    # sequence effectively starts from zero state at t = len-1, which is exactly
    # the packed reverse order.
    run_direction(range(T - 1, -1, -1), gx[:, :, G:], whh[:, G:], H)


# ------------------------------- wrapper -------------------------------------
def seq_encoder_forward(kparams, batch, lens, max_len=None):
    """batch: (B, T, D) float32, lens: (B,) int -> (B, max_len or T, 2H).

    `max_len` must be a static Python int (or None to return the full T),
    avoiding the device->host sync of the previous version.
    """
    B, T, D = batch.shape
    H = kparams["whh"].shape[0]
    lens_col = lens.astype(jnp.int32).reshape(B, 1)

    out = pl.pallas_call(
        bilstm_kernel,
        out_shape=jax.ShapeDtypeStruct((B, T, 2 * H), jnp.float32),
        grid_spec=pltpu.PrefetchScalarGridSpec(
            num_scalar_prefetch=0,
            grid=(1,),                                 # single resident block
            in_specs=[
                pl.BlockSpec((B, T, D), lambda i: (0, 0, 0)),       # x
                pl.BlockSpec((D, 8 * H), lambda i: (0, 0)),         # W_ih (both dirs)
                pl.BlockSpec((H, 8 * H), lambda i: (0, 0)),         # W_hh (both dirs)
                pl.BlockSpec((1, 8 * H), lambda i: (0, 0)),         # bias
                pl.BlockSpec((B, 1), lambda i: (0, 0)),             # lens
            ],
            out_specs=pl.BlockSpec((B, T, 2 * H), lambda i: (0, 0, 0)),
        ),
        compiler_params=pltpu.CompilerParams(
            dimension_semantics=("arbitrary",),
            vmem_limit_bytes=32 * 1024 * 1024),
    )(batch, kparams["wih"], kparams["whh"], kparams["bias"], lens_col)

    if max_len is not None:
        out = out[:, :max_len, :]
    return out


# --------------------------- parameter handling -------------------------------
def init_params(key, input_dim, hidden_dim):
    """PyTorch-style LSTM init: every tensor ~ U(-k, k), k = 1/sqrt(H).
    Gate (row) order is PyTorch's [i, f, g, o]."""
    k = 1.0 / np.sqrt(hidden_dim)
    keys = jax.random.split(key, 8)
    params = {}
    for d, direction in enumerate(["fwd", "bwd"]):
        params[direction] = dict(
            w_ih=jax.random.uniform(keys[4 * d + 0], (4 * hidden_dim, input_dim),
                                    jnp.float32, -k, k),
            w_hh=jax.random.uniform(keys[4 * d + 1], (4 * hidden_dim, hidden_dim),
                                    jnp.float32, -k, k),
            b_ih=jax.random.uniform(keys[4 * d + 2], (4 * hidden_dim,),
                                    jnp.float32, -k, k),
            b_hh=jax.random.uniform(keys[4 * d + 3], (4 * hidden_dim,),
                                    jnp.float32, -k, k),
        )
    return params


def _reorder_ifgo_to_ifog(w, H):
    """Reorder gate blocks along axis 0: PyTorch [i, f, g, o] -> [i, f, o, g]."""
    return jnp.concatenate([w[:2 * H], w[3 * H:4 * H], w[2 * H:3 * H]], axis=0)


def prepare_kernel_params(params, hidden_dim, matmul_dtype=jnp.float32):
    """Pack PyTorch-layout weights into the kernel layout:
       wih (D, 8H), whh (H, 8H), bias (1, 8H) with [fwd | bwd] along columns
       and gate order [i, f, o, g]. Use matmul_dtype=jnp.bfloat16 on v6e/v7x."""
    H = hidden_dim

    def prep(p):
        wih = _reorder_ifgo_to_ifog(p["w_ih"], H).T.astype(matmul_dtype)  # (D, 4H)
        whh = _reorder_ifgo_to_ifog(p["w_hh"], H).T.astype(matmul_dtype)  # (H, 4H)
        b = _reorder_ifgo_to_ifog(p["b_ih"] + p["b_hh"], H)               # (4H,)
        return wih, whh, b

    wih_f, whh_f, b_f = prep(params["fwd"])
    wih_b, whh_b, b_b = prep(params["bwd"])
    return dict(
        wih=jnp.concatenate([wih_f, wih_b], axis=1),                      # (D, 8H)
        whh=jnp.concatenate([whh_f, whh_b], axis=1),                      # (H, 8H)
        bias=jnp.concatenate([b_f, b_b]).reshape(1, 8 * H).astype(jnp.float32),
    )


# ---------------- pure-JAX reference (PyTorch-faithful, sanity check) ---------
def reverse_by_length(x, lens):
    """Reverse each sequence within its valid length. x: (B, T, D)."""
    B, T, _ = x.shape
    t_idx = jnp.arange(T)[None, :]
    rev = jnp.where(t_idx < lens[:, None], lens[:, None] - 1 - t_idx, t_idx)
    return jnp.take_along_axis(x, rev[:, :, None], axis=1)


def _ref_lstm_dir(x, w_ih, w_hh, b_ih, b_hh, lens):
    B, T, D = x.shape
    H = w_hh.shape[1]
    wih_t, whh_t = w_ih.T, w_hh.T
    bias = (b_ih + b_hh)[None, :]
    h = jnp.zeros((B, H), jnp.float32)
    c = jnp.zeros((B, H), jnp.float32)
    outs = []
    for t in range(T):
        gates = x[:, t] @ wih_t + h @ whh_t + bias
        i = jax.nn.sigmoid(gates[:, :H])
        f = jax.nn.sigmoid(gates[:, H:2 * H])
        g = jnp.tanh(gates[:, 2 * H:3 * H])
        o = jax.nn.sigmoid(gates[:, 3 * H:])
        c = f * c + i * g
        h = o * jnp.tanh(c)
        outs.append(jnp.where((t < lens)[:, None], h, 0.0))
    return jnp.stack(outs, axis=1)


def ref_forward(params, batch, lens, max_len):
    lens = lens.astype(jnp.int32)
    p = params["fwd"]
    out_f = _ref_lstm_dir(batch, p["w_ih"], p["w_hh"], p["b_ih"], p["b_hh"], lens)
    x_rev = reverse_by_length(batch, lens)
    p = params["bwd"]
    out_b = _ref_lstm_dir(x_rev, p["w_ih"], p["w_hh"], p["b_ih"], p["b_hh"], lens)
    out_b = reverse_by_length(out_b, lens)
    out = jnp.concatenate([out_f, out_b], axis=-1)
    return out[:, :max_len, :]


if __name__ == "__main__":
    B, T, D, H = 4, 8, 16, 32
    lens_list = [8, 5, 8, 3]
    max_len = max(lens_list)          # static python int: no host sync, jit-safe

    key = jax.random.PRNGKey(0)
    k_param, k_x = jax.random.split(key)
    params = init_params(k_param, D, H)
    # matmul_dtype=jnp.bfloat16 is the v6e/v7x setting; f32 keeps the check tight.
    kparams = prepare_kernel_params(params, H, matmul_dtype=jnp.float32)

    batch = jax.random.normal(k_x, (B, T, D), jnp.float32)
    lens = jnp.array(lens_list, jnp.int32)

    fwd = jax.jit(seq_encoder_forward, static_argnames=("max_len",))
    out = fwd(kparams, batch, lens, max_len=max_len)
    out = jax.block_until_ready(out)

    ref = ref_forward(params, batch, lens, max_len)
    np.testing.assert_allclose(np.asarray(out), np.asarray(ref),
                               rtol=1e-4, atol=1e-4)
    assert out.shape == (B, max_len, 2 * H)
    print("KERNEL_OK")
</pallas_src>

<mosaic_0001>
module attributes {stable_mosaic.version = 11 : i64} {
  func.func @bilstm_kernel(%arg0: i32, %arg1: memref<4x8x16xf32, #tpu.memory_space<vmem>>, %arg2: memref<16x256xf32, #tpu.memory_space<vmem>>, %arg3: memref<32x256xf32, #tpu.memory_space<vmem>>, %arg4: memref<1x256xf32, #tpu.memory_space<vmem>>, %arg5: memref<4x1xi32, #tpu.memory_space<vmem>>, %arg6: memref<4x8x64xf32, #tpu.memory_space<vmem>>) attributes {dimension_semantics = [#tpu.dimension_semantics<arbitrary>], iteration_bounds = array<i64: 1>, scalar_prefetch = 0 : i64, scratch_operands = 0 : i64, tpu.core_type = #tpu.core_type<tc>, window_params = [{pipeline_mode = #tpu.pipeline_mode<synchronous>, transform_indices = @transform_0, window_bounds = array<i64: 4, 8, 16>}, {pipeline_mode = #tpu.pipeline_mode<synchronous>, transform_indices = @transform_1, window_bounds = array<i64: 16, 256>}, {pipeline_mode = #tpu.pipeline_mode<synchronous>, transform_indices = @transform_2, window_bounds = array<i64: 32, 256>}, {pipeline_mode = #tpu.pipeline_mode<synchronous>, transform_indices = @transform_3, window_bounds = array<i64: 1, 256>}, {pipeline_mode = #tpu.pipeline_mode<synchronous>, transform_indices = @transform_4, window_bounds = array<i64: 4, 1>}, {pipeline_mode = #tpu.pipeline_mode<synchronous>, transform_indices = @transform_5, window_bounds = array<i64: 4, 8, 64>}]} {
    %c0 = arith.constant 0 : index
    %c0_0 = arith.constant 0 : index
    %c0_1 = arith.constant 0 : index
    %0 = vector.load %arg1[%c0, %c0_0, %c0_1] : memref<4x8x16xf32, #tpu.memory_space<vmem>>, vector<4x8x16xf32>
    %c0_2 = arith.constant 0 : index
    %c0_3 = arith.constant 0 : index
    %1 = vector.load %arg5[%c0_2, %c0_3] : memref<4x1xi32, #tpu.memory_space<vmem>>, vector<4x1xi32>
    %2 = vector.shape_cast %0 : vector<4x8x16xf32> to vector<32x16xf32>
    %c0_4 = arith.constant 0 : index
    %c0_5 = arith.constant 0 : index
    %3 = vector.load %arg2[%c0_4, %c0_5] : memref<16x256xf32, #tpu.memory_space<vmem>>, vector<16x256xf32>
    %cst = arith.constant dense<0.000000e+00> : vector<32x256xf32>
    %4 = tpu.matmul %2, %3, %cst {dimension_numbers = #tpu.dot_dimension_numbers<[1], [0], [0], [1], [0, 0, 1, 1], [], []>} : vector<32x16xf32>, vector<16x256xf32>, vector<32x256xf32> -> vector<32x256xf32>
    %c0_6 = arith.constant 0 : index
    %c0_7 = arith.constant 0 : index
    %5 = vector.load %arg4[%c0_6, %c0_7] : memref<1x256xf32, #tpu.memory_space<vmem>>, vector<1x256xf32>
    %6 = vector.broadcast %5 : vector<1x256xf32> to vector<32x256xf32>
    %7 = arith.addf %4, %6 : vector<32x256xf32>
    %8 = vector.shape_cast %7 : vector<32x256xf32> to vector<4x8x256xf32>
    %c0_8 = arith.constant 0 : index
    %c0_9 = arith.constant 0 : index
    %9 = vector.load %arg3[%c0_8, %c0_9] : memref<32x256xf32, #tpu.memory_space<vmem>>, vector<32x256xf32>
    %10 = vector.extract_strided_slice %8 {offsets = [0, 0, 0], sizes = [4, 8, 128], strides = [1, 1, 1]} : vector<4x8x256xf32> to vector<4x8x128xf32>
    %11 = vector.extract_strided_slice %9 {offsets = [0, 0], sizes = [32, 128], strides = [1, 1]} : vector<32x256xf32> to vector<32x128xf32>
    %cst_10 = arith.constant 0.000000e+00 : f32
    %12 = vector.broadcast %cst_10 : f32 to vector<4x32xf32>
    %cst_11 = arith.constant 0.000000e+00 : f32
    %13 = vector.broadcast %cst_11 : f32 to vector<4x32xf32>
    %14 = vector.extract_strided_slice %10 {offsets = [0, 0, 0], sizes = [4, 1, 128], strides = [1, 1, 1]} : vector<4x8x128xf32> to vector<4x1x128xf32>
    %15 = vector.shape_cast %14 : vector<4x1x128xf32> to vector<4x128xf32>
    %cst_12 = arith.constant dense<0.000000e+00> : vector<4x128xf32>
    %16 = tpu.matmul %12, %11, %cst_12 {dimension_numbers = #tpu.dot_dimension_numbers<[1], [0], [0], [1], [0, 0, 1, 1], [], []>} : vector<4x32xf32>, vector<32x128xf32>, vector<4x128xf32> -> vector<4x128xf32>
    %17 = arith.addf %15, %16 : vector<4x128xf32>
    %18 = vector.extract_strided_slice %17 {offsets = [0, 0], sizes = [4, 96], strides = [1, 1]} : vector<4x128xf32> to vector<4x96xf32>
    %19 = arith.negf %18 : vector<4x96xf32>
    %20 = math.exp %19 : vector<4x96xf32>
    %cst_13 = arith.constant 1.000000e+00 : f32
    %21 = vector.broadcast %cst_13 : f32 to vector<4x96xf32>
    %22 = arith.addf %21, %20 : vector<4x96xf32>
    %23 = arith.divf %21, %22 : vector<4x96xf32>
    %24 = vector.extract_strided_slice %17 {offsets = [0, 96], sizes = [4, 32], strides = [1, 1]} : vector<4x128xf32> to vector<4x32xf32>
    %25 = math.tanh %24 : vector<4x32xf32>
    %26 = vector.extract_strided_slice %23 {offsets = [0, 0], sizes = [4, 32], strides = [1, 1]} : vector<4x96xf32> to vector<4x32xf32>
    %27 = vector.extract_strided_slice %23 {offsets = [0, 32], sizes = [4, 32], strides = [1, 1]} : vector<4x96xf32> to vector<4x32xf32>
    %28 = vector.extract_strided_slice %23 {offsets = [0, 64], sizes = [4, 32], strides = [1, 1]} : vector<4x96xf32> to vector<4x32xf32>
    %29 = arith.mulf %27, %13 : vector<4x32xf32>
    %30 = arith.mulf %26, %25 : vector<4x32xf32>
    %31 = arith.addf %29, %30 : vector<4x32xf32>
    %32 = math.tanh %31 : vector<4x32xf32>
    %33 = arith.mulf %28, %32 : vector<4x32xf32>
    %c0_i32 = arith.constant 0 : i32
    %34 = vector.broadcast %c0_i32 : i32 to vector<4x1xi32>
    %35 = arith.cmpi sgt, %1, %34 : vector<4x1xi32>
    %36 = vector.shape_cast %35 : vector<4x1xi1> to vector<4x1xi1>
    %37 = vector.broadcast %36 : vector<4x1xi1> to vector<4x32xi1>
    %38 = arith.select %37, %33, %12 : vector<4x32xi1>, vector<4x32xf32>
    %39 = vector.shape_cast %35 : vector<4x1xi1> to vector<4x1xi1>
    %40 = vector.broadcast %39 : vector<4x1xi1> to vector<4x32xi1>
    %41 = arith.select %40, %31, %13 : vector<4x32xi1>, vector<4x32xf32>
    %cst_14 = arith.constant 0.000000e+00 : f32
    %42 = vector.shape_cast %35 : vector<4x1xi1> to vector<4x1xi1>
    %43 = vector.broadcast %42 : vector<4x1xi1> to vector<4x32xi1>
    %44 = vector.broadcast %cst_14 : f32 to vector<4x32xf32>
    %45 = arith.select %43, %33, %44 : vector<4x32xi1>, vector<4x32xf32>
    %c0_15 = arith.constant 0 : index
    %c0_16 = arith.constant 0 : index
    %c0_17 = arith.constant 0 : index
    %46 = vector.load %arg6[%c0_15, %c0_16, %c0_17] : memref<4x8x64xf32, #tpu.memory_space<vmem>>, vector<4x1x32xf32>
    %47 = vector.shape_cast %46 : vector<4x1x32xf32> to vector<4x32xf32>
    %48 = vector.shape_cast %45 : vector<4x32xf32> to vector<4x1x32xf32>
    tpu.vector_store %arg6[%c0_15, %c0_16, %c0_17], %48 {strides = array<i32>} : memref<4x8x64xf32, #tpu.memory_space<vmem>>, vector<4x1x32xf32>,
    %49 = vector.extract_strided_slice %10 {offsets = [0, 1, 0], sizes = [4, 1, 128], strides = [1, 1, 1]} : vector<4x8x128xf32> to vector<4x1x128xf32>
    %50 = vector.shape_cast %49 : vector<4x1x128xf32> to vector<4x128xf32>
    %cst_18 = arith.constant dense<0.000000e+00> : vector<4x128xf32>
    %51 = tpu.matmul %38, %11, %cst_18 {dimension_numbers = #tpu.dot_dimension_numbers<[1], [0], [0], [1], [0, 0, 1, 1], [], []>} : vector<4x32xf32>, vector<32x128xf32>, vector<4x128xf32> -> vector<4x128xf32>
    %52 = arith.addf %50, %51 : vector<4x128xf32>
    %53 = vector.extract_strided_slice %52 {offsets = [0, 0], sizes = [4, 96], strides = [1, 1]} : vector<4x128xf32> to vector<4x96xf32>
    %54 = arith.negf %53 : vector<4x96xf32>
    %55 = math.exp %54 : vector<4x96xf32>
    %cst_19 = arith.constant 1.000000e+00 : f32
    %56 = vector.broadcast %cst_19 : f32 to vector<4x96xf32>
    %57 = arith.addf %56, %55 : vector<4x96xf32>
    %58 = arith.divf %56, %57 : vector<4x96xf32>
    %59 = vector.extract_strided_slice %52 {offsets = [0, 96], sizes = [4, 32], strides = [1, 1]} : vector<4x128xf32> to vector<4x32xf32>
    %60 = math.tanh %59 : vector<4x32xf32>
    %61 = vector.extract_strided_slice %58 {offsets = [0, 0], sizes = [4, 32], strides = [1, 1]} : vector<4x96xf32> to vector<4x32xf32>
    %62 = vector.extract_strided_slice %58 {offsets = [0, 32], sizes = [4, 32], strides = [1, 1]} : vector<4x96xf32> to vector<4x32xf32>
    %63 = vector.extract_strided_slice %58 {offsets = [0, 64], sizes = [4, 32], strides = [1, 1]} : vector<4x96xf32> to vector<4x32xf32>
    %64 = arith.mulf %62, %41 : vector<4x32xf32>
    %65 = arith.mulf %61, %60 : vector<4x32xf32>
    %66 = arith.addf %64, %65 : vector<4x32xf32>
    %67 = math.tanh %66 : vector<4x32xf32>
    %68 = arith.mulf %63, %67 : vector<4x32xf32>
    %c1_i32 = arith.constant 1 : i32
    %69 = vector.broadcast %c1_i32 : i32 to vector<4x1xi32>
    %70 = arith.cmpi sgt, %1, %69 : vector<4x1xi32>
    %71 = vector.shape_cast %70 : vector<4x1xi1> to vector<4x1xi1>
    %72 = vector.broadcast %71 : vector<4x1xi1> to vector<4x32xi1>
    %73 = arith.select %72, %68, %38 : vector<4x32xi1>, vector<4x32xf32>
    %74 = vector.shape_cast %70 : vector<4x1xi1> to vector<4x1xi1>
    %75 = vector.broadcast %74 : vector<4x1xi1> to vector<4x32xi1>
    %76 = arith.select %75, %66, %41 : vector<4x32xi1>, vector<4x32xf32>
    %cst_20 = arith.constant 0.000000e+00 : f32
    %77 = vector.shape_cast %70 : vector<4x1xi1> to vector<4x1xi1>
    %78 = vector.broadcast %77 : vector<4x1xi1> to vector<4x32xi1>
    %79 = vector.broadcast %cst_20 : f32 to vector<4x32xf32>
    %80 = arith.select %78, %68, %79 : vector<4x32xi1>, vector<4x32xf32>
    %c0_21 = arith.constant 0 : index
    %c1 = arith.constant 1 : index
    %c0_22 = arith.constant 0 : index
    %81 = vector.load %arg6[%c0_21, %c1, %c0_22] : memref<4x8x64xf32, #tpu.memory_space<vmem>>, vector<4x1x32xf32>
    %82 = vector.shape_cast %81 : vector<4x1x32xf32> to vector<4x32xf32>
    %83 = vector.shape_cast %80 : vector<4x32xf32> to vector<4x1x32xf32>
    tpu.vector_store %arg6[%c0_21, %c1, %c0_22], %83 {strides = array<i32>} : memref<4x8x64xf32, #tpu.memory_space<vmem>>, vector<4x1x32xf32>,
    %84 = vector.extract_strided_slice %10 {offsets = [0, 2, 0], sizes = [4, 1, 128], strides = [1, 1, 1]} : vector<4x8x128xf32> to vector<4x1x128xf32>
    %85 = vector.shape_cast %84 : vector<4x1x128xf32> to vector<4x128xf32>
    %cst_23 = arith.constant dense<0.000000e+00> : vector<4x128xf32>
    %86 = tpu.matmul %73, %11, %cst_23 {dimension_numbers = #tpu.dot_dimension_numbers<[1], [0], [0], [1], [0, 0, 1, 1], [], []>} : vector<4x32xf32>, vector<32x128xf32>, vector<4x128xf32> -> vector<4x128xf32>
    %87 = arith.addf %85, %86 : vector<4x128xf32>
    %88 = vector.extract_strided_slice %87 {offsets = [0, 0], sizes = [4, 96], strides = [1, 1]} : vector<4x128xf32> to vector<4x96xf32>
    %89 = arith.negf %88 : vector<4x96xf32>
    %90 = math.exp %89 : vector<4x96xf32>
    %cst_24 = arith.constant 1.000000e+00 : f32
    %91 = vector.broadcast %cst_24 : f32 to vector<4x96xf32>
    %92 = arith.addf %91, %90 : vector<4x96xf32>
    %93 = arith.divf %91, %92 : vector<4x96xf32>
    %94 = vector.extract_strided_slice %87 {offsets = [0, 96], sizes = [4, 32], strides = [1, 1]} : vector<4x128xf32> to vector<4x32xf32>
    %95 = math.tanh %94 : vector<4x32xf32>
    %96 = vector.extract_strided_slice %93 {offsets = [0, 0], sizes = [4, 32], strides = [1, 1]} : vector<4x96xf32> to vector<4x32xf32>
    %97 = vector.extract_strided_slice %93 {offsets = [0, 32], sizes = [4, 32], strides = [1, 1]} : vector<4x96xf32> to vector<4x32xf32>
    %98 = vector.extract_strided_slice %93 {offsets = [0, 64], sizes = [4, 32], strides = [1, 1]} : vector<4x96xf32> to vector<4x32xf32>
    %99 = arith.mulf %97, %76 : vector<4x32xf32>
    %100 = arith.mulf %96, %95 : vector<4x32xf32>
    %101 = arith.addf %99, %100 : vector<4x32xf32>
    %102 = math.tanh %101 : vector<4x32xf32>
    %103 = arith.mulf %98, %102 : vector<4x32xf32>
    %c2_i32 = arith.constant 2 : i32
    %104 = vector.broadcast %c2_i32 : i32 to vector<4x1xi32>
    %105 = arith.cmpi sgt, %1, %104 : vector<4x1xi32>
    %106 = vector.shape_cast %105 : vector<4x1xi1> to vector<4x1xi1>
    %107 = vector.broadcast %106 : vector<4x1xi1> to vector<4x32xi1>
    %108 = arith.select %107, %103, %73 : vector<4x32xi1>, vector<4x32xf32>
    %109 = vector.shape_cast %105 : vector<4x1xi1> to vector<4x1xi1>
    %110 = vector.broadcast %109 : vector<4x1xi1> to vector<4x32xi1>
    %111 = arith.select %110, %101, %76 : vector<4x32xi1>, vector<4x32xf32>
    %cst_25 = arith.constant 0.000000e+00 : f32
    %112 = vector.shape_cast %105 : vector<4x1xi1> to vector<4x1xi1>
    %113 = vector.broadcast %112 : vector<4x1xi1> to vector<4x32xi1>
    %114 = vector.broadcast %cst_25 : f32 to vector<4x32xf32>
    %115 = arith.select %113, %103, %114 : vector<4x32xi1>, vector<4x32xf32>
    %c0_26 = arith.constant 0 : index
    %c2 = arith.constant 2 : index
    %c0_27 = arith.constant 0 : index
    %116 = vector.load %arg6[%c0_26, %c2, %c0_27] : memref<4x8x64xf32, #tpu.memory_space<vmem>>, vector<4x1x32xf32>
    %117 = vector.shape_cast %116 : vector<4x1x32xf32> to vector<4x32xf32>
    %118 = vector.shape_cast %115 : vector<4x32xf32> to vector<4x1x32xf32>
    tpu.vector_store %arg6[%c0_26, %c2, %c0_27], %118 {strides = array<i32>} : memref<4x8x64xf32, #tpu.memory_space<vmem>>, vector<4x1x32xf32>,
    %119 = vector.extract_strided_slice %10 {offsets = [0, 3, 0], sizes = [4, 1, 128], strides = [1, 1, 1]} : vector<4x8x128xf32> to vector<4x1x128xf32>
    %120 = vector.shape_cast %119 : vector<4x1x128xf32> to vector<4x128xf32>
    %cst_28 = arith.constant dense<0.000000e+00> : vector<4x128xf32>
    %121 = tpu.matmul %108, %11, %cst_28 {dimension_numbers = #tpu.dot_dimension_numbers<[1], [0], [0], [1], [0, 0, 1, 1], [], []>} : vector<4x32xf32>, vector<32x128xf32>, vector<4x128xf32> -> vector<4x128xf32>
    %122 = arith.addf %120, %121 : vector<4x128xf32>
    %123 = vector.extract_strided_slice %122 {offsets = [0, 0], sizes = [4, 96], strides = [1, 1]} : vector<4x128xf32> to vector<4x96xf32>
    %124 = arith.negf %123 : vector<4x96xf32>
    %125 = math.exp %124 : vector<4x96xf32>
    %cst_29 = arith.constant 1.000000e+00 : f32
    %126 = vector.broadcast %cst_29 : f32 to vector<4x96xf32>
    %127 = arith.addf %126, %125 : vector<4x96xf32>
    %128 = arith.divf %126, %127 : vector<4x96xf32>
    %129 = vector.extract_strided_slice %122 {offsets = [0, 96], sizes = [4, 32], strides = [1, 1]} : vector<4x128xf32> to vector<4x32xf32>
    %130 = math.tanh %129 : vector<4x32xf32>
    %131 = vector.extract_strided_slice %128 {offsets = [0, 0], sizes = [4, 32], strides = [1, 1]} : vector<4x96xf32> to vector<4x32xf32>
    %132 = vector.extract_strided_slice %128 {offsets = [0, 32], sizes = [4, 32], strides = [1, 1]} : vector<4x96xf32> to vector<4x32xf32>
    %133 = vector.extract_strided_slice %128 {offsets = [0, 64], sizes = [4, 32], strides = [1, 1]} : vector<4x96xf32> to vector<4x32xf32>
    %134 = arith.mulf %132, %111 : vector<4x32xf32>
    %135 = arith.mulf %131, %130 : vector<4x32xf32>
    %136 = arith.addf %134, %135 : vector<4x32xf32>
    %137 = math.tanh %136 : vector<4x32xf32>
    %138 = arith.mulf %133, %137 : vector<4x32xf32>
    %c3_i32 = arith.constant 3 : i32
    %139 = vector.broadcast %c3_i32 : i32 to vector<4x1xi32>
    %140 = arith.cmpi sgt, %1, %139 : vector<4x1xi32>
    %141 = vector.shape_cast %140 : vector<4x1xi1> to vector<4x1xi1>
    %142 = vector.broadcast %141 : vector<4x1xi1> to vector<4x32xi1>
    %143 = arith.select %142, %138, %108 : vector<4x32xi1>, vector<4x32xf32>
    %144 = vector.shape_cast %140 : vector<4x1xi1> to vector<4x1xi1>
    %145 = vector.broadcast %144 : vector<4x1xi1> to vector<4x32xi1>
    %146 = arith.select %145, %136, %111 : vector<4x32xi1>, vector<4x32xf32>
    %cst_30 = arith.constant 0.000000e+00 : f32
    %147 = vector.shape_cast %140 : vector<4x1xi1> to vector<4x1xi1>
    %148 = vector.broadcast %147 : vector<4x1xi1> to vector<4x32xi1>
    %149 = vector.broadcast %cst_30 : f32 to vector<4x32xf32>
    %150 = arith.select %148, %138, %149 : vector<4x32xi1>, vector<4x32xf32>
    %c0_31 = arith.constant 0 : index
    %c3 = arith.constant 3 : index
    %c0_32 = arith.constant 0 : index
    %151 = vector.load %arg6[%c0_31, %c3, %c0_32] : memref<4x8x64xf32, #tpu.memory_space<vmem>>, vector<4x1x32xf32>
    %152 = vector.shape_cast %151 : vector<4x1x32xf32> to vector<4x32xf32>
    %153 = vector.shape_cast %150 : vector<4x32xf32> to vector<4x1x32xf32>
    tpu.vector_store %arg6[%c0_31, %c3, %c0_32], %153 {strides = array<i32>} : memref<4x8x64xf32, #tpu.memory_space<vmem>>, vector<4x1x32xf32>,
    %154 = vector.extract_strided_slice %10 {offsets = [0, 4, 0], sizes = [4, 1, 128], strides = [1, 1, 1]} : vector<4x8x128xf32> to vector<4x1x128xf32>
    %155 = vector.shape_cast %154 : vector<4x1x128xf32> to vector<4x128xf32>
    %cst_33 = arith.constant dense<0.000000e+00> : vector<4x128xf32>
    %156 = tpu.matmul %143, %11, %cst_33 {dimension_numbers = #tpu.dot_dimension_numbers<[1], [0], [0], [1], [0, 0, 1, 1], [], []>} : vector<4x32xf32>, vector<32x128xf32>, vector<4x128xf32> -> vector<4x128xf32>
    %157 = arith.addf %155, %156 : vector<4x128xf32>
    %158 = vector.extract_strided_slice %157 {offsets = [0, 0], sizes = [4, 96], strides = [1, 1]} : vector<4x128xf32> to vector<4x96xf32>
    %159 = arith.negf %158 : vector<4x96xf32>
    %160 = math.exp %159 : vector<4x96xf32>
    %cst_34 = arith.constant 1.000000e+00 : f32
    %161 = vector.broadcast %cst_34 : f32 to vector<4x96xf32>
    %162 = arith.addf %161, %160 : vector<4x96xf32>
    %163 = arith.divf %161, %162 : vector<4x96xf32>
    %164 = vector.extract_strided_slice %157 {offsets = [0, 96], sizes = [4, 32], strides = [1, 1]} : vector<4x128xf32> to vector<4x32xf32>
    %165 = math.tanh %164 : vector<4x32xf32>
    %166 = vector.extract_strided_slice %163 {offsets = [0, 0], sizes = [4, 32], strides = [1, 1]} : vector<4x96xf32> to vector<4x32xf32>
    %167 = vector.extract_strided_slice %163 {offsets = [0, 32], sizes = [4, 32], strides = [1, 1]} : vector<4x96xf32> to vector<4x32xf32>
    %168 = vector.extract_strided_slice %163 {offsets = [0, 64], sizes = [4, 32], strides = [1, 1]} : vector<4x96xf32> to vector<4x32xf32>
    %169 = arith.mulf %167, %146 : vector<4x32xf32>
    %170 = arith.mulf %166, %165 : vector<4x32xf32>
    %171 = arith.addf %169, %170 : vector<4x32xf32>
    %172 = math.tanh %171 : vector<4x32xf32>
    %173 = arith.mulf %168, %172 : vector<4x32xf32>
    %c4_i32 = arith.constant 4 : i32
    %174 = vector.broadcast %c4_i32 : i32 to vector<4x1xi32>
    %175 = arith.cmpi sgt, %1, %174 : vector<4x1xi32>
    %176 = vector.shape_cast %175 : vector<4x1xi1> to vector<4x1xi1>
    %177 = vector.broadcast %176 : vector<4x1xi1> to vector<4x32xi1>
    %178 = arith.select %177, %173, %143 : vector<4x32xi1>, vector<4x32xf32>
    %179 = vector.shape_cast %175 : vector<4x1xi1> to vector<4x1xi1>
    %180 = vector.broadcast %179 : vector<4x1xi1> to vector<4x32xi1>
    %181 = arith.select %180, %171, %146 : vector<4x32xi1>, vector<4x32xf32>
    %cst_35 = arith.constant 0.000000e+00 : f32
    %182 = vector.shape_cast %175 : vector<4x1xi1> to vector<4x1xi1>
    %183 = vector.broadcast %182 : vector<4x1xi1> to vector<4x32xi1>
    %184 = vector.broadcast %cst_35 : f32 to vector<4x32xf32>
    %185 = arith.select %183, %173, %184 : vector<4x32xi1>, vector<4x32xf32>
    %c0_36 = arith.constant 0 : index
    %c4 = arith.constant 4 : index
    %c0_37 = arith.constant 0 : index
    %186 = vector.load %arg6[%c0_36, %c4, %c0_37] : memref<4x8x64xf32, #tpu.memory_space<vmem>>, vector<4x1x32xf32>
    %187 = vector.shape_cast %186 : vector<4x1x32xf32> to vector<4x32xf32>
    %188 = vector.shape_cast %185 : vector<4x32xf32> to vector<4x1x32xf32>
    tpu.vector_store %arg6[%c0_36, %c4, %c0_37], %188 {strides = array<i32>} : memref<4x8x64xf32, #tpu.memory_space<vmem>>, vector<4x1x32xf32>,
    %189 = vector.extract_strided_slice %10 {offsets = [0, 5, 0], sizes = [4, 1, 128], strides = [1, 1, 1]} : vector<4x8x128xf32> to vector<4x1x128xf32>
    %190 = vector.shape_cast %189 : vector<4x1x128xf32> to vector<4x128xf32>
    %cst_38 = arith.constant dense<0.000000e+00> : vector<4x128xf32>
    %191 = tpu.matmul %178, %11, %cst_38 {dimension_numbers = #tpu.dot_dimension_numbers<[1], [0], [0], [1], [0, 0, 1, 1], [], []>} : vector<4x32xf32>, vector<32x128xf32>, vector<4x128xf32> -> vector<4x128xf32>
    %192 = arith.addf %190, %191 : vector<4x128xf32>
    %193 = vector.extract_strided_slice %192 {offsets = [0, 0], sizes = [4, 96], strides = [1, 1]} : vector<4x128xf32> to vector<4x96xf32>
    %194 = arith.negf %193 : vector<4x96xf32>
    %195 = math.exp %194 : vector<4x96xf32>
    %cst_39 = arith.constant 1.000000e+00 : f32
    %196 = vector.broadcast %cst_39 : f32 to vector<4x96xf32>
    %197 = arith.addf %196, %195 : vector<4x96xf32>
    %198 = arith.divf %196, %197 : vector<4x96xf32>
    %199 = vector.extract_strided_slice %192 {offsets = [0, 96], sizes = [4, 32], strides = [1, 1]} : vector<4x128xf32> to vector<4x32xf32>
    %200 = math.tanh %199 : vector<4x32xf32>
    %201 = vector.extract_strided_slice %198 {offsets = [0, 0], sizes = [4, 32], strides = [1, 1]} : vector<4x96xf32> to vector<4x32xf32>
    %202 = vector.extract_strided_slice %198 {offsets = [0, 32], sizes = [4, 32], strides = [1, 1]} : vector<4x96xf32> to vector<4x32xf32>
    %203 = vector.extract_strided_slice %198 {offsets = [0, 64], sizes = [4, 32], strides = [1, 1]} : vector<4x96xf32> to vector<4x32xf32>
    %204 = arith.mulf %202, %181 : vector<4x32xf32>
    %205 = arith.mulf %201, %200 : vector<4x32xf32>
    %206 = arith.addf %204, %205 : vector<4x32xf32>
    %207 = math.tanh %206 : vector<4x32xf32>
    %208 = arith.mulf %203, %207 : vector<4x32xf32>
    %c5_i32 = arith.constant 5 : i32
    %209 = vector.broadcast %c5_i32 : i32 to vector<4x1xi32>
    %210 = arith.cmpi sgt, %1, %209 : vector<4x1xi32>
    %211 = vector.shape_cast %210 : vector<4x1xi1> to vector<4x1xi1>
    %212 = vector.broadcast %211 : vector<4x1xi1> to vector<4x32xi1>
    %213 = arith.select %212, %208, %178 : vector<4x32xi1>, vector<4x32xf32>
    %214 = vector.shape_cast %210 : vector<4x1xi1> to vector<4x1xi1>
    %215 = vector.broadcast %214 : vector<4x1xi1> to vector<4x32xi1>
    %216 = arith.select %215, %206, %181 : vector<4x32xi1>, vector<4x32xf32>
    %cst_40 = arith.constant 0.000000e+00 : f32
    %217 = vector.shape_cast %210 : vector<4x1xi1> to vector<4x1xi1>
    %218 = vector.broadcast %217 : vector<4x1xi1> to vector<4x32xi1>
    %219 = vector.broadcast %cst_40 : f32 to vector<4x32xf32>
    %220 = arith.select %218, %208, %219 : vector<4x32xi1>, vector<4x32xf32>
    %c0_41 = arith.constant 0 : index
    %c5 = arith.constant 5 : index
    %c0_42 = arith.constant 0 : index
    %221 = vector.load %arg6[%c0_41, %c5, %c0_42] : memref<4x8x64xf32, #tpu.memory_space<vmem>>, vector<4x1x32xf32>
    %222 = vector.shape_cast %221 : vector<4x1x32xf32> to vector<4x32xf32>
    %223 = vector.shape_cast %220 : vector<4x32xf32> to vector<4x1x32xf32>
    tpu.vector_store %arg6[%c0_41, %c5, %c0_42], %223 {strides = array<i32>} : memref<4x8x64xf32, #tpu.memory_space<vmem>>, vector<4x1x32xf32>,
    %224 = vector.extract_strided_slice %10 {offsets = [0, 6, 0], sizes = [4, 1, 128], strides = [1, 1, 1]} : vector<4x8x128xf32> to vector<4x1x128xf32>
    %225 = vector.shape_cast %224 : vector<4x1x128xf32> to vector<4x128xf32>
    %cst_43 = arith.constant dense<0.000000e+00> : vector<4x128xf32>
    %226 = tpu.matmul %213, %11, %cst_43 {dimension_numbers = #tpu.dot_dimension_numbers<[1], [0], [0], [1], [0, 0, 1, 1], [], []>} : vector<4x32xf32>, vector<32x128xf32>, vector<4x128xf32> -> vector<4x128xf32>
    %227 = arith.addf %225, %226 : vector<4x128xf32>
    %228 = vector.extract_strided_slice %227 {offsets = [0, 0], sizes = [4, 96], strides = [1, 1]} : vector<4x128xf32> to vector<4x96xf32>
    %229 = arith.negf %228 : vector<4x96xf32>
    %230 = math.exp %229 : vector<4x96xf32>
    %cst_44 = arith.constant 1.000000e+00 : f32
    %231 = vector.broadcast %cst_44 : f32 to vector<4x96xf32>
    %232 = arith.addf %231, %230 : vector<4x96xf32>
    %233 = arith.divf %231, %232 : vector<4x96xf32>
    %234 = vector.extract_strided_slice %227 {offsets = [0, 96], sizes = [4, 32], strides = [1, 1]} : vector<4x128xf32> to vector<4x32xf32>
    %235 = math.tanh %234 : vector<4x32xf32>
    %236 = vector.extract_strided_slice %233 {offsets = [0, 0], sizes = [4, 32], strides = [1, 1]} : vector<4x96xf32> to vector<4x32xf32>
    %237 = vector.extract_strided_slice %233 {offsets = [0, 32], sizes = [4, 32], strides = [1, 1]} : vector<4x96xf32> to vector<4x32xf32>
    %238 = vector.extract_strided_slice %233 {offsets = [0, 64], sizes = [4, 32], strides = [1, 1]} : vector<4x96xf32> to vector<4x32xf32>
    %239 = arith.mulf %237, %216 : vector<4x32xf32>
    %240 = arith.mulf %236, %235 : vector<4x32xf32>
    %241 = arith.addf %239, %240 : vector<4x32xf32>
    %242 = math.tanh %241 : vector<4x32xf32>
    %243 = arith.mulf %238, %242 : vector<4x32xf32>
    %c6_i32 = arith.constant 6 : i32
    %244 = vector.broadcast %c6_i32 : i32 to vector<4x1xi32>
    %245 = arith.cmpi sgt, %1, %244 : vector<4x1xi32>
    %246 = vector.shape_cast %245 : vector<4x1xi1> to vector<4x1xi1>
    %247 = vector.broadcast %246 : vector<4x1xi1> to vector<4x32xi1>
    %248 = arith.select %247, %243, %213 : vector<4x32xi1>, vector<4x32xf32>
    %249 = vector.shape_cast %245 : vector<4x1xi1> to vector<4x1xi1>
    %250 = vector.broadcast %249 : vector<4x1xi1> to vector<4x32xi1>
    %251 = arith.select %250, %241, %216 : vector<4x32xi1>, vector<4x32xf32>
    %cst_45 = arith.constant 0.000000e+00 : f32
    %252 = vector.shape_cast %245 : vector<4x1xi1> to vector<4x1xi1>
    %253 = vector.broadcast %252 : vector<4x1xi1> to vector<4x32xi1>
    %254 = vector.broadcast %cst_45 : f32 to vector<4x32xf32>
    %255 = arith.select %253, %243, %254 : vector<4x32xi1>, vector<4x32xf32>
    %c0_46 = arith.constant 0 : index
    %c6 = arith.constant 6 : index
    %c0_47 = arith.constant 0 : index
    %256 = vector.load %arg6[%c0_46, %c6, %c0_47] : memref<4x8x64xf32, #tpu.memory_space<vmem>>, vector<4x1x32xf32>
    %257 = vector.shape_cast %256 : vector<4x1x32xf32> to vector<4x32xf32>
    %258 = vector.shape_cast %255 : vector<4x32xf32> to vector<4x1x32xf32>
    tpu.vector_store %arg6[%c0_46, %c6, %c0_47], %258 {strides = array<i32>} : memref<4x8x64xf32, #tpu.memory_space<vmem>>, vector<4x1x32xf32>,
    %259 = vector.extract_strided_slice %10 {offsets = [0, 7, 0], sizes = [4, 1, 128], strides = [1, 1, 1]} : vector<4x8x128xf32> to vector<4x1x128xf32>
    %260 = vector.shape_cast %259 : vector<4x1x128xf32> to vector<4x128xf32>
    %cst_48 = arith.constant dense<0.000000e+00> : vector<4x128xf32>
    %261 = tpu.matmul %248, %11, %cst_48 {dimension_numbers = #tpu.dot_dimension_numbers<[1], [0], [0], [1], [0, 0, 1, 1], [], []>} : vector<4x32xf32>, vector<32x128xf32>, vector<4x128xf32> -> vector<4x128xf32>
    %262 = arith.addf %260, %261 : vector<4x128xf32>
    %263 = vector.extract_strided_slice %262 {offsets = [0, 0], sizes = [4, 96], strides = [1, 1]} : vector<4x128xf32> to vector<4x96xf32>
    %264 = arith.negf %263 : vector<4x96xf32>
    %265 = math.exp %264 : vector<4x96xf32>
    %cst_49 = arith.constant 1.000000e+00 : f32
    %266 = vector.broadcast %cst_49 : f32 to vector<4x96xf32>
    %267 = arith.addf %266, %265 : vector<4x96xf32>
    %268 = arith.divf %266, %267 : vector<4x96xf32>
    %269 = vector.extract_strided_slice %262 {offsets = [0, 96], sizes = [4, 32], strides = [1, 1]} : vector<4x128xf32> to vector<4x32xf32>
    %270 = math.tanh %269 : vector<4x32xf32>
    %271 = vector.extract_strided_slice %268 {offsets = [0, 0], sizes = [4, 32], strides = [1, 1]} : vector<4x96xf32> to vector<4x32xf32>
    %272 = vector.extract_strided_slice %268 {offsets = [0, 32], sizes = [4, 32], strides = [1, 1]} : vector<4x96xf32> to vector<4x32xf32>
    %273 = vector.extract_strided_slice %268 {offsets = [0, 64], sizes = [4, 32], strides = [1, 1]} : vector<4x96xf32> to vector<4x32xf32>
    %274 = arith.mulf %272, %251 : vector<4x32xf32>
    %275 = arith.mulf %271, %270 : vector<4x32xf32>
    %276 = arith.addf %274, %275 : vector<4x32xf32>
    %277 = math.tanh %276 : vector<4x32xf32>
    %278 = arith.mulf %273, %277 : vector<4x32xf32>
    %c7_i32 = arith.constant 7 : i32
    %279 = vector.broadcast %c7_i32 : i32 to vector<4x1xi32>
    %280 = arith.cmpi sgt, %1, %279 : vector<4x1xi32>
    %cst_50 = arith.constant 0.000000e+00 : f32
    %281 = vector.shape_cast %280 : vector<4x1xi1> to vector<4x1xi1>
    %282 = vector.broadcast %281 : vector<4x1xi1> to vector<4x32xi1>
    %283 = vector.broadcast %cst_50 : f32 to vector<4x32xf32>
    %284 = arith.select %282, %278, %283 : vector<4x32xi1>, vector<4x32xf32>
    %c0_51 = arith.constant 0 : index
    %c7 = arith.constant 7 : index
    %c0_52 = arith.constant 0 : index
    %285 = vector.load %arg6[%c0_51, %c7, %c0_52] : memref<4x8x64xf32, #tpu.memory_space<vmem>>, vector<4x1x32xf32>
    %286 = vector.shape_cast %285 : vector<4x1x32xf32> to vector<4x32xf32>
    %287 = vector.shape_cast %284 : vector<4x32xf32> to vector<4x1x32xf32>
    tpu.vector_store %arg6[%c0_51, %c7, %c0_52], %287 {strides = array<i32>} : memref<4x8x64xf32, #tpu.memory_space<vmem>>, vector<4x1x32xf32>,
    %288 = vector.extract_strided_slice %8 {offsets = [0, 0, 128], sizes = [4, 8, 128], strides = [1, 1, 1]} : vector<4x8x256xf32> to vector<4x8x128xf32>
    %289 = vector.extract_strided_slice %9 {offsets = [0, 128], sizes = [32, 128], strides = [1, 1]} : vector<32x256xf32> to vector<32x128xf32>
    %cst_53 = arith.constant 0.000000e+00 : f32
    %290 = vector.broadcast %cst_53 : f32 to vector<4x32xf32>
    %cst_54 = arith.constant 0.000000e+00 : f32
    %291 = vector.broadcast %cst_54 : f32 to vector<4x32xf32>
    %292 = vector.extract_strided_slice %288 {offsets = [0, 7, 0], sizes = [4, 1, 128], strides = [1, 1, 1]} : vector<4x8x128xf32> to vector<4x1x128xf32>
    %293 = vector.shape_cast %292 : vector<4x1x128xf32> to vector<4x128xf32>
    %cst_55 = arith.constant dense<0.000000e+00> : vector<4x128xf32>
    %294 = tpu.matmul %290, %289, %cst_55 {dimension_numbers = #tpu.dot_dimension_numbers<[1], [0], [0], [1], [0, 0, 1, 1], [], []>} : vector<4x32xf32>, vector<32x128xf32>, vector<4x128xf32> -> vector<4x128xf32>
    %295 = arith.addf %293, %294 : vector<4x128xf32>
    %296 = vector.extract_strided_slice %295 {offsets = [0, 0], sizes = [4, 96], strides = [1, 1]} : vector<4x128xf32> to vector<4x96xf32>
    %297 = arith.negf %296 : vector<4x96xf32>
    %298 = math.exp %297 : vector<4x96xf32>
    %cst_56 = arith.constant 1.000000e+00 : f32
    %299 = vector.broadcast %cst_56 : f32 to vector<4x96xf32>
    %300 = arith.addf %299, %298 : vector<4x96xf32>
    %301 = arith.divf %299, %300 : vector<4x96xf32>
    %302 = vector.extract_strided_slice %295 {offsets = [0, 96], sizes = [4, 32], strides = [1, 1]} : vector<4x128xf32> to vector<4x32xf32>
    %303 = math.tanh %302 : vector<4x32xf32>
    %304 = vector.extract_strided_slice %301 {offsets = [0, 0], sizes = [4, 32], strides = [1, 1]} : vector<4x96xf32> to vector<4x32xf32>
    %305 = vector.extract_strided_slice %301 {offsets = [0, 32], sizes = [4, 32], strides = [1, 1]} : vector<4x96xf32> to vector<4x32xf32>
    %306 = vector.extract_strided_slice %301 {offsets = [0, 64], sizes = [4, 32], strides = [1, 1]} : vector<4x96xf32> to vector<4x32xf32>
    %307 = arith.mulf %305, %291 : vector<4x32xf32>
    %308 = arith.mulf %304, %303 : vector<4x32xf32>
    %309 = arith.addf %307, %308 : vector<4x32xf32>
    %310 = math.tanh %309 : vector<4x32xf32>
    %311 = arith.mulf %306, %310 : vector<4x32xf32>
    %c7_i32_57 = arith.constant 7 : i32
    %312 = vector.broadcast %c7_i32_57 : i32 to vector<4x1xi32>
    %313 = arith.cmpi sgt, %1, %312 : vector<4x1xi32>
    %314 = vector.shape_cast %313 : vector<4x1xi1> to vector<4x1xi1>
    %315 = vector.broadcast %314 : vector<4x1xi1> to vector<4x32xi1>
    %316 = arith.select %315, %311, %290 : vector<4x32xi1>, vector<4x32xf32>
    %317 = vector.shape_cast %313 : vector<4x1xi1> to vector<4x1xi1>
    %318 = vector.broadcast %317 : vector<4x1xi1> to vector<4x32xi1>
    %319 = arith.select %318, %309, %291 : vector<4x32xi1>, vector<4x32xf32>
    %cst_58 = arith.constant 0.000000e+00 : f32
    %320 = vector.shape_cast %313 : vector<4x1xi1> to vector<4x1xi1>
    %321 = vector.broadcast %320 : vector<4x1xi1> to vector<4x32xi1>
    %322 = vector.broadcast %cst_58 : f32 to vector<4x32xf32>
    %323 = arith.select %321, %311, %322 : vector<4x32xi1>, vector<4x32xf32>
    %c0_59 = arith.constant 0 : index
    %c7_60 = arith.constant 7 : index
    %c32 = arith.constant 32 : index
    %324 = vector.load %arg6[%c0_59, %c7_60, %c32] : memref<4x8x64xf32, #tpu.memory_space<vmem>>, vector<4x1x32xf32>
    %325 = vector.shape_cast %324 : vector<4x1x32xf32> to vector<4x32xf32>
    %326 = vector.shape_cast %323 : vector<4x32xf32> to vector<4x1x32xf32>
    tpu.vector_store %arg6[%c0_59, %c7_60, %c32], %326 {strides = array<i32>} : memref<4x8x64xf32, #tpu.memory_space<vmem>>, vector<4x1x32xf32>,
    %327 = vector.extract_strided_slice %288 {offsets = [0, 6, 0], sizes = [4, 1, 128], strides = [1, 1, 1]} : vector<4x8x128xf32> to vector<4x1x128xf32>
    %328 = vector.shape_cast %327 : vector<4x1x128xf32> to vector<4x128xf32>
    %cst_61 = arith.constant dense<0.000000e+00> : vector<4x128xf32>
    %329 = tpu.matmul %316, %289, %cst_61 {dimension_numbers = #tpu.dot_dimension_numbers<[1], [0], [0], [1], [0, 0, 1, 1], [], []>} : vector<4x32xf32>, vector<32x128xf32>, vector<4x128xf32> -> vector<4x128xf32>
    %330 = arith.addf %328, %329 : vector<4x128xf32>
    %331 = vector.extract_strided_slice %330 {offsets = [0, 0], sizes = [4, 96], strides = [1, 1]} : vector<4x128xf32> to vector<4x96xf32>
    %332 = arith.negf %331 : vector<4x96xf32>
    %333 = math.exp %332 : vector<4x96xf32>
    %cst_62 = arith.constant 1.000000e+00 : f32
    %334 = vector.broadcast %cst_62 : f32 to vector<4x96xf32>
    %335 = arith.addf %334, %333 : vector<4x96xf32>
    %336 = arith.divf %334, %335 : vector<4x96xf32>
    %337 = vector.extract_strided_slice %330 {offsets = [0, 96], sizes = [4, 32], strides = [1, 1]} : vector<4x128xf32> to vector<4x32xf32>
    %338 = math.tanh %337 : vector<4x32xf32>
    %339 = vector.extract_strided_slice %336 {offsets = [0, 0], sizes = [4, 32], strides = [1, 1]} : vector<4x96xf32> to vector<4x32xf32>
    %340 = vector.extract_strided_slice %336 {offsets = [0, 32], sizes = [4, 32], strides = [1, 1]} : vector<4x96xf32> to vector<4x32xf32>
    %341 = vector.extract_strided_slice %336 {offsets = [0, 64], sizes = [4, 32], strides = [1, 1]} : vector<4x96xf32> to vector<4x32xf32>
    %342 = arith.mulf %340, %319 : vector<4x32xf32>
    %343 = arith.mulf %339, %338 : vector<4x32xf32>
    %344 = arith.addf %342, %343 : vector<4x32xf32>
    %345 = math.tanh %344 : vector<4x32xf32>
    %346 = arith.mulf %341, %345 : vector<4x32xf32>
    %c6_i32_63 = arith.constant 6 : i32
    %347 = vector.broadcast %c6_i32_63 : i32 to vector<4x1xi32>
    %348 = arith.cmpi sgt, %1, %347 : vector<4x1xi32>
    %349 = vector.shape_cast %348 : vector<4x1xi1> to vector<4x1xi1>
    %350 = vector.broadcast %349 : vector<4x1xi1> to vector<4x32xi1>
    %351 = arith.select %350, %346, %316 : vector<4x32xi1>, vector<4x32xf32>
    %352 = vector.shape_cast %348 : vector<4x1xi1> to vector<4x1xi1>
    %353 = vector.broadcast %352 : vector<4x1xi1> to vector<4x32xi1>
    %354 = arith.select %353, %344, %319 : vector<4x32xi1>, vector<4x32xf32>
    %cst_64 = arith.constant 0.000000e+00 : f32
    %355 = vector.shape_cast %348 : vector<4x1xi1> to vector<4x1xi1>
    %356 = vector.broadcast %355 : vector<4x1xi1> to vector<4x32xi1>
    %357 = vector.broadcast %cst_64 : f32 to vector<4x32xf32>
    %358 = arith.select %356, %346, %357 : vector<4x32xi1>, vector<4x32xf32>
    %c0_65 = arith.constant 0 : index
    %c6_66 = arith.constant 6 : index
    %c32_67 = arith.constant 32 : index
    %359 = vector.load %arg6[%c0_65, %c6_66, %c32_67] : memref<4x8x64xf32, #tpu.memory_space<vmem>>, vector<4x1x32xf32>
    %360 = vector.shape_cast %359 : vector<4x1x32xf32> to vector<4x32xf32>
    %361 = vector.shape_cast %358 : vector<4x32xf32> to vector<4x1x32xf32>
    tpu.vector_store %arg6[%c0_65, %c6_66, %c32_67], %361 {strides = array<i32>} : memref<4x8x64xf32, #tpu.memory_space<vmem>>, vector<4x1x32xf32>,
    %362 = vector.extract_strided_slice %288 {offsets = [0, 5, 0], sizes = [4, 1, 128], strides = [1, 1, 1]} : vector<4x8x128xf32> to vector<4x1x128xf32>
    %363 = vector.shape_cast %362 : vector<4x1x128xf32> to vector<4x128xf32>
    %cst_68 = arith.constant dense<0.000000e+00> : vector<4x128xf32>
    %364 = tpu.matmul %351, %289, %cst_68 {dimension_numbers = #tpu.dot_dimension_numbers<[1], [0], [0], [1], [0, 0, 1, 1], [], []>} : vector<4x32xf32>, vector<32x128xf32>, vector<4x128xf32> -> vector<4x128xf32>
    %365 = arith.addf %363, %364 : vector<4x128xf32>
    %366 = vector.extract_strided_slice %365 {offsets = [0, 0], sizes = [4, 96], strides = [1, 1]} : vector<4x128xf32> to vector<4x96xf32>
    %367 = arith.negf %366 : vector<4x96xf32>
    %368 = math.exp %367 : vector<4x96xf32>
    %cst_69 = arith.constant 1.000000e+00 : f32
    %369 = vector.broadcast %cst_69 : f32 to vector<4x96xf32>
    %370 = arith.addf %369, %368 : vector<4x96xf32>
    %371 = arith.divf %369, %370 : vector<4x96xf32>
    %372 = vector.extract_strided_slice %365 {offsets = [0, 96], sizes = [4, 32], strides = [1, 1]} : vector<4x128xf32> to vector<4x32xf32>
    %373 = math.tanh %372 : vector<4x32xf32>
    %374 = vector.extract_strided_slice %371 {offsets = [0, 0], sizes = [4, 32], strides = [1, 1]} : vector<4x96xf32> to vector<4x32xf32>
    %375 = vector.extract_strided_slice %371 {offsets = [0, 32], sizes = [4, 32], strides = [1, 1]} : vector<4x96xf32> to vector<4x32xf32>
    %376 = vector.extract_strided_slice %371 {offsets = [0, 64], sizes = [4, 32], strides = [1, 1]} : vector<4x96xf32> to vector<4x32xf32>
    %377 = arith.mulf %375, %354 : vector<4x32xf32>
    %378 = arith.mulf %374, %373 : vector<4x32xf32>
    %379 = arith.addf %377, %378 : vector<4x32xf32>
    %380 = math.tanh %379 : vector<4x32xf32>
    %381 = arith.mulf %376, %380 : vector<4x32xf32>
    %c5_i32_70 = arith.constant 5 : i32
    %382 = vector.broadcast %c5_i32_70 : i32 to vector<4x1xi32>
    %383 = arith.cmpi sgt, %1, %382 : vector<4x1xi32>
    %384 = vector.shape_cast %383 : vector<4x1xi1> to vector<4x1xi1>
    %385 = vector.broadcast %384 : vector<4x1xi1> to vector<4x32xi1>
    %386 = arith.select %385, %381, %351 : vector<4x32xi1>, vector<4x32xf32>
    %387 = vector.shape_cast %383 : vector<4x1xi1> to vector<4x1xi1>
    %388 = vector.broadcast %387 : vector<4x1xi1> to vector<4x32xi1>
    %389 = arith.select %388, %379, %354 : vector<4x32xi1>, vector<4x32xf32>
    %cst_71 = arith.constant 0.000000e+00 : f32
    %390 = vector.shape_cast %383 : vector<4x1xi1> to vector<4x1xi1>
    %391 = vector.broadcast %390 : vector<4x1xi1> to vector<4x32xi1>
    %392 = vector.broadcast %cst_71 : f32 to vector<4x32xf32>
    %393 = arith.select %391, %381, %392 : vector<4x32xi1>, vector<4x32xf32>
    %c0_72 = arith.constant 0 : index
    %c5_73 = arith.constant 5 : index
    %c32_74 = arith.constant 32 : index
    %394 = vector.load %arg6[%c0_72, %c5_73, %c32_74] : memref<4x8x64xf32, #tpu.memory_space<vmem>>, vector<4x1x32xf32>
    %395 = vector.shape_cast %394 : vector<4x1x32xf32> to vector<4x32xf32>
    %396 = vector.shape_cast %393 : vector<4x32xf32> to vector<4x1x32xf32>
    tpu.vector_store %arg6[%c0_72, %c5_73, %c32_74], %396 {strides = array<i32>} : memref<4x8x64xf32, #tpu.memory_space<vmem>>, vector<4x1x32xf32>,
    %397 = vector.extract_strided_slice %288 {offsets = [0, 4, 0], sizes = [4, 1, 128], strides = [1, 1, 1]} : vector<4x8x128xf32> to vector<4x1x128xf32>
    %398 = vector.shape_cast %397 : vector<4x1x128xf32> to vector<4x128xf32>
    %cst_75 = arith.constant dense<0.000000e+00> : vector<4x128xf32>
    %399 = tpu.matmul %386, %289, %cst_75 {dimension_numbers = #tpu.dot_dimension_numbers<[1], [0], [0], [1], [0, 0, 1, 1], [], []>} : vector<4x32xf32>, vector<32x128xf32>, vector<4x128xf32> -> vector<4x128xf32>
    %400 = arith.addf %398, %399 : vector<4x128xf32>
    %401 = vector.extract_strided_slice %400 {offsets = [0, 0], sizes = [4, 96], strides = [1, 1]} : vector<4x128xf32> to vector<4x96xf32>
    %402 = arith.negf %401 : vector<4x96xf32>
    %403 = math.exp %402 : vector<4x96xf32>
    %cst_76 = arith.constant 1.000000e+00 : f32
    %404 = vector.broadcast %cst_76 : f32 to vector<4x96xf32>
    %405 = arith.addf %404, %403 : vector<4x96xf32>
    %406 = arith.divf %404, %405 : vector<4x96xf32>
    %407 = vector.extract_strided_slice %400 {offsets = [0, 96], sizes = [4, 32], strides = [1, 1]} : vector<4x128xf32> to vector<4x32xf32>
    %408 = math.tanh %407 : vector<4x32xf32>
    %409 = vector.extract_strided_slice %406 {offsets = [0, 0], sizes = [4, 32], strides = [1, 1]} : vector<4x96xf32> to vector<4x32xf32>
    %410 = vector.extract_strided_slice %406 {offsets = [0, 32], sizes = [4, 32], strides = [1, 1]} : vector<4x96xf32> to vector<4x32xf32>
    %411 = vector.extract_strided_slice %406 {offsets = [0, 64], sizes = [4, 32], strides = [1, 1]} : vector<4x96xf32> to vector<4x32xf32>
    %412 = arith.mulf %410, %389 : vector<4x32xf32>
    %413 = arith.mulf %409, %408 : vector<4x32xf32>
    %414 = arith.addf %412, %413 : vector<4x32xf32>
    %415 = math.tanh %414 : vector<4x32xf32>
    %416 = arith.mulf %411, %415 : vector<4x32xf32>
    %c4_i32_77 = arith.constant 4 : i32
    %417 = vector.broadcast %c4_i32_77 : i32 to vector<4x1xi32>
    %418 = arith.cmpi sgt, %1, %417 : vector<4x1xi32>
    %419 = vector.shape_cast %418 : vector<4x1xi1> to vector<4x1xi1>
    %420 = vector.broadcast %419 : vector<4x1xi1> to vector<4x32xi1>
    %421 = arith.select %420, %416, %386 : vector<4x32xi1>, vector<4x32xf32>
    %422 = vector.shape_cast %418 : vector<4x1xi1> to vector<4x1xi1>
    %423 = vector.broadcast %422 : vector<4x1xi1> to vector<4x32xi1>
    %424 = arith.select %423, %414, %389 : vector<4x32xi1>, vector<4x32xf32>
    %cst_78 = arith.constant 0.000000e+00 : f32
    %425 = vector.shape_cast %418 : vector<4x1xi1> to vector<4x1xi1>
    %426 = vector.broadcast %425 : vector<4x1xi1> to vector<4x32xi1>
    %427 = vector.broadcast %cst_78 : f32 to vector<4x32xf32>
    %428 = arith.select %426, %416, %427 : vector<4x32xi1>, vector<4x32xf32>
    %c0_79 = arith.constant 0 : index
    %c4_80 = arith.constant 4 : index
    %c32_81 = arith.constant 32 : index
    %429 = vector.load %arg6[%c0_79, %c4_80, %c32_81] : memref<4x8x64xf32, #tpu.memory_space<vmem>>, vector<4x1x32xf32>
    %430 = vector.shape_cast %429 : vector<4x1x32xf32> to vector<4x32xf32>
    %431 = vector.shape_cast %428 : vector<4x32xf32> to vector<4x1x32xf32>
    tpu.vector_store %arg6[%c0_79, %c4_80, %c32_81], %431 {strides = array<i32>} : memref<4x8x64xf32, #tpu.memory_space<vmem>>, vector<4x1x32xf32>,
    %432 = vector.extract_strided_slice %288 {offsets = [0, 3, 0], sizes = [4, 1, 128], strides = [1, 1, 1]} : vector<4x8x128xf32> to vector<4x1x128xf32>
    %433 = vector.shape_cast %432 : vector<4x1x128xf32> to vector<4x128xf32>
    %cst_82 = arith.constant dense<0.000000e+00> : vector<4x128xf32>
    %434 = tpu.matmul %421, %289, %cst_82 {dimension_numbers = #tpu.dot_dimension_numbers<[1], [0], [0], [1], [0, 0, 1, 1], [], []>} : vector<4x32xf32>, vector<32x128xf32>, vector<4x128xf32> -> vector<4x128xf32>
    %435 = arith.addf %433, %434 : vector<4x128xf32>
    %436 = vector.extract_strided_slice %435 {offsets = [0, 0], sizes = [4, 96], strides = [1, 1]} : vector<4x128xf32> to vector<4x96xf32>
    %437 = arith.negf %436 : vector<4x96xf32>
    %438 = math.exp %437 : vector<4x96xf32>
    %cst_83 = arith.constant 1.000000e+00 : f32
    %439 = vector.broadcast %cst_83 : f32 to vector<4x96xf32>
    %440 = arith.addf %439, %438 : vector<4x96xf32>
    %441 = arith.divf %439, %440 : vector<4x96xf32>
    %442 = vector.extract_strided_slice %435 {offsets = [0, 96], sizes = [4, 32], strides = [1, 1]} : vector<4x128xf32> to vector<4x32xf32>
    %443 = math.tanh %442 : vector<4x32xf32>
    %444 = vector.extract_strided_slice %441 {offsets = [0, 0], sizes = [4, 32], strides = [1, 1]} : vector<4x96xf32> to vector<4x32xf32>
    %445 = vector.extract_strided_slice %441 {offsets = [0, 32], sizes = [4, 32], strides = [1, 1]} : vector<4x96xf32> to vector<4x32xf32>
    %446 = vector.extract_strided_slice %441 {offsets = [0, 64], sizes = [4, 32], strides = [1, 1]} : vector<4x96xf32> to vector<4x32xf32>
    %447 = arith.mulf %445, %424 : vector<4x32xf32>
    %448 = arith.mulf %444, %443 : vector<4x32xf32>
    %449 = arith.addf %447, %448 : vector<4x32xf32>
    %450 = math.tanh %449 : vector<4x32xf32>
    %451 = arith.mulf %446, %450 : vector<4x32xf32>
    %c3_i32_84 = arith.constant 3 : i32
    %452 = vector.broadcast %c3_i32_84 : i32 to vector<4x1xi32>
    %453 = arith.cmpi sgt, %1, %452 : vector<4x1xi32>
    %454 = vector.shape_cast %453 : vector<4x1xi1> to vector<4x1xi1>
    %455 = vector.broadcast %454 : vector<4x1xi1> to vector<4x32xi1>
    %456 = arith.select %455, %451, %421 : vector<4x32xi1>, vector<4x32xf32>
    %457 = vector.shape_cast %453 : vector<4x1xi1> to vector<4x1xi1>
    %458 = vector.broadcast %457 : vector<4x1xi1> to vector<4x32xi1>
    %459 = arith.select %458, %449, %424 : vector<4x32xi1>, vector<4x32xf32>
    %cst_85 = arith.constant 0.000000e+00 : f32
    %460 = vector.shape_cast %453 : vector<4x1xi1> to vector<4x1xi1>
    %461 = vector.broadcast %460 : vector<4x1xi1> to vector<4x32xi1>
    %462 = vector.broadcast %cst_85 : f32 to vector<4x32xf32>
    %463 = arith.select %461, %451, %462 : vector<4x32xi1>, vector<4x32xf32>
    %c0_86 = arith.constant 0 : index
    %c3_87 = arith.constant 3 : index
    %c32_88 = arith.constant 32 : index
    %464 = vector.load %arg6[%c0_86, %c3_87, %c32_88] : memref<4x8x64xf32, #tpu.memory_space<vmem>>, vector<4x1x32xf32>
    %465 = vector.shape_cast %464 : vector<4x1x32xf32> to vector<4x32xf32>
    %466 = vector.shape_cast %463 : vector<4x32xf32> to vector<4x1x32xf32>
    tpu.vector_store %arg6[%c0_86, %c3_87, %c32_88], %466 {strides = array<i32>} : memref<4x8x64xf32, #tpu.memory_space<vmem>>, vector<4x1x32xf32>,
    %467 = vector.extract_strided_slice %288 {offsets = [0, 2, 0], sizes = [4, 1, 128], strides = [1, 1, 1]} : vector<4x8x128xf32> to vector<4x1x128xf32>
    %468 = vector.shape_cast %467 : vector<4x1x128xf32> to vector<4x128xf32>
    %cst_89 = arith.constant dense<0.000000e+00> : vector<4x128xf32>
    %469 = tpu.matmul %456, %289, %cst_89 {dimension_numbers = #tpu.dot_dimension_numbers<[1], [0], [0], [1], [0, 0, 1, 1], [], []>} : vector<4x32xf32>, vector<32x128xf32>, vector<4x128xf32> -> vector<4x128xf32>
    %470 = arith.addf %468, %469 : vector<4x128xf32>
    %471 = vector.extract_strided_slice %470 {offsets = [0, 0], sizes = [4, 96], strides = [1, 1]} : vector<4x128xf32> to vector<4x96xf32>
    %472 = arith.negf %471 : vector<4x96xf32>
    %473 = math.exp %472 : vector<4x96xf32>
    %cst_90 = arith.constant 1.000000e+00 : f32
    %474 = vector.broadcast %cst_90 : f32 to vector<4x96xf32>
    %475 = arith.addf %474, %473 : vector<4x96xf32>
    %476 = arith.divf %474, %475 : vector<4x96xf32>
    %477 = vector.extract_strided_slice %470 {offsets = [0, 96], sizes = [4, 32], strides = [1, 1]} : vector<4x128xf32> to vector<4x32xf32>
    %478 = math.tanh %477 : vector<4x32xf32>
    %479 = vector.extract_strided_slice %476 {offsets = [0, 0], sizes = [4, 32], strides = [1, 1]} : vector<4x96xf32> to vector<4x32xf32>
    %480 = vector.extract_strided_slice %476 {offsets = [0, 32], sizes = [4, 32], strides = [1, 1]} : vector<4x96xf32> to vector<4x32xf32>
    %481 = vector.extract_strided_slice %476 {offsets = [0, 64], sizes = [4, 32], strides = [1, 1]} : vector<4x96xf32> to vector<4x32xf32>
    %482 = arith.mulf %480, %459 : vector<4x32xf32>
    %483 = arith.mulf %479, %478 : vector<4x32xf32>
    %484 = arith.addf %482, %483 : vector<4x32xf32>
    %485 = math.tanh %484 : vector<4x32xf32>
    %486 = arith.mulf %481, %485 : vector<4x32xf32>
    %c2_i32_91 = arith.constant 2 : i32
    %487 = vector.broadcast %c2_i32_91 : i32 to vector<4x1xi32>
    %488 = arith.cmpi sgt, %1, %487 : vector<4x1xi32>
    %489 = vector.shape_cast %488 : vector<4x1xi1> to vector<4x1xi1>
    %490 = vector.broadcast %489 : vector<4x1xi1> to vector<4x32xi1>
    %491 = arith.select %490, %486, %456 : vector<4x32xi1>, vector<4x32xf32>
    %492 = vector.shape_cast %488 : vector<4x1xi1> to vector<4x1xi1>
    %493 = vector.broadcast %492 : vector<4x1xi1> to vector<4x32xi1>
    %494 = arith.select %493, %484, %459 : vector<4x32xi1>, vector<4x32xf32>
    %cst_92 = arith.constant 0.000000e+00 : f32
    %495 = vector.shape_cast %488 : vector<4x1xi1> to vector<4x1xi1>
    %496 = vector.broadcast %495 : vector<4x1xi1> to vector<4x32xi1>
    %497 = vector.broadcast %cst_92 : f32 to vector<4x32xf32>
    %498 = arith.select %496, %486, %497 : vector<4x32xi1>, vector<4x32xf32>
    %c0_93 = arith.constant 0 : index
    %c2_94 = arith.constant 2 : index
    %c32_95 = arith.constant 32 : index
    %499 = vector.load %arg6[%c0_93, %c2_94, %c32_95] : memref<4x8x64xf32, #tpu.memory_space<vmem>>, vector<4x1x32xf32>
    %500 = vector.shape_cast %499 : vector<4x1x32xf32> to vector<4x32xf32>
    %501 = vector.shape_cast %498 : vector<4x32xf32> to vector<4x1x32xf32>
    tpu.vector_store %arg6[%c0_93, %c2_94, %c32_95], %501 {strides = array<i32>} : memref<4x8x64xf32, #tpu.memory_space<vmem>>, vector<4x1x32xf32>,
    %502 = vector.extract_strided_slice %288 {offsets = [0, 1, 0], sizes = [4, 1, 128], strides = [1, 1, 1]} : vector<4x8x128xf32> to vector<4x1x128xf32>
    %503 = vector.shape_cast %502 : vector<4x1x128xf32> to vector<4x128xf32>
    %cst_96 = arith.constant dense<0.000000e+00> : vector<4x128xf32>
    %504 = tpu.matmul %491, %289, %cst_96 {dimension_numbers = #tpu.dot_dimension_numbers<[1], [0], [0], [1], [0, 0, 1, 1], [], []>} : vector<4x32xf32>, vector<32x128xf32>, vector<4x128xf32> -> vector<4x128xf32>
    %505 = arith.addf %503, %504 : vector<4x128xf32>
    %506 = vector.extract_strided_slice %505 {offsets = [0, 0], sizes = [4, 96], strides = [1, 1]} : vector<4x128xf32> to vector<4x96xf32>
    %507 = arith.negf %506 : vector<4x96xf32>
    %508 = math.exp %507 : vector<4x96xf32>
    %cst_97 = arith.constant 1.000000e+00 : f32
    %509 = vector.broadcast %cst_97 : f32 to vector<4x96xf32>
    %510 = arith.addf %509, %508 : vector<4x96xf32>
    %511 = arith.divf %509, %510 : vector<4x96xf32>
    %512 = vector.extract_strided_slice %505 {offsets = [0, 96], sizes = [4, 32], strides = [1, 1]} : vector<4x128xf32> to vector<4x32xf32>
    %513 = math.tanh %512 : vector<4x32xf32>
    %514 = vector.extract_strided_slice %511 {offsets = [0, 0], sizes = [4, 32], strides = [1, 1]} : vector<4x96xf32> to vector<4x32xf32>
    %515 = vector.extract_strided_slice %511 {offsets = [0, 32], sizes = [4, 32], strides = [1, 1]} : vector<4x96xf32> to vector<4x32xf32>
    %516 = vector.extract_strided_slice %511 {offsets = [0, 64], sizes = [4, 32], strides = [1, 1]} : vector<4x96xf32> to vector<4x32xf32>
    %517 = arith.mulf %515, %494 : vector<4x32xf32>
    %518 = arith.mulf %514, %513 : vector<4x32xf32>
    %519 = arith.addf %517, %518 : vector<4x32xf32>
    %520 = math.tanh %519 : vector<4x32xf32>
    %521 = arith.mulf %516, %520 : vector<4x32xf32>
    %c1_i32_98 = arith.constant 1 : i32
    %522 = vector.broadcast %c1_i32_98 : i32 to vector<4x1xi32>
    %523 = arith.cmpi sgt, %1, %522 : vector<4x1xi32>
    %524 = vector.shape_cast %523 : vector<4x1xi1> to vector<4x1xi1>
    %525 = vector.broadcast %524 : vector<4x1xi1> to vector<4x32xi1>
    %526 = arith.select %525, %521, %491 : vector<4x32xi1>, vector<4x32xf32>
    %527 = vector.shape_cast %523 : vector<4x1xi1> to vector<4x1xi1>
    %528 = vector.broadcast %527 : vector<4x1xi1> to vector<4x32xi1>
    %529 = arith.select %528, %519, %494 : vector<4x32xi1>, vector<4x32xf32>
    %cst_99 = arith.constant 0.000000e+00 : f32
    %530 = vector.shape_cast %523 : vector<4x1xi1> to vector<4x1xi1>
    %531 = vector.broadcast %530 : vector<4x1xi1> to vector<4x32xi1>
    %532 = vector.broadcast %cst_99 : f32 to vector<4x32xf32>
    %533 = arith.select %531, %521, %532 : vector<4x32xi1>, vector<4x32xf32>
    %c0_100 = arith.constant 0 : index
    %c1_101 = arith.constant 1 : index
    %c32_102 = arith.constant 32 : index
    %534 = vector.load %arg6[%c0_100, %c1_101, %c32_102] : memref<4x8x64xf32, #tpu.memory_space<vmem>>, vector<4x1x32xf32>
    %535 = vector.shape_cast %534 : vector<4x1x32xf32> to vector<4x32xf32>
    %536 = vector.shape_cast %533 : vector<4x32xf32> to vector<4x1x32xf32>
    tpu.vector_store %arg6[%c0_100, %c1_101, %c32_102], %536 {strides = array<i32>} : memref<4x8x64xf32, #tpu.memory_space<vmem>>, vector<4x1x32xf32>,
    %537 = vector.extract_strided_slice %288 {offsets = [0, 0, 0], sizes = [4, 1, 128], strides = [1, 1, 1]} : vector<4x8x128xf32> to vector<4x1x128xf32>
    %538 = vector.shape_cast %537 : vector<4x1x128xf32> to vector<4x128xf32>
    %cst_103 = arith.constant dense<0.000000e+00> : vector<4x128xf32>
    %539 = tpu.matmul %526, %289, %cst_103 {dimension_numbers = #tpu.dot_dimension_numbers<[1], [0], [0], [1], [0, 0, 1, 1], [], []>} : vector<4x32xf32>, vector<32x128xf32>, vector<4x128xf32> -> vector<4x128xf32>
    %540 = arith.addf %538, %539 : vector<4x128xf32>
    %541 = vector.extract_strided_slice %540 {offsets = [0, 0], sizes = [4, 96], strides = [1, 1]} : vector<4x128xf32> to vector<4x96xf32>
    %542 = arith.negf %541 : vector<4x96xf32>
    %543 = math.exp %542 : vector<4x96xf32>
    %cst_104 = arith.constant 1.000000e+00 : f32
    %544 = vector.broadcast %cst_104 : f32 to vector<4x96xf32>
    %545 = arith.addf %544, %543 : vector<4x96xf32>
    %546 = arith.divf %544, %545 : vector<4x96xf32>
    %547 = vector.extract_strided_slice %540 {offsets = [0, 96], sizes = [4, 32], strides = [1, 1]} : vector<4x128xf32> to vector<4x32xf32>
    %548 = math.tanh %547 : vector<4x32xf32>
    %549 = vector.extract_strided_slice %546 {offsets = [0, 0], sizes = [4, 32], strides = [1, 1]} : vector<4x96xf32> to vector<4x32xf32>
    %550 = vector.extract_strided_slice %546 {offsets = [0, 32], sizes = [4, 32], strides = [1, 1]} : vector<4x96xf32> to vector<4x32xf32>
    %551 = vector.extract_strided_slice %546 {offsets = [0, 64], sizes = [4, 32], strides = [1, 1]} : vector<4x96xf32> to vector<4x32xf32>
    %552 = arith.mulf %550, %529 : vector<4x32xf32>
    %553 = arith.mulf %549, %548 : vector<4x32xf32>
    %554 = arith.addf %552, %553 : vector<4x32xf32>
    %555 = math.tanh %554 : vector<4x32xf32>
    %556 = arith.mulf %551, %555 : vector<4x32xf32>
    %c0_i32_105 = arith.constant 0 : i32
    %557 = vector.broadcast %c0_i32_105 : i32 to vector<4x1xi32>
    %558 = arith.cmpi sgt, %1, %557 : vector<4x1xi32>
    %cst_106 = arith.constant 0.000000e+00 : f32
    %559 = vector.shape_cast %558 : vector<4x1xi1> to vector<4x1xi1>
    %560 = vector.broadcast %559 : vector<4x1xi1> to vector<4x32xi1>
    %561 = vector.broadcast %cst_106 : f32 to vector<4x32xf32>
    %562 = arith.select %560, %556, %561 : vector<4x32xi1>, vector<4x32xf32>
    %c0_107 = arith.constant 0 : index
    %c0_108 = arith.constant 0 : index
    %c32_109 = arith.constant 32 : index
    %563 = vector.load %arg6[%c0_107, %c0_108, %c32_109] : memref<4x8x64xf32, #tpu.memory_space<vmem>>, vector<4x1x32xf32>
    %564 = vector.shape_cast %563 : vector<4x1x32xf32> to vector<4x32xf32>
    %565 = vector.shape_cast %562 : vector<4x32xf32> to vector<4x1x32xf32>
    tpu.vector_store %arg6[%c0_107, %c0_108, %c32_109], %565 {strides = array<i32>} : memref<4x8x64xf32, #tpu.memory_space<vmem>>, vector<4x1x32xf32>,
    return
  }
  func.func @transform_0(%arg0: i32) -> (i32, i32, i32) {
    %c0_i32 = arith.constant 0 : i32
    %c0_i32_0 = arith.constant 0 : i32
    %c0_i32_1 = arith.constant 0 : i32
    %c0_i32_2 = arith.constant 0 : i32
    return %c0_i32, %c0_i32_0, %c0_i32_1 : i32, i32, i32
  }
  func.func @transform_1(%arg0: i32) -> (i32, i32) {
    %c0_i32 = arith.constant 0 : i32
    %c0_i32_0 = arith.constant 0 : i32
    %c0_i32_1 = arith.constant 0 : i32
    return %c0_i32, %c0_i32_0 : i32, i32
  }
  func.func @transform_2(%arg0: i32) -> (i32, i32) {
    %c0_i32 = arith.constant 0 : i32
    %c0_i32_0 = arith.constant 0 : i32
    %c0_i32_1 = arith.constant 0 : i32
    return %c0_i32, %c0_i32_0 : i32, i32
  }
  func.func @transform_3(%arg0: i32) -> (i32, i32) {
    %c0_i32 = arith.constant 0 : i32
    %c0_i32_0 = arith.constant 0 : i32
    %c0_i32_1 = arith.constant 0 : i32
    return %c0_i32, %c0_i32_0 : i32, i32
  }
  func.func @transform_4(%arg0: i32) -> (i32, i32) {
    %c0_i32 = arith.constant 0 : i32
    %c0_i32_0 = arith.constant 0 : i32
    %c0_i32_1 = arith.constant 0 : i32
    return %c0_i32, %c0_i32_0 : i32, i32
  }
  func.func @transform_5(%arg0: i32) -> (i32, i32, i32) {
    %c0_i32 = arith.constant 0 : i32
    %c0_i32_0 = arith.constant 0 : i32
    %c0_i32_1 = arith.constant 0 : i32
    %c0_i32_2 = arith.constant 0 : i32
    return %c0_i32, %c0_i32_0, %c0_i32_1 : i32, i32, i32
  }
}

</mosaic_0001>

<llo_original>
// kernel: seq_encoder_forward.1
$region0: #{seq_encoder_forward.1}
  #allocation0 [shape = 'u32[]', space=smem, size = 0x4, offset = 0x4, fixed_abs, tag = 'smem constant byte address 0x4 - core index']
  #allocation1 [shape = 'u32[144,128]{1,0:T(1,128)}', space=vmem, size = 0x12000, scoped, tag = 'internal scratch']
  %s0 = inlined_call_operand.hbm [shape: f32[4,8,16], index: 0, kind: input, shape index: {}]
  %s1 = inlined_call_operand.hbm [shape: f32[16,256], index: 1, kind: input, shape index: {}]
  %s2 = inlined_call_operand.hbm [shape: f32[32,256], index: 2, kind: input, shape index: {}]
  %s3 = inlined_call_operand.vmem [shape: f32[1,256], index: 3, kind: input, shape index: {}]
  %s4 = inlined_call_operand.vmem [shape: s32[4,1], index: 4, kind: input, shape index: {}]
  %s5 = inlined_call_operand.hbm [shape: f32[4,8,64], index: 5, kind: output, shape index: {}]
  %s6 = sld [smem:[#allocation0]]
  $region42: #{seq_encoder_forward.1} parent=0
    _
  %s8 = ssub.s32 1, %s6
  %s9 = scalar_select 0, %s8, %s6
  $region1: #{seq_encoder_forward.1} parent=0
    #allocation2 [shape = 'u8[16384]{0}', space=vmem, size = 0x4000, scoped, tag = 'input window, operand 0, single buffered']
    #allocation3 [shape = 's32[1]{0}', space=sflag, size = 0x4, scoped, tag = 'scoped memory for seq_encoder_forward.1']
    #allocation4 [shape = 's32[1]{0}', space=sflag, size = 0x4, scoped, tag = 'scoped memory for seq_encoder_forward.1']
    #allocation5 [shape = 'u8[16384]{0}', space=vmem, size = 0x4000, scoped, tag = 'input window, operand 1, single buffered']
    #allocation6 [shape = 's32[1]{0}', space=sflag, size = 0x4, scoped, tag = 'scoped memory for seq_encoder_forward.1']
    #allocation7 [shape = 'u8[32768]{0}', space=vmem, size = 0x8000, scoped, tag = 'input window, operand 2, single buffered']
    #allocation8 [shape = 'u8[16384]{0}', space=vmem, size = 0x4000, scoped, tag = 'output window, operand 0, single buffered']
    %10 = vsyncpa [#allocation3], 0
    %11 = vsyncpa [#allocation6], 0
    %12 = vsyncpa [#allocation4], 0
    // Predicated region
    $region2: #{seq_encoder_forward.1} parent=1 // pred_check
      _
    $region3: #{seq_encoder_forward.1} parent=1 // pred_check_branch
      %14 = sbr.rel (0) target = $region5
    $region4: #{seq_encoder_forward.1} parent=1 // pred_region
      %s16 = ssub.s32 512, 512
      %17 = vsyncadd [#allocation3], %s16
      %s18 = sshll.u32 [#allocation2], 4
      %s19 = int_to_ptr.vmem [resolvable:$true] %s18
      %24 = dma.hbm_to_vmem [thread:$0]  %s0, 512, %s19, [#allocation3], 128, 128, 8
    $region5: #{seq_encoder_forward.1} parent=1 // pred_fallthru
      _
    // Predicated region
    $region6: #{seq_encoder_forward.1} parent=1 // pred_check
      _
    $region7: #{seq_encoder_forward.1} parent=1 // pred_check_branch
      %26 = sbr.rel (0) target = $region9
    $region8: #{seq_encoder_forward.1} parent=1 // pred_region
      %s28 = ssub.s32 512, 512
      %29 = vsyncadd [#allocation6], %s28
      %s30 = sshll.u32 [#allocation5], 4
      %s31 = int_to_ptr.vmem [resolvable:$true] %s30
      %36 = dma.hbm_to_vmem [thread:$0]  %s1, 512, %s31, [#allocation6], 256, 256, 16
    $region9: #{seq_encoder_forward.1} parent=1 // pred_fallthru
      _
    // Predicated region
    $region10: #{seq_encoder_forward.1} parent=1 // pred_check
      _
    $region11: #{seq_encoder_forward.1} parent=1 // pred_check_branch
      %38 = sbr.rel (0) target = $region13
    $region12: #{seq_encoder_forward.1} parent=1 // pred_region
      %s40 = ssub.s32 1024, 1024
      %41 = vsyncadd [#allocation6], %s40
      %s42 = sshll.u32 [#allocation7], 4
      %s43 = int_to_ptr.vmem [resolvable:$true] %s42
      %48 = dma.hbm_to_vmem [thread:$0]  %s2, 1024, %s43, [#allocation6], 256, 256, 16
    $region13: #{seq_encoder_forward.1} parent=1 // pred_fallthru
      _
    // Predicated region
    $region14: #{seq_encoder_forward.1} parent=1 // pred_check
      _
    $region15: #{seq_encoder_forward.1} parent=1 // pred_check_branch
      %50 = sbr.rel (0) target = $region17
    $region16: #{seq_encoder_forward.1} parent=1 // pred_region
      _
    $region17: #{seq_encoder_forward.1} parent=1 // pred_fallthru
      _
    // Predicated region
    $region18: #{seq_encoder_forward.1} parent=1 // pred_check
      _
    $region19: #{seq_encoder_forward.1} parent=1 // pred_check_branch
      %52 = sbr.rel (0) target = $region21
    $region20: #{seq_encoder_forward.1} parent=1 // pred_region
      _
    $region21: #{seq_encoder_forward.1} parent=1 // pred_fallthru
      _
    // Predicated region
    $region22: #{seq_encoder_forward.1} parent=1 // pred_check
      _
    $region23: #{seq_encoder_forward.1} parent=1 // pred_check_branch
      %54 = sbr.rel (0) target = $region25
    $region24: #{seq_encoder_forward.1} parent=1 // pred_region
      %55 = dma.done [#allocation3], 512
    $region25: #{seq_encoder_forward.1} parent=1 // pred_fallthru
      _
    // Predicated region
    $region26: #{seq_encoder_forward.1} parent=1 // pred_check
      _
    $region27: #{seq_encoder_forward.1} parent=1 // pred_check_branch
      %57 = sbr.rel (0) target = $region29
    $region28: #{seq_encoder_forward.1} parent=1 // pred_region
      %58 = dma.done [#allocation6], 512
    $region29: #{seq_encoder_forward.1} parent=1 // pred_fallthru
      _
    // Predicated region
    $region30: #{seq_encoder_forward.1} parent=1 // pred_check
      _
    $region31: #{seq_encoder_forward.1} parent=1 // pred_check_branch
      %60 = sbr.rel (0) target = $region33
    $region32: #{seq_encoder_forward.1} parent=1 // pred_region
      %61 = dma.done [#allocation6], 1024
    $region33: #{seq_encoder_forward.1} parent=1 // pred_fallthru
      _
    %v62 = vld [vmem:[#allocation2] sm:$0xff]
    %v63 = vld [vmem:[#allocation2 + $0x8] sm:$0xff]
    %v64 = vld [vmem:[#allocation2 + $0x10] sm:$0xff]
    %v65 = vld [vmem:[#allocation2 + $0x18] sm:$0xff]
    %v66 = vld [vmem:[%s4] sm:$0xf]
    %v67 = vld [vmem:[#allocation5] sm:$0xff]
    %v68 = vld [vmem:[#allocation5 + $0x8] sm:$0xff]
    %v69 = vld [vmem:[#allocation5 + $0x10] sm:$0xff]
    %v70 = vld [vmem:[#allocation5 + $0x18] sm:$0xff]
    %v71 = vld [vmem:[%s3] sm:$0x3]
    %v73 = vlaneseq
    %v74 = vshrl.u32 %v73, 7
    %v75 = vsub.s32 0, %v74
    %v76 = vrot.slane %v71, %v75
    %v77 = vlaneseq
    %v78 = vshrl.u32 %v77, 7
    %v79 = vsub.s32 1, %v78
    %v80 = vrot.slane %v71, %v79
    %vm83 = vcmask 130048
    %v85 = vsel %vm83, %v62, 0
    %v88 = vsel %vm83, %v63, 0
    %v91 = vsel %vm83, %v64, 0
    %v94 = vsel %vm83, %v65, 0
    %96 = vmatprep.subr.mxu0 0.0
    %97 = vmatpush1.msra.mxu0 0.0
    %98 = vmatprep.subr.mxu0 0.0
    %99 = vmatpush1.msra.mxu0 0.0
    %100 = vmatprep.subr.mxu0 0.0
    %101 = vmatpush1.msra.mxu0 0.0
    %102 = vmatprep.subr.mxu0 0.0
    %103 = vmatpush1.msra.mxu0 0.0
    %104 = vmatprep.subr.mxu0 0.0
    %105 = vmatpush1.msra.mxu0 0.0
    %106 = vmatprep.subr.mxu0 0.0
    %107 = vmatpush1.msra.mxu0 0.0
    %108 = vmatprep.subr.mxu0 0.0
    %109 = vmatpush1.msra.mxu0 0.0
    %110 = vmatprep.subr.mxu0 0.0
    %111 = vmatpush1.msra.mxu0 0.0
    %112 = vmatprep.subr.mxu0 0.0
    %113 = vmatpush1.msra.mxu0 0.0
    %114 = vmatprep.subr.mxu0 0.0
    %115 = vmatpush1.msra.mxu0 0.0
    %116 = vmatprep.subr.mxu0 0.0
    %117 = vmatpush1.msra.mxu0 0.0
    %118 = vmatprep.subr.mxu0 0.0
    %119 = vmatpush1.msra.mxu0 0.0
    %120 = vmatprep.subr.mxu0 0.0
    %121 = vmatpush1.msra.mxu0 0.0
    %122 = vmatprep.subr.mxu0 0.0
    %123 = vmatpush1.msra.mxu0 0.0
    %124 = vmatprep.subr.mxu0 %v70
    %125 = vmatpush1.msra.mxu0 %v69
    %126 = vmatprep.subr.mxu0 %v68
    %127 = vmatpush1.msra.mxu0 %v67
    %128 = vmatprep.subr.mxu0 0.0
    %129 = vmatpush2.msra.mxu0 0.0
    %130 = vmatprep.subr.mxu0 0.0
    %131 = vmatpush2.msra.mxu0 0.0
    %132 = vmatprep.subr.mxu0 0.0
    %133 = vmatpush2.msra.mxu0 0.0
    %134 = vmatprep.subr.mxu0 0.0
    %135 = vmatpush2.msra.mxu0 0.0
    %136 = vmatprep.subr.mxu0 0.0
    %137 = vmatpush2.msra.mxu0 0.0
    %138 = vmatprep.subr.mxu0 0.0
    %139 = vmatpush2.msra.mxu0 0.0
    %140 = vmatprep.subr.mxu0 0.0
    %141 = vmatpush2.msra.mxu0 0.0
    %142 = vmatprep.subr.mxu0 0.0
    %143 = vmatpush2.msra.mxu0 0.0
    %144 = vmatprep.subr.mxu0 0.0
    %145 = vmatpush2.msra.mxu0 0.0
    %146 = vmatprep.subr.mxu0 0.0
    %147 = vmatpush2.msra.mxu0 0.0
    %148 = vmatprep.subr.mxu0 0.0
    %149 = vmatpush2.msra.mxu0 0.0
    %150 = vmatprep.subr.mxu0 0.0
    %151 = vmatpush2.msra.mxu0 0.0
    %152 = vmatprep.subr.mxu0 0.0
    %153 = vmatpush2.msra.mxu0 0.0
    %154 = vmatprep.subr.mxu0 0.0
    %155 = vmatpush2.msra.mxu0 0.0
    %156 = vmatprep.subr.mxu0 0.0
    %157 = vmatpush2.msra.mxu0 0.0
    %158 = vmatprep.subr.mxu0 0.0
    %159 = vmatpush2.msra.mxu0 0.0
    %160 = vmatprep.mubr.f32.mxu0 0.0
    %161 = vmatmul.mubr.f32.gmra.mxu0 %v85
    %v162 = vpop.f32.mrf.mxu0
    %v163 = vadd.f32 %v76, %v162
    %v164 = vpop.f32.mrf.mxu0
    %v165 = vadd.f32 %v80, %v164
    %166 = vmatprep.mubr.f32.mxu0 0.0
    %167 = vmatmul.mubr.f32.gmra.mxu0 %v88
    %v168 = vpop.f32.mrf.mxu0
    %v169 = vadd.f32 %v76, %v168
    %v170 = vpop.f32.mrf.mxu0
    %v171 = vadd.f32 %v80, %v170
    %172 = vmatprep.mubr.f32.mxu0 0.0
    %173 = vmatmul.mubr.f32.gmra.mxu0 %v91
    %v174 = vpop.f32.mrf.mxu0
    %v175 = vadd.f32 %v76, %v174
    %v176 = vpop.f32.mrf.mxu0
    %v177 = vadd.f32 %v80, %v176
    %178 = vmatprep.mubr.f32.mxu0 0.0
    %179 = vmatmul.mubr.f32.gmra.mxu0 %v94
    %v180 = vpop.f32.mrf.mxu0
    %v181 = vadd.f32 %v76, %v180
    %v182 = vpop.f32.mrf.mxu0
    %v183 = vadd.f32 %v80, %v182
    %184 = vdwg.mxu0
    %v185 = vld [vmem:[#allocation7] sm:$0xff]
    %v186 = vld [vmem:[#allocation7 + $0x8] sm:$0xff]
    %v187 = vld [vmem:[#allocation7 + $0x10] sm:$0xff]
    %v188 = vld [vmem:[#allocation7 + $0x18] sm:$0xff]
    %v189 = vld [vmem:[#allocation7 + $0x20] sm:$0xff]
    %v190 = vld [vmem:[#allocation7 + $0x28] sm:$0xff]
    %v191 = vld [vmem:[#allocation7 + $0x30] sm:$0xff]
    %v192 = vld [vmem:[#allocation7 + $0x38] sm:$0xff]
    %vm193 = vcmask 261120
    %v195 = vsel %vm193, 0.0, 0
    %197 = vmatprep.subr.mxu0 0.0
    %198 = vmatpush1.msra.mxu0 0.0
    %199 = vmatprep.subr.mxu0 0.0
    %200 = vmatpush1.msra.mxu0 0.0
    %201 = vmatprep.subr.mxu0 0.0
    %202 = vmatpush1.msra.mxu0 0.0
    %203 = vmatprep.subr.mxu0 0.0
    %204 = vmatpush1.msra.mxu0 0.0
    %205 = vmatprep.subr.mxu0 0.0
    %206 = vmatpush1.msra.mxu0 0.0
    %207 = vmatprep.subr.mxu0 0.0
    %208 = vmatpush1.msra.mxu0 0.0
    %209 = vmatprep.subr.mxu0 0.0
    %210 = vmatpush1.msra.mxu0 0.0
    %211 = vmatprep.subr.mxu0 0.0
    %212 = vmatpush1.msra.mxu0 0.0
    %213 = vmatprep.subr.mxu0 0.0
    %214 = vmatpush1.msra.mxu0 0.0
    %215 = vmatprep.subr.mxu0 0.0
    %216 = vmatpush1.msra.mxu0 0.0
    %217 = vmatprep.subr.mxu0 0.0
    %218 = vmatpush1.msra.mxu0 0.0
    %219 = vmatprep.subr.mxu0 0.0
    %220 = vmatpush1.msra.mxu0 0.0
    %221 = vmatprep.subr.mxu0 0.0
    %222 = vmatpush1.msra.mxu0 %v191
    %223 = vmatprep.subr.mxu0 0.0
    %224 = vmatpush1.msra.mxu0 %v189
    %225 = vmatprep.subr.mxu0 0.0
    %226 = vmatpush1.msra.mxu0 %v187
    %227 = vmatprep.subr.mxu0 0.0
    %228 = vmatpush1.msra.mxu0 %v185
    %229 = vmatprep.subr.mxu0 0.0
    %230 = vmatpush2.msra.mxu0 0.0
    %231 = vmatprep.subr.mxu0 0.0
    %232 = vmatpush2.msra.mxu0 0.0
    %233 = vmatprep.subr.mxu0 0.0
    %234 = vmatpush2.msra.mxu0 0.0
    %235 = vmatprep.subr.mxu0 0.0
    %236 = vmatpush2.msra.mxu0 0.0
    %237 = vmatprep.subr.mxu0 0.0
    %238 = vmatpush2.msra.mxu0 0.0
    %239 = vmatprep.subr.mxu0 0.0
    %240 = vmatpush2.msra.mxu0 0.0
    %241 = vmatprep.subr.mxu0 0.0
    %242 = vmatpush2.msra.mxu0 0.0
    %243 = vmatprep.subr.mxu0 0.0
    %244 = vmatpush2.msra.mxu0 0.0
    %245 = vmatprep.subr.mxu0 0.0
    %246 = vmatpush2.msra.mxu0 0.0
    %247 = vmatprep.subr.mxu0 0.0
    %248 = vmatpush2.msra.mxu0 0.0
    %249 = vmatprep.subr.mxu0 0.0
    %250 = vmatpush2.msra.mxu0 0.0
    %251 = vmatprep.subr.mxu0 0.0
    %252 = vmatpush2.msra.mxu0 0.0
    %253 = vmatprep.subr.mxu0 0.0
    %254 = vmatpush2.msra.mxu0 0.0
    %255 = vmatprep.subr.mxu0 0.0
    %256 = vmatpush2.msra.mxu0 0.0
    %257 = vmatprep.subr.mxu0 0.0
    %258 = vmatpush2.msra.mxu0 0.0
    %259 = vmatprep.subr.mxu0 0.0
    %260 = vmatpush2.msra.mxu0 0.0
    %261 = vmatprep.mubr.f32.mxu0 0.0
    %262 = vmatmul.mubr.f32.gmra.mxu0 %v195
    %v263 = vpop.f32.mrf.mxu0
    %v264 = vadd.f32 0.0, %v263
    %v265 = vpop.f32.mrf.mxu0
    %266 = vdwg.mxu0
    %v268 = vrot.slane %v264, 1
    %v269 = vrot.slane %v264, 2
    %v270 = vrot.slane %v264, 3
    %v275 = vadd.f32 %v163, %v264
    %v276 = vadd.f32 %v169, %v268
    %v277 = vadd.f32 %v175, %v269
    %v278 = vadd.f32 %v181, %v270
    %v279 = vxor.u32 %v275, 2147483648
    %v280 = vxor.u32 %v276, 2147483648
    %v281 = vxor.u32 %v277, 2147483648
    %v282 = vxor.u32 %v278, 2147483648
    %v283 = vmul.f32 %v279, 1.442695
    %v284 = vpow.pop %v283
    %v285 = vmul.f32 %v280, 1.442695
    %v286 = vpow.pop %v285
    %v287 = vmul.f32 %v281, 1.442695
    %v288 = vpow.pop %v287
    %v289 = vmul.f32 %v282, 1.442695
    %v290 = vpow.pop %v289
    %v291 = vadd.f32 %v284, 1.0
    %v292 = vadd.f32 %v286, 1.0
    %v293 = vadd.f32 %v288, 1.0
    %v294 = vadd.f32 %v290, 1.0
    %v295 = vrcp.pop %v291
    %v296 = vmul.f32 1.0, %v295
    %v297 = vrcp.pop %v292
    %v298 = vmul.f32 1.0, %v297
    %v299 = vrcp.pop %v293
    %v300 = vmul.f32 1.0, %v299
    %v301 = vrcp.pop %v294
    %v302 = vmul.f32 1.0, %v301
    %v303 = vtanh.pop %v275
    %v304 = vtanh.pop %v276
    %v305 = vtanh.pop %v277
    %v306 = vtanh.pop %v278
    %v307 = vmul.f32 %v296, 0.0
    %v308 = vmul.f32 %v298, 0.0
    %v309 = vmul.f32 %v300, 0.0
    %v310 = vmul.f32 %v302, 0.0
    %315 = vrot.lane.b32.xlu0 %v303, 32
    %v316 = vpop.permute.xlu0 %315
    %317 = vrot.lane.b32.xlu0 %v304, 32
    %v318 = vpop.permute.xlu0 %317
    %319 = vrot.lane.b32.xlu0 %v305, 32
    %v320 = vpop.permute.xlu0 %319
    %321 = vrot.lane.b32.xlu0 %v306, 32
    %v322 = vpop.permute.xlu0 %321
    %v327 = vmul.f32 %v296, %v316
    %v328 = vmul.f32 %v298, %v318
    %v329 = vmul.f32 %v300, %v320
    %v330 = vmul.f32 %v302, %v322
    %335 = vrot.lane.b32.xlu0 %v327, 32
    %v336 = vpop.permute.xlu0 %335
    %337 = vrot.lane.b32.xlu0 %v328, 32
    %v338 = vpop.permute.xlu0 %337
    %339 = vrot.lane.b32.xlu0 %v329, 32
    %v340 = vpop.permute.xlu0 %339
    %341 = vrot.lane.b32.xlu0 %v330, 32
    %v342 = vpop.permute.xlu0 %341
    %v347 = vadd.f32 %v307, %v336
    %v348 = vadd.f32 %v308, %v338
    %v349 = vadd.f32 %v309, %v340
    %v350 = vadd.f32 %v310, %v342
    %v351 = vtanh.pop %v347
    %v352 = vtanh.pop %v348
    %v353 = vtanh.pop %v349
    %v354 = vtanh.pop %v350
    %359 = vrot.lane.b32.xlu0 %v351, 32
    %v360 = vpop.permute.xlu0 %359
    %361 = vrot.lane.b32.xlu0 %v352, 32
    %v362 = vpop.permute.xlu0 %361
    %363 = vrot.lane.b32.xlu0 %v353, 32
    %v364 = vpop.permute.xlu0 %363
    %365 = vrot.lane.b32.xlu0 %v354, 32
    %v366 = vpop.permute.xlu0 %365
    %v371 = vmul.f32 %v296, %v360
    %v372 = vmul.f32 %v298, %v362
    %v373 = vmul.f32 %v300, %v364
    %v374 = vmul.f32 %v302, %v366
    %vm375 = vcmp.gt.s32.totalorder %v66, 0
    %v376 = vsel %vm375, 1, 0
    %377 = vset.pattern.permute.xlu0 0
    %378 = vperm.xlu0 %377, %v376
    %v379 = vpop.permute.xlu0 %378
    %vm380 = vcmp.eq.s32.totalorder %v379, 1
    %v385 = vrot.slane %v372, 7
    %vm386 = vcmask 1041409
    %v387 = vsel %vm386, %v385, %v371
    %v388 = vrot.slane %v373, 6
    %vm389 = vcmask 1042434
    %v390 = vsel %vm389, %v388, %v387
    %v391 = vrot.slane %v374, 5
    %vm392 = vcmask 1043459
    %v393 = vsel %vm392, %v391, %v390
    %394 = vrot.lane.b32.xlu0 %v393, 64
    %v395 = vpop.permute.xlu0 %394
    %v397 = vsel %vm380, %v395, 0.0
    %v402 = vrot.slane %v348, 7
    %v403 = vsel %vm386, %v402, %v347
    %v404 = vrot.slane %v349, 6
    %v405 = vsel %vm389, %v404, %v403
    %v406 = vrot.slane %v350, 5
    %v407 = vsel %vm392, %v406, %v405
    %408 = vrot.lane.b32.xlu0 %v407, 96
    %v409 = vpop.permute.xlu0 %408
    %v411 = vsel %vm380, %v409, 0.0
    %v414 = vunpack.c.l.s4 1966171168
    %v415 = vunpack.c.0.s8 %v414
    %v416 = vlaneseq
    %v417 = vshrl.u32 %v416, 7
    %v418 = vsub.s32 %v415, %v417
    %v419 = vrot.slane %v397, %v418
    %v420 = vcombine.high %v419, %v419
    %v422 = vunpack.c.l.s4 1966171168
    %v423 = vunpack.c.0.s8 %v422
    %v424 = vlaneseq
    %v425 = vshrl.u32 %v424, 7
    %v426 = vsub.s32 %v423, %v425
    %v427 = vrot.slane %v419, %v426
    %v429 = vunpack.c.l.s4 1966171168
    %v430 = vunpack.c.0.s8 %v429
    %v431 = vlaneseq
    %v432 = vshrl.u32 %v431, 7
    %v433 = vsub.s32 %v430, %v432
    %v434 = vrot.slane %v420, %v433
    %v435 = vcombine.high %v427, %v427
    %v436 = vcombine.high %v434, %v434
    %vm441 = vcmask 253952
    %442 = vst.msk [vmem:[#allocation8] sm:$0x1] %vm441, %v427
    %443 = vst.msk [vmem:[#allocation8 + $0x8] sm:$0x1] %vm441, %v434
    %444 = vst.msk [vmem:[#allocation8 + $0x10] sm:$0x1] %vm441, %v435
    %445 = vst.msk [vmem:[#allocation8 + $0x18] sm:$0x1] %vm441, %v436
    %v446 = vsel %vm193, %v397, 0
    %448 = vmatprep.subr.mxu0 0.0
    %449 = vmatpush1.msra.mxu0 0.0
    %450 = vmatprep.subr.mxu0 0.0
    %451 = vmatpush1.msra.mxu0 0.0
    %452 = vmatprep.subr.mxu0 0.0
    %453 = vmatpush1.msra.mxu0 0.0
    %454 = vmatprep.subr.mxu0 0.0
    %455 = vmatpush1.msra.mxu0 0.0
    %456 = vmatprep.subr.mxu0 0.0
    %457 = vmatpush1.msra.mxu0 0.0
    %458 = vmatprep.subr.mxu0 0.0
    %459 = vmatpush1.msra.mxu0 0.0
    %460 = vmatprep.subr.mxu0 0.0
    %461 = vmatpush1.msra.mxu0 0.0
    %462 = vmatprep.subr.mxu0 0.0
    %463 = vmatpush1.msra.mxu0 0.0
    %464 = vmatprep.subr.mxu0 0.0
    %465 = vmatpush1.msra.mxu0 0.0
    %466 = vmatprep.subr.mxu0 0.0
    %467 = vmatpush1.msra.mxu0 0.0
    %468 = vmatprep.subr.mxu0 0.0
    %469 = vmatpush1.msra.mxu0 0.0
    %470 = vmatprep.subr.mxu0 0.0
    %471 = vmatpush1.msra.mxu0 0.0
    %472 = vmatprep.subr.mxu0 0.0
    %473 = vmatpush1.msra.mxu0 %v191
    %474 = vmatprep.subr.mxu0 0.0
    %475 = vmatpush1.msra.mxu0 %v189
    %476 = vmatprep.subr.mxu0 0.0
    %477 = vmatpush1.msra.mxu0 %v187
    %478 = vmatprep.subr.mxu0 0.0
    %479 = vmatpush1.msra.mxu0 %v185
    %480 = vmatprep.subr.mxu0 0.0
    %481 = vmatpush2.msra.mxu0 0.0
    %482 = vmatprep.subr.mxu0 0.0
    %483 = vmatpush2.msra.mxu0 0.0
    %484 = vmatprep.subr.mxu0 0.0
    %485 = vmatpush2.msra.mxu0 0.0
    %486 = vmatprep.subr.mxu0 0.0
    %487 = vmatpush2.msra.mxu0 0.0
    %488 = vmatprep.subr.mxu0 0.0
    %489 = vmatpush2.msra.mxu0 0.0
    %490 = vmatprep.subr.mxu0 0.0
    %491 = vmatpush2.msra.mxu0 0.0
    %492 = vmatprep.subr.mxu0 0.0
    %493 = vmatpush2.msra.mxu0 0.0
    %494 = vmatprep.subr.mxu0 0.0
    %495 = vmatpush2.msra.mxu0 0.0
    %496 = vmatprep.subr.mxu0 0.0
    %497 = vmatpush2.msra.mxu0 0.0
    %498 = vmatprep.subr.mxu0 0.0
    %499 = vmatpush2.msra.mxu0 0.0
    %500 = vmatprep.subr.mxu0 0.0
    %501 = vmatpush2.msra.mxu0 0.0
    %502 = vmatprep.subr.mxu0 0.0
    %503 = vmatpush2.msra.mxu0 0.0
    %504 = vmatprep.subr.mxu0 0.0
    %505 = vmatpush2.msra.mxu0 0.0
    %506 = vmatprep.subr.mxu0 0.0
    %507 = vmatpush2.msra.mxu0 0.0
    %508 = vmatprep.subr.mxu0 0.0
    %509 = vmatpush2.msra.mxu0 0.0
    %510 = vmatprep.subr.mxu0 0.0
    %511 = vmatpush2.msra.mxu0 0.0
    %512 = vmatprep.mubr.f32.mxu0 0.0
    %513 = vmatmul.mubr.f32.gmra.mxu0 %v446
    %v514 = vpop.f32.mrf.mxu0
    %v515 = vadd.f32 0.0, %v514
    %v516 = vpop.f32.mrf.mxu0
    %517 = vdwg.mxu0
    %v519 = vrot.slane %v515, 7
    %v520 = vrot.slane %v515, 1
    %v521 = vrot.slane %v515, 2
    %v526 = vadd.f32 %v163, %v519
    %v527 = vadd.f32 %v169, %v515
    %v528 = vadd.f32 %v175, %v520
    %v529 = vadd.f32 %v181, %v521
    %v530 = vxor.u32 %v526, 2147483648
    %v531 = vxor.u32 %v527, 2147483648
    %v532 = vxor.u32 %v528, 2147483648
    %v533 = vxor.u32 %v529, 2147483648
    %v534 = vmul.f32 %v530, 1.442695
    %v535 = vpow.pop %v534
    %v536 = vmul.f32 %v531, 1.442695
    %v537 = vpow.pop %v536
    %v538 = vmul.f32 %v532, 1.442695
    %v539 = vpow.pop %v538
    %v540 = vmul.f32 %v533, 1.442695
    %v541 = vpow.pop %v540
    %v542 = vadd.f32 %v535, 1.0
    %v543 = vadd.f32 %v537, 1.0
    %v544 = vadd.f32 %v539, 1.0
    %v545 = vadd.f32 %v541, 1.0
    %v546 = vrcp.pop %v542
    %v547 = vmul.f32 1.0, %v546
    %v548 = vrcp.pop %v543
    %v549 = vmul.f32 1.0, %v548
    %v550 = vrcp.pop %v544
    %v551 = vmul.f32 1.0, %v550
    %v552 = vrcp.pop %v545
    %v553 = vmul.f32 1.0, %v552
    %v554 = vtanh.pop %v526
    %v555 = vtanh.pop %v527
    %v556 = vtanh.pop %v528
    %v557 = vtanh.pop %v529
    %v559 = vrot.slane %v411, 7
    %v560 = vrot.slane %v411, 1
    %v561 = vrot.slane %v411, 2
    %562 = vrot.lane.b32.xlu0 %v559, 32
    %v563 = vpop.permute.xlu0 %562
    %564 = vrot.lane.b32.xlu0 %v411, 32
    %v565 = vpop.permute.xlu0 %564
    %566 = vrot.lane.b32.xlu0 %v560, 32
    %v567 = vpop.permute.xlu0 %566
    %568 = vrot.lane.b32.xlu0 %v561, 32
    %v569 = vpop.permute.xlu0 %568
    %v574 = vmul.f32 %v547, %v563
    %v575 = vmul.f32 %v549, %v565
    %v576 = vmul.f32 %v551, %v567
    %v577 = vmul.f32 %v553, %v569
    %582 = vrot.lane.b32.xlu0 %v554, 32
    %v583 = vpop.permute.xlu0 %582
    %584 = vrot.lane.b32.xlu0 %v555, 32
    %v585 = vpop.permute.xlu0 %584
    %586 = vrot.lane.b32.xlu0 %v556, 32
    %v587 = vpop.permute.xlu0 %586
    %588 = vrot.lane.b32.xlu0 %v557, 32
    %v589 = vpop.permute.xlu0 %588
    %v594 = vmul.f32 %v547, %v583
    %v595 = vmul.f32 %v549, %v585
    %v596 = vmul.f32 %v551, %v587
    %v597 = vmul.f32 %v553, %v589
    %602 = vrot.lane.b32.xlu0 %v594, 32
    %v603 = vpop.permute.xlu0 %602
    %604 = vrot.lane.b32.xlu0 %v595, 32
    %v605 = vpop.permute.xlu0 %604
    %606 = vrot.lane.b32.xlu0 %v596, 32
    %v607 = vpop.permute.xlu0 %606
    %608 = vrot.lane.b32.xlu0 %v597, 32
    %v609 = vpop.permute.xlu0 %608
    %v614 = vadd.f32 %v574, %v603
    %v615 = vadd.f32 %v575, %v605
    %v616 = vadd.f32 %v576, %v607
    %v617 = vadd.f32 %v577, %v609
    %v618 = vtanh.pop %v614
    %v619 = vtanh.pop %v615
    %v620 = vtanh.pop %v616
    %v621 = vtanh.pop %v617
    %626 = vrot.lane.b32.xlu0 %v618, 32
    %v627 = vpop.permute.xlu0 %626
    %628 = vrot.lane.b32.xlu0 %v619, 32
    %v629 = vpop.permute.xlu0 %628
    %630 = vrot.lane.b32.xlu0 %v620, 32
    %v631 = vpop.permute.xlu0 %630
    %632 = vrot.lane.b32.xlu0 %v621, 32
    %v633 = vpop.permute.xlu0 %632
    %v638 = vmul.f32 %v547, %v627
    %v639 = vmul.f32 %v549, %v629
    %v640 = vmul.f32 %v551, %v631
    %v641 = vmul.f32 %v553, %v633
    %vm642 = vcmp.gt.s32.totalorder %v66, 1
    %v643 = vsel %vm642, 1, 0
    %644 = vset.pattern.permute.xlu0 0
    %645 = vperm.xlu0 %644, %v643
    %v646 = vpop.permute.xlu0 %645
    %vm647 = vcmp.eq.s32.totalorder %v646, 1
    %v652 = vrot.slane %v638, 1
    %v653 = vsel %vm386, %v639, %v652
    %v654 = vrot.slane %v640, 7
    %v655 = vsel %vm389, %v654, %v653
    %v656 = vrot.slane %v641, 6
    %v657 = vsel %vm392, %v656, %v655
    %658 = vrot.lane.b32.xlu0 %v657, 64
    %v659 = vpop.permute.xlu0 %658
    %v661 = vsel %vm647, %v659, %v397
    %v666 = vrot.slane %v614, 1
    %v667 = vsel %vm386, %v615, %v666
    %v668 = vrot.slane %v616, 7
    %v669 = vsel %vm389, %v668, %v667
    %v670 = vrot.slane %v617, 6
    %v671 = vsel %vm392, %v670, %v669
    %672 = vrot.lane.b32.xlu0 %v671, 96
    %v673 = vpop.permute.xlu0 %672
    %v675 = vsel %vm647, %v673, %v411
    %v676 = vsel %vm647, %v659, 0.0
    %v679 = vunpack.c.l.s4 1966171168
    %v680 = vunpack.c.0.s8 %v679
    %v681 = vlaneseq
    %v682 = vshrl.u32 %v681, 7
    %v683 = vsub.s32 %v680, %v682
    %v684 = vrot.slane %v676, %v683
    %v685 = vcombine.high %v684, %v684
    %v687 = vunpack.c.l.s4 1966171168
    %v688 = vunpack.c.0.s8 %v687
    %v689 = vlaneseq
    %v690 = vshrl.u32 %v689, 7
    %v691 = vsub.s32 %v688, %v690
    %v692 = vrot.slane %v684, %v691
    %v694 = vunpack.c.l.s4 1966171168
    %v695 = vunpack.c.0.s8 %v694
    %v696 = vlaneseq
    %v697 = vshrl.u32 %v696, 7
    %v698 = vsub.s32 %v695, %v697
    %v699 = vrot.slane %v685, %v698
    %v700 = vcombine.high %v692, %v692
    %v701 = vcombine.high %v699, %v699
    %706 = vst.msk [vmem:[#allocation8 + $0x1] sm:$0x1] %vm441, %v692
    %707 = vst.msk [vmem:[#allocation8 + $0x9] sm:$0x1] %vm441, %v699
    %708 = vst.msk [vmem:[#allocation8 + $0x11] sm:$0x1] %vm441, %v700
    %709 = vst.msk [vmem:[#allocation8 + $0x19] sm:$0x1] %vm441, %v701
    %v711 = vsel %vm193, %v661, 0
    %713 = vmatprep.subr.mxu0 0.0
    %714 = vmatpush1.msra.mxu0 0.0
    %715 = vmatprep.subr.mxu0 0.0
    %716 = vmatpush1.msra.mxu0 0.0
    %717 = vmatprep.subr.mxu0 0.0
    %718 = vmatpush1.msra.mxu0 0.0
    %719 = vmatprep.subr.mxu0 0.0
    %720 = vmatpush1.msra.mxu0 0.0
    %721 = vmatprep.subr.mxu0 0.0
    %722 = vmatpush1.msra.mxu0 0.0
    %723 = vmatprep.subr.mxu0 0.0
    %724 = vmatpush1.msra.mxu0 0.0
    %725 = vmatprep.subr.mxu0 0.0
    %726 = vmatpush1.msra.mxu0 0.0
    %727 = vmatprep.subr.mxu0 0.0
    %728 = vmatpush1.msra.mxu0 0.0
    %729 = vmatprep.subr.mxu0 0.0
    %730 = vmatpush1.msra.mxu0 0.0
    %731 = vmatprep.subr.mxu0 0.0
    %732 = vmatpush1.msra.mxu0 0.0
    %733 = vmatprep.subr.mxu0 0.0
    %734 = vmatpush1.msra.mxu0 0.0
    %735 = vmatprep.subr.mxu0 0.0
    %736 = vmatpush1.msra.mxu0 0.0
    %737 = vmatprep.subr.mxu0 0.0
    %738 = vmatpush1.msra.mxu0 %v191
    %739 = vmatprep.subr.mxu0 0.0
    %740 = vmatpush1.msra.mxu0 %v189
    %741 = vmatprep.subr.mxu0 0.0
    %742 = vmatpush1.msra.mxu0 %v187
    %743 = vmatprep.subr.mxu0 0.0
    %744 = vmatpush1.msra.mxu0 %v185
    %745 = vmatprep.subr.mxu0 0.0
    %746 = vmatpush2.msra.mxu0 0.0
    %747 = vmatprep.subr.mxu0 0.0
    %748 = vmatpush2.msra.mxu0 0.0
    %749 = vmatprep.subr.mxu0 0.0
    %750 = vmatpush2.msra.mxu0 0.0
    %751 = vmatprep.subr.mxu0 0.0
    %752 = vmatpush2.msra.mxu0 0.0
    %753 = vmatprep.subr.mxu0 0.0
    %754 = vmatpush2.msra.mxu0 0.0
    %755 = vmatprep.subr.mxu0 0.0
    %756 = vmatpush2.msra.mxu0 0.0
    %757 = vmatprep.subr.mxu0 0.0
    %758 = vmatpush2.msra.mxu0 0.0
    %759 = vmatprep.subr.mxu0 0.0
    %760 = vmatpush2.msra.mxu0 0.0
    %761 = vmatprep.subr.mxu0 0.0
    %762 = vmatpush2.msra.mxu0 0.0
    %763 = vmatprep.subr.mxu0 0.0
    %764 = vmatpush2.msra.mxu0 0.0
    %765 = vmatprep.subr.mxu0 0.0
    %766 = vmatpush2.msra.mxu0 0.0
    %767 = vmatprep.subr.mxu0 0.0
    %768 = vmatpush2.msra.mxu0 0.0
    %769 = vmatprep.subr.mxu0 0.0
    %770 = vmatpush2.msra.mxu0 0.0
    %771 = vmatprep.subr.mxu0 0.0
    %772 = vmatpush2.msra.mxu0 0.0
    %773 = vmatprep.subr.mxu0 0.0
    %774 = vmatpush2.msra.mxu0 0.0
    %775 = vmatprep.subr.mxu0 0.0
    %776 = vmatpush2.msra.mxu0 0.0
    %777 = vmatprep.mubr.f32.mxu0 0.0
    %778 = vmatmul.mubr.f32.gmra.mxu0 %v711
    %v779 = vpop.f32.mrf.mxu0
    %v780 = vadd.f32 0.0, %v779
    %v781 = vpop.f32.mrf.mxu0
    %782 = vdwg.mxu0
    %v784 = vrot.slane %v780, 6
    %v785 = vrot.slane %v780, 7
    %v786 = vrot.slane %v780, 1
    %v791 = vadd.f32 %v163, %v784
    %v792 = vadd.f32 %v169, %v785
    %v793 = vadd.f32 %v175, %v780
    %v794 = vadd.f32 %v181, %v786
    %v795 = vxor.u32 %v791, 2147483648
    %v796 = vxor.u32 %v792, 2147483648
    %v797 = vxor.u32 %v793, 2147483648
    %v798 = vxor.u32 %v794, 2147483648
    %v799 = vmul.f32 %v795, 1.442695
    %v800 = vpow.pop %v799
    %v801 = vmul.f32 %v796, 1.442695
    %v802 = vpow.pop %v801
    %v803 = vmul.f32 %v797, 1.442695
    %v804 = vpow.pop %v803
    %v805 = vmul.f32 %v798, 1.442695
    %v806 = vpow.pop %v805
    %v807 = vadd.f32 %v800, 1.0
    %v808 = vadd.f32 %v802, 1.0
    %v809 = vadd.f32 %v804, 1.0
    %v810 = vadd.f32 %v806, 1.0
    %v811 = vrcp.pop %v807
    %v812 = vmul.f32 1.0, %v811
    %v813 = vrcp.pop %v808
    %v814 = vmul.f32 1.0, %v813
    %v815 = vrcp.pop %v809
    %v816 = vmul.f32 1.0, %v815
    %v817 = vrcp.pop %v810
    %v818 = vmul.f32 1.0, %v817
    %v819 = vtanh.pop %v791
    %v820 = vtanh.pop %v792
    %v821 = vtanh.pop %v793
    %v822 = vtanh.pop %v794
    %v824 = vrot.slane %v675, 6
    %v825 = vrot.slane %v675, 7
    %v826 = vrot.slane %v675, 1
    %827 = vrot.lane.b32.xlu0 %v824, 32
    %v828 = vpop.permute.xlu0 %827
    %829 = vrot.lane.b32.xlu0 %v825, 32
    %v830 = vpop.permute.xlu0 %829
    %831 = vrot.lane.b32.xlu0 %v675, 32
    %v832 = vpop.permute.xlu0 %831
    %833 = vrot.lane.b32.xlu0 %v826, 32
    %v834 = vpop.permute.xlu0 %833
    %v839 = vmul.f32 %v812, %v828
    %v840 = vmul.f32 %v814, %v830
    %v841 = vmul.f32 %v816, %v832
    %v842 = vmul.f32 %v818, %v834
    %847 = vrot.lane.b32.xlu0 %v819, 32
    %v848 = vpop.permute.xlu0 %847
    %849 = vrot.lane.b32.xlu0 %v820, 32
    %v850 = vpop.permute.xlu0 %849
    %851 = vrot.lane.b32.xlu0 %v821, 32
    %v852 = vpop.permute.xlu0 %851
    %853 = vrot.lane.b32.xlu0 %v822, 32
    %v854 = vpop.permute.xlu0 %853
    %v859 = vmul.f32 %v812, %v848
    %v860 = vmul.f32 %v814, %v850
    %v861 = vmul.f32 %v816, %v852
    %v862 = vmul.f32 %v818, %v854
    %867 = vrot.lane.b32.xlu0 %v859, 32
    %v868 = vpop.permute.xlu0 %867
    %869 = vrot.lane.b32.xlu0 %v860, 32
    %v870 = vpop.permute.xlu0 %869
    %871 = vrot.lane.b32.xlu0 %v861, 32
    %v872 = vpop.permute.xlu0 %871
    %873 = vrot.lane.b32.xlu0 %v862, 32
    %v874 = vpop.permute.xlu0 %873
    %v879 = vadd.f32 %v839, %v868
    %v880 = vadd.f32 %v840, %v870
    %v881 = vadd.f32 %v841, %v872
    %v882 = vadd.f32 %v842, %v874
    %v883 = vtanh.pop %v879
    %v884 = vtanh.pop %v880
    %v885 = vtanh.pop %v881
    %v886 = vtanh.pop %v882
    %891 = vrot.lane.b32.xlu0 %v883, 32
    %v892 = vpop.permute.xlu0 %891
    %893 = vrot.lane.b32.xlu0 %v884, 32
    %v894 = vpop.permute.xlu0 %893
    %895 = vrot.lane.b32.xlu0 %v885, 32
    %v896 = vpop.permute.xlu0 %895
    %897 = vrot.lane.b32.xlu0 %v886, 32
    %v898 = vpop.permute.xlu0 %897
    %v903 = vmul.f32 %v812, %v892
    %v904 = vmul.f32 %v814, %v894
    %v905 = vmul.f32 %v816, %v896
    %v906 = vmul.f32 %v818, %v898
    %vm907 = vcmp.gt.s32.totalorder %v66, 2
    %v908 = vsel %vm907, 1, 0
    %909 = vset.pattern.permute.xlu0 0
    %910 = vperm.xlu0 %909, %v908
    %v911 = vpop.permute.xlu0 %910
    %vm912 = vcmp.eq.s32.totalorder %v911, 1
    %v917 = vrot.slane %v903, 2
    %v918 = vrot.slane %v904, 1
    %v919 = vsel %vm386, %v918, %v917
    %v920 = vsel %vm389, %v905, %v919
    %v921 = vrot.slane %v906, 7
    %v922 = vsel %vm392, %v921, %v920
    %923 = vrot.lane.b32.xlu0 %v922, 64
    %v924 = vpop.permute.xlu0 %923
    %v926 = vsel %vm912, %v924, %v661
    %v931 = vrot.slane %v879, 2
    %v932 = vrot.slane %v880, 1
    %v933 = vsel %vm386, %v932, %v931
    %v934 = vsel %vm389, %v881, %v933
    %v935 = vrot.slane %v882, 7
    %v936 = vsel %vm392, %v935, %v934
    %937 = vrot.lane.b32.xlu0 %v936, 96
    %v938 = vpop.permute.xlu0 %937
    %v940 = vsel %vm912, %v938, %v675
    %v941 = vsel %vm912, %v924, 0.0
    %v944 = vunpack.c.l.s4 1966171168
    %v945 = vunpack.c.0.s8 %v944
    %v946 = vlaneseq
    %v947 = vshrl.u32 %v946, 7
    %v948 = vsub.s32 %v945, %v947
    %v949 = vrot.slane %v941, %v948
    %v950 = vcombine.high %v949, %v949
    %v952 = vunpack.c.l.s4 1966171168
    %v953 = vunpack.c.0.s8 %v952
    %v954 = vlaneseq
    %v955 = vshrl.u32 %v954, 7
    %v956 = vsub.s32 %v953, %v955
    %v957 = vrot.slane %v949, %v956
    %v959 = vunpack.c.l.s4 1966171168
    %v960 = vunpack.c.0.s8 %v959
    %v961 = vlaneseq
    %v962 = vshrl.u32 %v961, 7
    %v963 = vsub.s32 %v960, %v962
    %v964 = vrot.slane %v950, %v963
    %v965 = vcombine.high %v957, %v957
    %v966 = vcombine.high %v964, %v964
    %971 = vst.msk [vmem:[#allocation8 + $0x2] sm:$0x1] %vm441, %v957
    %972 = vst.msk [vmem:[#allocation8 + $0xa] sm:$0x1] %vm441, %v964
    %973 = vst.msk [vmem:[#allocation8 + $0x12] sm:$0x1] %vm441, %v965
    %974 = vst.msk [vmem:[#allocation8 + $0x1a] sm:$0x1] %vm441, %v966
    %v976 = vsel %vm193, %v926, 0
    %978 = vmatprep.subr.mxu0 0.0
    %979 = vmatpush1.msra.mxu0 0.0
    %980 = vmatprep.subr.mxu0 0.0
    %981 = vmatpush1.msra.mxu0 0.0
    %982 = vmatprep.subr.mxu0 0.0
    %983 = vmatpush1.msra.mxu0 0.0
    %984 = vmatprep.subr.mxu0 0.0
    %985 = vmatpush1.msra.mxu0 0.0
    %986 = vmatprep.subr.mxu0 0.0
    %987 = vmatpush1.msra.mxu0 0.0
    %988 = vmatprep.subr.mxu0 0.0
    %989 = vmatpush1.msra.mxu0 0.0
    %990 = vmatprep.subr.mxu0 0.0
    %991 = vmatpush1.msra.mxu0 0.0
    %992 = vmatprep.subr.mxu0 0.0
    %993 = vmatpush1.msra.mxu0 0.0
    %994 = vmatprep.subr.mxu0 0.0
    %995 = vmatpush1.msra.mxu0 0.0
    %996 = vmatprep.subr.mxu0 0.0
    %997 = vmatpush1.msra.mxu0 0.0
    %998 = vmatprep.subr.mxu0 0.0
    %999 = vmatpush1.msra.mxu0 0.0
    %1000 = vmatprep.subr.mxu0 0.0
    %1001 = vmatpush1.msra.mxu0 0.0
    %1002 = vmatprep.subr.mxu0 0.0
    %1003 = vmatpush1.msra.mxu0 %v191
    %1004 = vmatprep.subr.mxu0 0.0
    %1005 = vmatpush1.msra.mxu0 %v189
    %1006 = vmatprep.subr.mxu0 0.0
    %1007 = vmatpush1.msra.mxu0 %v187
    %1008 = vmatprep.subr.mxu0 0.0
    %1009 = vmatpush1.msra.mxu0 %v185
    %1010 = vmatprep.subr.mxu0 0.0
    %1011 = vmatpush2.msra.mxu0 0.0
    %1012 = vmatprep.subr.mxu0 0.0
    %1013 = vmatpush2.msra.mxu0 0.0
    %1014 = vmatprep.subr.mxu0 0.0
    %1015 = vmatpush2.msra.mxu0 0.0
    %1016 = vmatprep.subr.mxu0 0.0
    %1017 = vmatpush2.msra.mxu0 0.0
    %1018 = vmatprep.subr.mxu0 0.0
    %1019 = vmatpush2.msra.mxu0 0.0
    %1020 = vmatprep.subr.mxu0 0.0
    %1021 = vmatpush2.msra.mxu0 0.0
    %1022 = vmatprep.subr.mxu0 0.0
    %1023 = vmatpush2.msra.mxu0 0.0
    %1024 = vmatprep.subr.mxu0 0.0
    %1025 = vmatpush2.msra.mxu0 0.0
    %1026 = vmatprep.subr.mxu0 0.0
    %1027 = vmatpush2.msra.mxu0 0.0
    %1028 = vmatprep.subr.mxu0 0.0
    %1029 = vmatpush2.msra.mxu0 0.0
    %1030 = vmatprep.subr.mxu0 0.0
    %1031 = vmatpush2.msra.mxu0 0.0
    %1032 = vmatprep.subr.mxu0 0.0
    %1033 = vmatpush2.msra.mxu0 0.0
    %1034 = vmatprep.subr.mxu0 0.0
    %1035 = vmatpush2.msra.mxu0 0.0
    %1036 = vmatprep.subr.mxu0 0.0
    %1037 = vmatpush2.msra.mxu0 0.0
    %1038 = vmatprep.subr.mxu0 0.0
    %1039 = vmatpush2.msra.mxu0 0.0
    %1040 = vmatprep.subr.mxu0 0.0
    %1041 = vmatpush2.msra.mxu0 0.0
    %1042 = vmatprep.mubr.f32.mxu0 0.0
    %1043 = vmatmul.mubr.f32.gmra.mxu0 %v976
    %v1044 = vpop.f32.mrf.mxu0
    %v1045 = vadd.f32 0.0, %v1044
    %v1046 = vpop.f32.mrf.mxu0
    %1047 = vdwg.mxu0
    %v1049 = vrot.slane %v1045, 5
    %v1050 = vrot.slane %v1045, 6
    %v1051 = vrot.slane %v1045, 7
    %v1056 = vadd.f32 %v163, %v1049
    %v1057 = vadd.f32 %v169, %v1050
    %v1058 = vadd.f32 %v175, %v1051
    %v1059 = vadd.f32 %v181, %v1045
    %v1060 = vxor.u32 %v1056, 2147483648
    %v1061 = vxor.u32 %v1057, 2147483648
    %v1062 = vxor.u32 %v1058, 2147483648
    %v1063 = vxor.u32 %v1059, 2147483648
    %v1064 = vmul.f32 %v1060, 1.442695
    %v1065 = vpow.pop %v1064
    %v1066 = vmul.f32 %v1061, 1.442695
    %v1067 = vpow.pop %v1066
    %v1068 = vmul.f32 %v1062, 1.442695
    %v1069 = vpow.pop %v1068
    %v1070 = vmul.f32 %v1063, 1.442695
    %v1071 = vpow.pop %v1070
    %v1072 = vadd.f32 %v1065, 1.0
    %v1073 = vadd.f32 %v1067, 1.0
    %v1074 = vadd.f32 %v1069, 1.0
    %v1075 = vadd.f32 %v1071, 1.0
    %v1076 = vrcp.pop %v1072
    %v1077 = vmul.f32 1.0, %v1076
    %v1078 = vrcp.pop %v1073
    %v1079 = vmul.f32 1.0, %v1078
    %v1080 = vrcp.pop %v1074
    %v1081 = vmul.f32 1.0, %v1080
    %v1082 = vrcp.pop %v1075
    %v1083 = vmul.f32 1.0, %v1082
    %v1084 = vtanh.pop %v1056
    %v1085 = vtanh.pop %v1057
    %v1086 = vtanh.pop %v1058
    %v1087 = vtanh.pop %v1059
    %v1089 = vrot.slane %v940, 5
    %v1090 = vrot.slane %v940, 6
    %v1091 = vrot.slane %v940, 7
    %1092 = vrot.lane.b32.xlu0 %v1089, 32
    %v1093 = vpop.permute.xlu0 %1092
    %1094 = vrot.lane.b32.xlu0 %v1090, 32
    %v1095 = vpop.permute.xlu0 %1094
    %1096 = vrot.lane.b32.xlu0 %v1091, 32
    %v1097 = vpop.permute.xlu0 %1096
    %1098 = vrot.lane.b32.xlu0 %v940, 32
    %v1099 = vpop.permute.xlu0 %1098
    %v1104 = vmul.f32 %v1077, %v1093
    %v1105 = vmul.f32 %v1079, %v1095
    %v1106 = vmul.f32 %v1081, %v1097
    %v1107 = vmul.f32 %v1083, %v1099
    %1112 = vrot.lane.b32.xlu0 %v1084, 32
    %v1113 = vpop.permute.xlu0 %1112
    %1114 = vrot.lane.b32.xlu0 %v1085, 32
    %v1115 = vpop.permute.xlu0 %1114
    %1116 = vrot.lane.b32.xlu0 %v1086, 32
    %v1117 = vpop.permute.xlu0 %1116
    %1118 = vrot.lane.b32.xlu0 %v1087, 32
    %v1119 = vpop.permute.xlu0 %1118
    %v1124 = vmul.f32 %v1077, %v1113
    %v1125 = vmul.f32 %v1079, %v1115
    %v1126 = vmul.f32 %v1081, %v1117
    %v1127 = vmul.f32 %v1083, %v1119
    %1132 = vrot.lane.b32.xlu0 %v1124, 32
    %v1133 = vpop.permute.xlu0 %1132
    %1134 = vrot.lane.b32.xlu0 %v1125, 32
    %v1135 = vpop.permute.xlu0 %1134
    %1136 = vrot.lane.b32.xlu0 %v1126, 32
    %v1137 = vpop.permute.xlu0 %1136
    %1138 = vrot.lane.b32.xlu0 %v1127, 32
    %v1139 = vpop.permute.xlu0 %1138
    %v1144 = vadd.f32 %v1104, %v1133
    %v1145 = vadd.f32 %v1105, %v1135
    %v1146 = vadd.f32 %v1106, %v1137
    %v1147 = vadd.f32 %v1107, %v1139
    %v1148 = vtanh.pop %v1144
    %v1149 = vtanh.pop %v1145
    %v1150 = vtanh.pop %v1146
    %v1151 = vtanh.pop %v1147
    %1156 = vrot.lane.b32.xlu0 %v1148, 32
    %v1157 = vpop.permute.xlu0 %1156
    %1158 = vrot.lane.b32.xlu0 %v1149, 32
    %v1159 = vpop.permute.xlu0 %1158
    %1160 = vrot.lane.b32.xlu0 %v1150, 32
    %v1161 = vpop.permute.xlu0 %1160
    %1162 = vrot.lane.b32.xlu0 %v1151, 32
    %v1163 = vpop.permute.xlu0 %1162
    %v1168 = vmul.f32 %v1077, %v1157
    %v1169 = vmul.f32 %v1079, %v1159
    %v1170 = vmul.f32 %v1081, %v1161
    %v1171 = vmul.f32 %v1083, %v1163
    %vm1172 = vcmp.gt.s32.totalorder %v66, 3
    %v1173 = vsel %vm1172, 1, 0
    %1174 = vset.pattern.permute.xlu0 0
    %1175 = vperm.xlu0 %1174, %v1173
    %v1176 = vpop.permute.xlu0 %1175
    %vm1177 = vcmp.eq.s32.totalorder %v1176, 1
    %v1182 = vrot.slane %v1168, 3
    %v1183 = vrot.slane %v1169, 2
    %v1184 = vsel %vm386, %v1183, %v1182
    %v1185 = vrot.slane %v1170, 1
    %v1186 = vsel %vm389, %v1185, %v1184
    %v1187 = vsel %vm392, %v1171, %v1186
    %1188 = vrot.lane.b32.xlu0 %v1187, 64
    %v1189 = vpop.permute.xlu0 %1188
    %v1191 = vsel %vm1177, %v1189, %v926
    %v1196 = vrot.slane %v1144, 3
    %v1197 = vrot.slane %v1145, 2
    %v1198 = vsel %vm386, %v1197, %v1196
    %v1199 = vrot.slane %v1146, 1
    %v1200 = vsel %vm389, %v1199, %v1198
    %v1201 = vsel %vm392, %v1147, %v1200
    %1202 = vrot.lane.b32.xlu0 %v1201, 96
    %v1203 = vpop.permute.xlu0 %1202
    %v1205 = vsel %vm1177, %v1203, %v940
    %v1206 = vsel %vm1177, %v1189, 0.0
    %v1209 = vunpack.c.l.s4 1966171168
    %v1210 = vunpack.c.0.s8 %v1209
    %v1211 = vlaneseq
    %v1212 = vshrl.u32 %v1211, 7
    %v1213 = vsub.s32 %v1210, %v1212
    %v1214 = vrot.slane %v1206, %v1213
    %v1215 = vcombine.high %v1214, %v1214
    %v1217 = vunpack.c.l.s4 1966171168
    %v1218 = vunpack.c.0.s8 %v1217
    %v1219 = vlaneseq
    %v1220 = vshrl.u32 %v1219, 7
    %v1221 = vsub.s32 %v1218, %v1220
    %v1222 = vrot.slane %v1214, %v1221
    %v1224 = vunpack.c.l.s4 1966171168
    %v1225 = vunpack.c.0.s8 %v1224
    %v1226 = vlaneseq
    %v1227 = vshrl.u32 %v1226, 7
    %v1228 = vsub.s32 %v1225, %v1227
    %v1229 = vrot.slane %v1215, %v1228
    %v1230 = vcombine.high %v1222, %v1222
    %v1231 = vcombine.high %v1229, %v1229
    %1236 = vst.msk [vmem:[#allocation8 + $0x3] sm:$0x1] %vm441, %v1222
    %1237 = vst.msk [vmem:[#allocation8 + $0xb] sm:$0x1] %vm441, %v1229
    %1238 = vst.msk [vmem:[#allocation8 + $0x13] sm:$0x1] %vm441, %v1230
    %1239 = vst.msk [vmem:[#allocation8 + $0x1b] sm:$0x1] %vm441, %v1231
    %v1241 = vsel %vm193, %v1191, 0
    %1243 = vmatprep.subr.mxu0 0.0
    %1244 = vmatpush1.msra.mxu0 0.0
    %1245 = vmatprep.subr.mxu0 0.0
    %1246 = vmatpush1.msra.mxu0 0.0
    %1247 = vmatprep.subr.mxu0 0.0
    %1248 = vmatpush1.msra.mxu0 0.0
    %1249 = vmatprep.subr.mxu0 0.0
    %1250 = vmatpush1.msra.mxu0 0.0
    %1251 = vmatprep.subr.mxu0 0.0
    %1252 = vmatpush1.msra.mxu0 0.0
    %1253 = vmatprep.subr.mxu0 0.0
    %1254 = vmatpush1.msra.mxu0 0.0
    %1255 = vmatprep.subr.mxu0 0.0
    %1256 = vmatpush1.msra.mxu0 0.0
    %1257 = vmatprep.subr.mxu0 0.0
    %1258 = vmatpush1.msra.mxu0 0.0
    %1259 = vmatprep.subr.mxu0 0.0
    %1260 = vmatpush1.msra.mxu0 0.0
    %1261 = vmatprep.subr.mxu0 0.0
    %1262 = vmatpush1.msra.mxu0 0.0
    %1263 = vmatprep.subr.mxu0 0.0
    %1264 = vmatpush1.msra.mxu0 0.0
    %1265 = vmatprep.subr.mxu0 0.0
    %1266 = vmatpush1.msra.mxu0 0.0
    %1267 = vmatprep.subr.mxu0 0.0
    %1268 = vmatpush1.msra.mxu0 %v191
    %1269 = vmatprep.subr.mxu0 0.0
    %1270 = vmatpush1.msra.mxu0 %v189
    %1271 = vmatprep.subr.mxu0 0.0
    %1272 = vmatpush1.msra.mxu0 %v187
    %1273 = vmatprep.subr.mxu0 0.0
    %1274 = vmatpush1.msra.mxu0 %v185
    %1275 = vmatprep.subr.mxu0 0.0
    %1276 = vmatpush2.msra.mxu0 0.0
    %1277 = vmatprep.subr.mxu0 0.0
    %1278 = vmatpush2.msra.mxu0 0.0
    %1279 = vmatprep.subr.mxu0 0.0
    %1280 = vmatpush2.msra.mxu0 0.0
    %1281 = vmatprep.subr.mxu0 0.0
    %1282 = vmatpush2.msra.mxu0 0.0
    %1283 = vmatprep.subr.mxu0 0.0
    %1284 = vmatpush2.msra.mxu0 0.0
    %1285 = vmatprep.subr.mxu0 0.0
    %1286 = vmatpush2.msra.mxu0 0.0
    %1287 = vmatprep.subr.mxu0 0.0
    %1288 = vmatpush2.msra.mxu0 0.0
    %1289 = vmatprep.subr.mxu0 0.0
    %1290 = vmatpush2.msra.mxu0 0.0
    %1291 = vmatprep.subr.mxu0 0.0
    %1292 = vmatpush2.msra.mxu0 0.0
    %1293 = vmatprep.subr.mxu0 0.0
    %1294 = vmatpush2.msra.mxu0 0.0
    %1295 = vmatprep.subr.mxu0 0.0
    %1296 = vmatpush2.msra.mxu0 0.0
    %1297 = vmatprep.subr.mxu0 0.0
    %1298 = vmatpush2.msra.mxu0 0.0
    %1299 = vmatprep.subr.mxu0 0.0
    %1300 = vmatpush2.msra.mxu0 0.0
    %1301 = vmatprep.subr.mxu0 0.0
    %1302 = vmatpush2.msra.mxu0 0.0
    %1303 = vmatprep.subr.mxu0 0.0
    %1304 = vmatpush2.msra.mxu0 0.0
    %1305 = vmatprep.subr.mxu0 0.0
    %1306 = vmatpush2.msra.mxu0 0.0
    %1307 = vmatprep.mubr.f32.mxu0 0.0
    %1308 = vmatmul.mubr.f32.gmra.mxu0 %v1241
    %v1309 = vpop.f32.mrf.mxu0
    %v1310 = vadd.f32 0.0, %v1309
    %v1311 = vpop.f32.mrf.mxu0
    %1312 = vdwg.mxu0
    %v1314 = vrot.slane %v1310, 4
    %v1315 = vrot.slane %v1310, 5
    %v1316 = vrot.slane %v1310, 6
    %v1317 = vrot.slane %v1310, 7
    %v1322 = vadd.f32 %v163, %v1314
    %v1323 = vadd.f32 %v169, %v1315
    %v1324 = vadd.f32 %v175, %v1316
    %v1325 = vadd.f32 %v181, %v1317
    %v1326 = vxor.u32 %v1322, 2147483648
    %v1327 = vxor.u32 %v1323, 2147483648
    %v1328 = vxor.u32 %v1324, 2147483648
    %v1329 = vxor.u32 %v1325, 2147483648
    %v1330 = vmul.f32 %v1326, 1.442695
    %v1331 = vpow.pop %v1330
    %v1332 = vmul.f32 %v1327, 1.442695
    %v1333 = vpow.pop %v1332
    %v1334 = vmul.f32 %v1328, 1.442695
    %v1335 = vpow.pop %v1334
    %v1336 = vmul.f32 %v1329, 1.442695
    %v1337 = vpow.pop %v1336
    %v1338 = vadd.f32 %v1331, 1.0
    %v1339 = vadd.f32 %v1333, 1.0
    %v1340 = vadd.f32 %v1335, 1.0
    %v1341 = vadd.f32 %v1337, 1.0
    %v1342 = vrcp.pop %v1338
    %v1343 = vmul.f32 1.0, %v1342
    %v1344 = vrcp.pop %v1339
    %v1345 = vmul.f32 1.0, %v1344
    %v1346 = vrcp.pop %v1340
    %v1347 = vmul.f32 1.0, %v1346
    %v1348 = vrcp.pop %v1341
    %v1349 = vmul.f32 1.0, %v1348
    %v1350 = vtanh.pop %v1322
    %v1351 = vtanh.pop %v1323
    %v1352 = vtanh.pop %v1324
    %v1353 = vtanh.pop %v1325
    %v1355 = vrot.slane %v1205, 4
    %v1356 = vrot.slane %v1205, 5
    %v1357 = vrot.slane %v1205, 6
    %v1358 = vrot.slane %v1205, 7
    %1359 = vrot.lane.b32.xlu0 %v1355, 32
    %v1360 = vpop.permute.xlu0 %1359
    %1361 = vrot.lane.b32.xlu0 %v1356, 32
    %v1362 = vpop.permute.xlu0 %1361
    %1363 = vrot.lane.b32.xlu0 %v1357, 32
    %v1364 = vpop.permute.xlu0 %1363
    %1365 = vrot.lane.b32.xlu0 %v1358, 32
    %v1366 = vpop.permute.xlu0 %1365
    %v1371 = vmul.f32 %v1343, %v1360
    %v1372 = vmul.f32 %v1345, %v1362
    %v1373 = vmul.f32 %v1347, %v1364
    %v1374 = vmul.f32 %v1349, %v1366
    %1379 = vrot.lane.b32.xlu0 %v1350, 32
    %v1380 = vpop.permute.xlu0 %1379
    %1381 = vrot.lane.b32.xlu0 %v1351, 32
    %v1382 = vpop.permute.xlu0 %1381
    %1383 = vrot.lane.b32.xlu0 %v1352, 32
    %v1384 = vpop.permute.xlu0 %1383
    %1385 = vrot.lane.b32.xlu0 %v1353, 32
    %v1386 = vpop.permute.xlu0 %1385
    %v1391 = vmul.f32 %v1343, %v1380
    %v1392 = vmul.f32 %v1345, %v1382
    %v1393 = vmul.f32 %v1347, %v1384
    %v1394 = vmul.f32 %v1349, %v1386
    %1399 = vrot.lane.b32.xlu0 %v1391, 32
    %v1400 = vpop.permute.xlu0 %1399
    %1401 = vrot.lane.b32.xlu0 %v1392, 32
    %v1402 = vpop.permute.xlu0 %1401
    %1403 = vrot.lane.b32.xlu0 %v1393, 32
    %v1404 = vpop.permute.xlu0 %1403
    %1405 = vrot.lane.b32.xlu0 %v1394, 32
    %v1406 = vpop.permute.xlu0 %1405
    %v1411 = vadd.f32 %v1371, %v1400
    %v1412 = vadd.f32 %v1372, %v1402
    %v1413 = vadd.f32 %v1373, %v1404
    %v1414 = vadd.f32 %v1374, %v1406
    %v1415 = vtanh.pop %v1411
    %v1416 = vtanh.pop %v1412
    %v1417 = vtanh.pop %v1413
    %v1418 = vtanh.pop %v1414
    %1423 = vrot.lane.b32.xlu0 %v1415, 32
    %v1424 = vpop.permute.xlu0 %1423
    %1425 = vrot.lane.b32.xlu0 %v1416, 32
    %v1426 = vpop.permute.xlu0 %1425
    %1427 = vrot.lane.b32.xlu0 %v1417, 32
    %v1428 = vpop.permute.xlu0 %1427
    %1429 = vrot.lane.b32.xlu0 %v1418, 32
    %v1430 = vpop.permute.xlu0 %1429
    %v1435 = vmul.f32 %v1343, %v1424
    %v1436 = vmul.f32 %v1345, %v1426
    %v1437 = vmul.f32 %v1347, %v1428
    %v1438 = vmul.f32 %v1349, %v1430
    %vm1439 = vcmp.gt.s32.totalorder %v66, 4
    %v1440 = vsel %vm1439, 1, 0
    %1441 = vset.pattern.permute.xlu0 0
    %1442 = vperm.xlu0 %1441, %v1440
    %v1443 = vpop.permute.xlu0 %1442
    %vm1444 = vcmp.eq.s32.totalorder %v1443, 1
    %v1449 = vrot.slane %v1435, 4
    %v1450 = vrot.slane %v1436, 3
    %v1451 = vsel %vm386, %v1450, %v1449
    %v1452 = vrot.slane %v1437, 2
    %v1453 = vsel %vm389, %v1452, %v1451
    %v1454 = vrot.slane %v1438, 1
    %v1455 = vsel %vm392, %v1454, %v1453
    %1456 = vrot.lane.b32.xlu0 %v1455, 64
    %v1457 = vpop.permute.xlu0 %1456
    %v1459 = vsel %vm1444, %v1457, %v1191
    %v1464 = vrot.slane %v1411, 4
    %v1465 = vrot.slane %v1412, 3
    %v1466 = vsel %vm386, %v1465, %v1464
    %v1467 = vrot.slane %v1413, 2
    %v1468 = vsel %vm389, %v1467, %v1466
    %v1469 = vrot.slane %v1414, 1
    %v1470 = vsel %vm392, %v1469, %v1468
    %1471 = vrot.lane.b32.xlu0 %v1470, 96
    %v1472 = vpop.permute.xlu0 %1471
    %v1474 = vsel %vm1444, %v1472, %v1205
    %v1475 = vsel %vm1444, %v1457, 0.0
    %v1478 = vunpack.c.l.s4 1966171168
    %v1479 = vunpack.c.0.s8 %v1478
    %v1480 = vlaneseq
    %v1481 = vshrl.u32 %v1480, 7
    %v1482 = vsub.s32 %v1479, %v1481
    %v1483 = vrot.slane %v1475, %v1482
    %v1484 = vcombine.high %v1483, %v1483
    %v1486 = vunpack.c.l.s4 1966171168
    %v1487 = vunpack.c.0.s8 %v1486
    %v1488 = vlaneseq
    %v1489 = vshrl.u32 %v1488, 7
    %v1490 = vsub.s32 %v1487, %v1489
    %v1491 = vrot.slane %v1483, %v1490
    %v1493 = vunpack.c.l.s4 1966171168
    %v1494 = vunpack.c.0.s8 %v1493
    %v1495 = vlaneseq
    %v1496 = vshrl.u32 %v1495, 7
    %v1497 = vsub.s32 %v1494, %v1496
    %v1498 = vrot.slane %v1484, %v1497
    %v1499 = vcombine.high %v1491, %v1491
    %v1500 = vcombine.high %v1498, %v1498
    %1505 = vst.msk [vmem:[#allocation8 + $0x4] sm:$0x1] %vm441, %v1491
    %1506 = vst.msk [vmem:[#allocation8 + $0xc] sm:$0x1] %vm441, %v1498
    %1507 = vst.msk [vmem:[#allocation8 + $0x14] sm:$0x1] %vm441, %v1499
    %1508 = vst.msk [vmem:[#allocation8 + $0x1c] sm:$0x1] %vm441, %v1500
    %v1510 = vsel %vm193, %v1459, 0
    %1512 = vmatprep.subr.mxu0 0.0
    %1513 = vmatpush1.msra.mxu0 0.0
    %1514 = vmatprep.subr.mxu0 0.0
    %1515 = vmatpush1.msra.mxu0 0.0
    %1516 = vmatprep.subr.mxu0 0.0
    %1517 = vmatpush1.msra.mxu0 0.0
    %1518 = vmatprep.subr.mxu0 0.0
    %1519 = vmatpush1.msra.mxu0 0.0
    %1520 = vmatprep.subr.mxu0 0.0
    %1521 = vmatpush1.msra.mxu0 0.0
    %1522 = vmatprep.subr.mxu0 0.0
    %1523 = vmatpush1.msra.mxu0 0.0
    %1524 = vmatprep.subr.mxu0 0.0
    %1525 = vmatpush1.msra.mxu0 0.0
    %1526 = vmatprep.subr.mxu0 0.0
    %1527 = vmatpush1.msra.mxu0 0.0
    %1528 = vmatprep.subr.mxu0 0.0
    %1529 = vmatpush1.msra.mxu0 0.0
    %1530 = vmatprep.subr.mxu0 0.0
    %1531 = vmatpush1.msra.mxu0 0.0
    %1532 = vmatprep.subr.mxu0 0.0
    %1533 = vmatpush1.msra.mxu0 0.0
    %1534 = vmatprep.subr.mxu0 0.0
    %1535 = vmatpush1.msra.mxu0 0.0
    %1536 = vmatprep.subr.mxu0 0.0
    %1537 = vmatpush1.msra.mxu0 %v191
    %1538 = vmatprep.subr.mxu0 0.0
    %1539 = vmatpush1.msra.mxu0 %v189
    %1540 = vmatprep.subr.mxu0 0.0
    %1541 = vmatpush1.msra.mxu0 %v187
    %1542 = vmatprep.subr.mxu0 0.0
    %1543 = vmatpush1.msra.mxu0 %v185
    %1544 = vmatprep.subr.mxu0 0.0
    %1545 = vmatpush2.msra.mxu0 0.0
    %1546 = vmatprep.subr.mxu0 0.0
    %1547 = vmatpush2.msra.mxu0 0.0
    %1548 = vmatprep.subr.mxu0 0.0
    %1549 = vmatpush2.msra.mxu0 0.0
    %1550 = vmatprep.subr.mxu0 0.0
    %1551 = vmatpush2.msra.mxu0 0.0
    %1552 = vmatprep.subr.mxu0 0.0
    %1553 = vmatpush2.msra.mxu0 0.0
    %1554 = vmatprep.subr.mxu0 0.0
    %1555 = vmatpush2.msra.mxu0 0.0
    %1556 = vmatprep.subr.mxu0 0.0
    %1557 = vmatpush2.msra.mxu0 0.0
    %1558 = vmatprep.subr.mxu0 0.0
    %1559 = vmatpush2.msra.mxu0 0.0
    %1560 = vmatprep.subr.mxu0 0.0
    %1561 = vmatpush2.msra.mxu0 0.0
    %1562 = vmatprep.subr.mxu0 0.0
    %1563 = vmatpush2.msra.mxu0 0.0
    %1564 = vmatprep.subr.mxu0 0.0
    %1565 = vmatpush2.msra.mxu0 0.0
    %1566 = vmatprep.subr.mxu0 0.0
    %1567 = vmatpush2.msra.mxu0 0.0
    %1568 = vmatprep.subr.mxu0 0.0
    %1569 = vmatpush2.msra.mxu0 0.0
    %1570 = vmatprep.subr.mxu0 0.0
    %1571 = vmatpush2.msra.mxu0 0.0
    %1572 = vmatprep.subr.mxu0 0.0
    %1573 = vmatpush2.msra.mxu0 0.0
    %1574 = vmatprep.subr.mxu0 0.0
    %1575 = vmatpush2.msra.mxu0 0.0
    %1576 = vmatprep.mubr.f32.mxu0 0.0
    %1577 = vmatmul.mubr.f32.gmra.mxu0 %v1510
    %v1578 = vpop.f32.mrf.mxu0
    %v1579 = vadd.f32 0.0, %v1578
    %v1580 = vpop.f32.mrf.mxu0
    %1581 = vdwg.mxu0
    %v1583 = vrot.slane %v1579, 3
    %v1584 = vrot.slane %v1579, 4
    %v1585 = vrot.slane %v1579, 5
    %v1586 = vrot.slane %v1579, 6
    %v1591 = vadd.f32 %v163, %v1583
    %v1592 = vadd.f32 %v169, %v1584
    %v1593 = vadd.f32 %v175, %v1585
    %v1594 = vadd.f32 %v181, %v1586
    %v1595 = vxor.u32 %v1591, 2147483648
    %v1596 = vxor.u32 %v1592, 2147483648
    %v1597 = vxor.u32 %v1593, 2147483648
    %v1598 = vxor.u32 %v1594, 2147483648
    %v1599 = vmul.f32 %v1595, 1.442695
    %v1600 = vpow.pop %v1599
    %v1601 = vmul.f32 %v1596, 1.442695
    %v1602 = vpow.pop %v1601
    %v1603 = vmul.f32 %v1597, 1.442695
    %v1604 = vpow.pop %v1603
    %v1605 = vmul.f32 %v1598, 1.442695
    %v1606 = vpow.pop %v1605
    %v1607 = vadd.f32 %v1600, 1.0
    %v1608 = vadd.f32 %v1602, 1.0
    %v1609 = vadd.f32 %v1604, 1.0
    %v1610 = vadd.f32 %v1606, 1.0
    %v1611 = vrcp.pop %v1607
    %v1612 = vmul.f32 1.0, %v1611
    %v1613 = vrcp.pop %v1608
    %v1614 = vmul.f32 1.0, %v1613
    %v1615 = vrcp.pop %v1609
    %v1616 = vmul.f32 1.0, %v1615
    %v1617 = vrcp.pop %v1610
    %v1618 = vmul.f32 1.0, %v1617
    %v1619 = vtanh.pop %v1591
    %v1620 = vtanh.pop %v1592
    %v1621 = vtanh.pop %v1593
    %v1622 = vtanh.pop %v1594
    %v1624 = vrot.slane %v1474, 3
    %v1625 = vrot.slane %v1474, 4
    %v1626 = vrot.slane %v1474, 5
    %v1627 = vrot.slane %v1474, 6
    %1628 = vrot.lane.b32.xlu0 %v1624, 32
    %v1629 = vpop.permute.xlu0 %1628
    %1630 = vrot.lane.b32.xlu0 %v1625, 32
    %v1631 = vpop.permute.xlu0 %1630
    %1632 = vrot.lane.b32.xlu0 %v1626, 32
    %v1633 = vpop.permute.xlu0 %1632
    %1634 = vrot.lane.b32.xlu0 %v1627, 32
    %v1635 = vpop.permute.xlu0 %1634
    %v1640 = vmul.f32 %v1612, %v1629
    %v1641 = vmul.f32 %v1614, %v1631
    %v1642 = vmul.f32 %v1616, %v1633
    %v1643 = vmul.f32 %v1618, %v1635
    %1648 = vrot.lane.b32.xlu0 %v1619, 32
    %v1649 = vpop.permute.xlu0 %1648
    %1650 = vrot.lane.b32.xlu0 %v1620, 32
    %v1651 = vpop.permute.xlu0 %1650
    %1652 = vrot.lane.b32.xlu0 %v1621, 32
    %v1653 = vpop.permute.xlu0 %1652
    %1654 = vrot.lane.b32.xlu0 %v1622, 32
    %v1655 = vpop.permute.xlu0 %1654
    %v1660 = vmul.f32 %v1612, %v1649
    %v1661 = vmul.f32 %v1614, %v1651
    %v1662 = vmul.f32 %v1616, %v1653
    %v1663 = vmul.f32 %v1618, %v1655
    %1668 = vrot.lane.b32.xlu0 %v1660, 32
    %v1669 = vpop.permute.xlu0 %1668
    %1670 = vrot.lane.b32.xlu0 %v1661, 32
    %v1671 = vpop.permute.xlu0 %1670
    %1672 = vrot.lane.b32.xlu0 %v1662, 32
    %v1673 = vpop.permute.xlu0 %1672
    %1674 = vrot.lane.b32.xlu0 %v1663, 32
    %v1675 = vpop.permute.xlu0 %1674
    %v1680 = vadd.f32 %v1640, %v1669
    %v1681 = vadd.f32 %v1641, %v1671
    %v1682 = vadd.f32 %v1642, %v1673
    %v1683 = vadd.f32 %v1643, %v1675
    %v1684 = vtanh.pop %v1680
    %v1685 = vtanh.pop %v1681
    %v1686 = vtanh.pop %v1682
    %v1687 = vtanh.pop %v1683
    %1692 = vrot.lane.b32.xlu0 %v1684, 32
    %v1693 = vpop.permute.xlu0 %1692
    %1694 = vrot.lane.b32.xlu0 %v1685, 32
    %v1695 = vpop.permute.xlu0 %1694
    %1696 = vrot.lane.b32.xlu0 %v1686, 32
    %v1697 = vpop.permute.xlu0 %1696
    %1698 = vrot.lane.b32.xlu0 %v1687, 32
    %v1699 = vpop.permute.xlu0 %1698
    %v1704 = vmul.f32 %v1612, %v1693
    %v1705 = vmul.f32 %v1614, %v1695
    %v1706 = vmul.f32 %v1616, %v1697
    %v1707 = vmul.f32 %v1618, %v1699
    %vm1708 = vcmp.gt.s32.totalorder %v66, 5
    %v1709 = vsel %vm1708, 1, 0
    %1710 = vset.pattern.permute.xlu0 0
    %1711 = vperm.xlu0 %1710, %v1709
    %v1712 = vpop.permute.xlu0 %1711
    %vm1713 = vcmp.eq.s32.totalorder %v1712, 1
    %v1718 = vrot.slane %v1704, 5
    %v1719 = vrot.slane %v1705, 4
    %v1720 = vsel %vm386, %v1719, %v1718
    %v1721 = vrot.slane %v1706, 3
    %v1722 = vsel %vm389, %v1721, %v1720
    %v1723 = vrot.slane %v1707, 2
    %v1724 = vsel %vm392, %v1723, %v1722
    %1725 = vrot.lane.b32.xlu0 %v1724, 64
    %v1726 = vpop.permute.xlu0 %1725
    %v1728 = vsel %vm1713, %v1726, %v1459
    %v1733 = vrot.slane %v1680, 5
    %v1734 = vrot.slane %v1681, 4
    %v1735 = vsel %vm386, %v1734, %v1733
    %v1736 = vrot.slane %v1682, 3
    %v1737 = vsel %vm389, %v1736, %v1735
    %v1738 = vrot.slane %v1683, 2
    %v1739 = vsel %vm392, %v1738, %v1737
    %1740 = vrot.lane.b32.xlu0 %v1739, 96
    %v1741 = vpop.permute.xlu0 %1740
    %v1743 = vsel %vm1713, %v1741, %v1474
    %v1744 = vsel %vm1713, %v1726, 0.0
    %v1747 = vunpack.c.l.s4 1966171168
    %v1748 = vunpack.c.0.s8 %v1747
    %v1749 = vlaneseq
    %v1750 = vshrl.u32 %v1749, 7
    %v1751 = vsub.s32 %v1748, %v1750
    %v1752 = vrot.slane %v1744, %v1751
    %v1753 = vcombine.high %v1752, %v1752
    %v1755 = vunpack.c.l.s4 1966171168
    %v1756 = vunpack.c.0.s8 %v1755
    %v1757 = vlaneseq
    %v1758 = vshrl.u32 %v1757, 7
    %v1759 = vsub.s32 %v1756, %v1758
    %v1760 = vrot.slane %v1752, %v1759
    %v1762 = vunpack.c.l.s4 1966171168
    %v1763 = vunpack.c.0.s8 %v1762
    %v1764 = vlaneseq
    %v1765 = vshrl.u32 %v1764, 7
    %v1766 = vsub.s32 %v1763, %v1765
    %v1767 = vrot.slane %v1753, %v1766
    %v1768 = vcombine.high %v1760, %v1760
    %v1769 = vcombine.high %v1767, %v1767
    %1774 = vst.msk [vmem:[#allocation8 + $0x5] sm:$0x1] %vm441, %v1760
    %1775 = vst.msk [vmem:[#allocation8 + $0xd] sm:$0x1] %vm441, %v1767
    %1776 = vst.msk [vmem:[#allocation8 + $0x15] sm:$0x1] %vm441, %v1768
    %1777 = vst.msk [vmem:[#allocation8 + $0x1d] sm:$0x1] %vm441, %v1769
    %v1779 = vsel %vm193, %v1728, 0
    %1781 = vmatprep.subr.mxu0 0.0
    %1782 = vmatpush1.msra.mxu0 0.0
    %1783 = vmatprep.subr.mxu0 0.0
    %1784 = vmatpush1.msra.mxu0 0.0
    %1785 = vmatprep.subr.mxu0 0.0
    %1786 = vmatpush1.msra.mxu0 0.0
    %1787 = vmatprep.subr.mxu0 0.0
    %1788 = vmatpush1.msra.mxu0 0.0
    %1789 = vmatprep.subr.mxu0 0.0
    %1790 = vmatpush1.msra.mxu0 0.0
    %1791 = vmatprep.subr.mxu0 0.0
    %1792 = vmatpush1.msra.mxu0 0.0
    %1793 = vmatprep.subr.mxu0 0.0
    %1794 = vmatpush1.msra.mxu0 0.0
    %1795 = vmatprep.subr.mxu0 0.0
    %1796 = vmatpush1.msra.mxu0 0.0
    %1797 = vmatprep.subr.mxu0 0.0
    %1798 = vmatpush1.msra.mxu0 0.0
    %1799 = vmatprep.subr.mxu0 0.0
    %1800 = vmatpush1.msra.mxu0 0.0
    %1801 = vmatprep.subr.mxu0 0.0
    %1802 = vmatpush1.msra.mxu0 0.0
    %1803 = vmatprep.subr.mxu0 0.0
    %1804 = vmatpush1.msra.mxu0 0.0
    %1805 = vmatprep.subr.mxu0 0.0
    %1806 = vmatpush1.msra.mxu0 %v191
    %1807 = vmatprep.subr.mxu0 0.0
    %1808 = vmatpush1.msra.mxu0 %v189
    %1809 = vmatprep.subr.mxu0 0.0
    %1810 = vmatpush1.msra.mxu0 %v187
    %1811 = vmatprep.subr.mxu0 0.0
    %1812 = vmatpush1.msra.mxu0 %v185
    %1813 = vmatprep.subr.mxu0 0.0
    %1814 = vmatpush2.msra.mxu0 0.0
    %1815 = vmatprep.subr.mxu0 0.0
    %1816 = vmatpush2.msra.mxu0 0.0
    %1817 = vmatprep.subr.mxu0 0.0
    %1818 = vmatpush2.msra.mxu0 0.0
    %1819 = vmatprep.subr.mxu0 0.0
    %1820 = vmatpush2.msra.mxu0 0.0
    %1821 = vmatprep.subr.mxu0 0.0
    %1822 = vmatpush2.msra.mxu0 0.0
    %1823 = vmatprep.subr.mxu0 0.0
    %1824 = vmatpush2.msra.mxu0 0.0
    %1825 = vmatprep.subr.mxu0 0.0
    %1826 = vmatpush2.msra.mxu0 0.0
    %1827 = vmatprep.subr.mxu0 0.0
    %1828 = vmatpush2.msra.mxu0 0.0
    %1829 = vmatprep.subr.mxu0 0.0
    %1830 = vmatpush2.msra.mxu0 0.0
    %1831 = vmatprep.subr.mxu0 0.0
    %1832 = vmatpush2.msra.mxu0 0.0
    %1833 = vmatprep.subr.mxu0 0.0
    %1834 = vmatpush2.msra.mxu0 0.0
    %1835 = vmatprep.subr.mxu0 0.0
    %1836 = vmatpush2.msra.mxu0 0.0
    %1837 = vmatprep.subr.mxu0 0.0
    %1838 = vmatpush2.msra.mxu0 0.0
    %1839 = vmatprep.subr.mxu0 0.0
    %1840 = vmatpush2.msra.mxu0 0.0
    %1841 = vmatprep.subr.mxu0 0.0
    %1842 = vmatpush2.msra.mxu0 0.0
    %1843 = vmatprep.subr.mxu0 0.0
    %1844 = vmatpush2.msra.mxu0 0.0
    %1845 = vmatprep.mubr.f32.mxu0 0.0
    %1846 = vmatmul.mubr.f32.gmra.mxu0 %v1779
    %v1847 = vpop.f32.mrf.mxu0
    %v1848 = vadd.f32 0.0, %v1847
    %v1849 = vpop.f32.mrf.mxu0
    %1850 = vdwg.mxu0
    %v1852 = vrot.slane %v1848, 2
    %v1853 = vrot.slane %v1848, 3
    %v1854 = vrot.slane %v1848, 4
    %v1855 = vrot.slane %v1848, 5
    %v1860 = vadd.f32 %v163, %v1852
    %v1861 = vadd.f32 %v169, %v1853
    %v1862 = vadd.f32 %v175, %v1854
    %v1863 = vadd.f32 %v181, %v1855
    %v1864 = vxor.u32 %v1860, 2147483648
    %v1865 = vxor.u32 %v1861, 2147483648
    %v1866 = vxor.u32 %v1862, 2147483648
    %v1867 = vxor.u32 %v1863, 2147483648
    %v1868 = vmul.f32 %v1864, 1.442695
    %v1869 = vpow.pop %v1868
    %v1870 = vmul.f32 %v1865, 1.442695
    %v1871 = vpow.pop %v1870
    %v1872 = vmul.f32 %v1866, 1.442695
    %v1873 = vpow.pop %v1872
    %v1874 = vmul.f32 %v1867, 1.442695
    %v1875 = vpow.pop %v1874
    %v1876 = vadd.f32 %v1869, 1.0
    %v1877 = vadd.f32 %v1871, 1.0
    %v1878 = vadd.f32 %v1873, 1.0
    %v1879 = vadd.f32 %v1875, 1.0
    %v1880 = vrcp.pop %v1876
    %v1881 = vmul.f32 1.0, %v1880
    %v1882 = vrcp.pop %v1877
    %v1883 = vmul.f32 1.0, %v1882
    %v1884 = vrcp.pop %v1878
    %v1885 = vmul.f32 1.0, %v1884
    %v1886 = vrcp.pop %v1879
    %v1887 = vmul.f32 1.0, %v1886
    %v1888 = vtanh.pop %v1860
    %v1889 = vtanh.pop %v1861
    %v1890 = vtanh.pop %v1862
    %v1891 = vtanh.pop %v1863
    %v1893 = vrot.slane %v1743, 2
    %v1894 = vrot.slane %v1743, 3
    %v1895 = vrot.slane %v1743, 4
    %v1896 = vrot.slane %v1743, 5
    %1897 = vrot.lane.b32.xlu0 %v1893, 32
    %v1898 = vpop.permute.xlu0 %1897
    %1899 = vrot.lane.b32.xlu0 %v1894, 32
    %v1900 = vpop.permute.xlu0 %1899
    %1901 = vrot.lane.b32.xlu0 %v1895, 32
    %v1902 = vpop.permute.xlu0 %1901
    %1903 = vrot.lane.b32.xlu0 %v1896, 32
    %v1904 = vpop.permute.xlu0 %1903
    %v1909 = vmul.f32 %v1881, %v1898
    %v1910 = vmul.f32 %v1883, %v1900
    %v1911 = vmul.f32 %v1885, %v1902
    %v1912 = vmul.f32 %v1887, %v1904
    %1917 = vrot.lane.b32.xlu0 %v1888, 32
    %v1918 = vpop.permute.xlu0 %1917
    %1919 = vrot.lane.b32.xlu0 %v1889, 32
    %v1920 = vpop.permute.xlu0 %1919
    %1921 = vrot.lane.b32.xlu0 %v1890, 32
    %v1922 = vpop.permute.xlu0 %1921
    %1923 = vrot.lane.b32.xlu0 %v1891, 32
    %v1924 = vpop.permute.xlu0 %1923
    %v1929 = vmul.f32 %v1881, %v1918
    %v1930 = vmul.f32 %v1883, %v1920
    %v1931 = vmul.f32 %v1885, %v1922
    %v1932 = vmul.f32 %v1887, %v1924
    %1937 = vrot.lane.b32.xlu0 %v1929, 32
    %v1938 = vpop.permute.xlu0 %1937
    %1939 = vrot.lane.b32.xlu0 %v1930, 32
    %v1940 = vpop.permute.xlu0 %1939
    %1941 = vrot.lane.b32.xlu0 %v1931, 32
    %v1942 = vpop.permute.xlu0 %1941
    %1943 = vrot.lane.b32.xlu0 %v1932, 32
    %v1944 = vpop.permute.xlu0 %1943
    %v1949 = vadd.f32 %v1909, %v1938
    %v1950 = vadd.f32 %v1910, %v1940
    %v1951 = vadd.f32 %v1911, %v1942
    %v1952 = vadd.f32 %v1912, %v1944
    %v1953 = vtanh.pop %v1949
    %v1954 = vtanh.pop %v1950
    %v1955 = vtanh.pop %v1951
    %v1956 = vtanh.pop %v1952
    %1961 = vrot.lane.b32.xlu0 %v1953, 32
    %v1962 = vpop.permute.xlu0 %1961
    %1963 = vrot.lane.b32.xlu0 %v1954, 32
    %v1964 = vpop.permute.xlu0 %1963
    %1965 = vrot.lane.b32.xlu0 %v1955, 32
    %v1966 = vpop.permute.xlu0 %1965
    %1967 = vrot.lane.b32.xlu0 %v1956, 32
    %v1968 = vpop.permute.xlu0 %1967
    %v1973 = vmul.f32 %v1881, %v1962
    %v1974 = vmul.f32 %v1883, %v1964
    %v1975 = vmul.f32 %v1885, %v1966
    %v1976 = vmul.f32 %v1887, %v1968
    %vm1977 = vcmp.gt.s32.totalorder %v66, 6
    %v1978 = vsel %vm1977, 1, 0
    %1979 = vset.pattern.permute.xlu0 0
    %1980 = vperm.xlu0 %1979, %v1978
    %v1981 = vpop.permute.xlu0 %1980
    %vm1982 = vcmp.eq.s32.totalorder %v1981, 1
    %v1987 = vrot.slane %v1973, 6
    %v1988 = vrot.slane %v1974, 5
    %v1989 = vsel %vm386, %v1988, %v1987
    %v1990 = vrot.slane %v1975, 4
    %v1991 = vsel %vm389, %v1990, %v1989
    %v1992 = vrot.slane %v1976, 3
    %v1993 = vsel %vm392, %v1992, %v1991
    %1994 = vrot.lane.b32.xlu0 %v1993, 64
    %v1995 = vpop.permute.xlu0 %1994
    %v1997 = vsel %vm1982, %v1995, %v1728
    %v2002 = vrot.slane %v1949, 6
    %v2003 = vrot.slane %v1950, 5
    %v2004 = vsel %vm386, %v2003, %v2002
    %v2005 = vrot.slane %v1951, 4
    %v2006 = vsel %vm389, %v2005, %v2004
    %v2007 = vrot.slane %v1952, 3
    %v2008 = vsel %vm392, %v2007, %v2006
    %2009 = vrot.lane.b32.xlu0 %v2008, 96
    %v2010 = vpop.permute.xlu0 %2009
    %v2012 = vsel %vm1982, %v2010, %v1743
    %v2013 = vsel %vm1982, %v1995, 0.0
    %v2016 = vunpack.c.l.s4 1966171168
    %v2017 = vunpack.c.0.s8 %v2016
    %v2018 = vlaneseq
    %v2019 = vshrl.u32 %v2018, 7
    %v2020 = vsub.s32 %v2017, %v2019
    %v2021 = vrot.slane %v2013, %v2020
    %v2022 = vcombine.high %v2021, %v2021
    %v2024 = vunpack.c.l.s4 1966171168
    %v2025 = vunpack.c.0.s8 %v2024
    %v2026 = vlaneseq
    %v2027 = vshrl.u32 %v2026, 7
    %v2028 = vsub.s32 %v2025, %v2027
    %v2029 = vrot.slane %v2021, %v2028
    %v2031 = vunpack.c.l.s4 1966171168
    %v2032 = vunpack.c.0.s8 %v2031
    %v2033 = vlaneseq
    %v2034 = vshrl.u32 %v2033, 7
    %v2035 = vsub.s32 %v2032, %v2034
    %v2036 = vrot.slane %v2022, %v2035
    %v2037 = vcombine.high %v2029, %v2029
    %v2038 = vcombine.high %v2036, %v2036
    %2043 = vst.msk [vmem:[#allocation8 + $0x6] sm:$0x1] %vm441, %v2029
    %2044 = vst.msk [vmem:[#allocation8 + $0xe] sm:$0x1] %vm441, %v2036
    %2045 = vst.msk [vmem:[#allocation8 + $0x16] sm:$0x1] %vm441, %v2037
    %2046 = vst.msk [vmem:[#allocation8 + $0x1e] sm:$0x1] %vm441, %v2038
    %v2048 = vsel %vm193, %v1997, 0
    %2050 = vmatprep.subr.mxu0 0.0
    %2051 = vmatpush1.msra.mxu0 0.0
    %2052 = vmatprep.subr.mxu0 0.0
    %2053 = vmatpush1.msra.mxu0 0.0
    %2054 = vmatprep.subr.mxu0 0.0
    %2055 = vmatpush1.msra.mxu0 0.0
    %2056 = vmatprep.subr.mxu0 0.0
    %2057 = vmatpush1.msra.mxu0 0.0
    %2058 = vmatprep.subr.mxu0 0.0
    %2059 = vmatpush1.msra.mxu0 0.0
    %2060 = vmatprep.subr.mxu0 0.0
    %2061 = vmatpush1.msra.mxu0 0.0
    %2062 = vmatprep.subr.mxu0 0.0
    %2063 = vmatpush1.msra.mxu0 0.0
    %2064 = vmatprep.subr.mxu0 0.0
    %2065 = vmatpush1.msra.mxu0 0.0
    %2066 = vmatprep.subr.mxu0 0.0
    %2067 = vmatpush1.msra.mxu0 0.0
    %2068 = vmatprep.subr.mxu0 0.0
    %2069 = vmatpush1.msra.mxu0 0.0
    %2070 = vmatprep.subr.mxu0 0.0
    %2071 = vmatpush1.msra.mxu0 0.0
    %2072 = vmatprep.subr.mxu0 0.0
    %2073 = vmatpush1.msra.mxu0 0.0
    %2074 = vmatprep.subr.mxu0 0.0
    %2075 = vmatpush1.msra.mxu0 %v191
    %2076 = vmatprep.subr.mxu0 0.0
    %2077 = vmatpush1.msra.mxu0 %v189
    %2078 = vmatprep.subr.mxu0 0.0
    %2079 = vmatpush1.msra.mxu0 %v187
    %2080 = vmatprep.subr.mxu0 0.0
    %2081 = vmatpush1.msra.mxu0 %v185
    %2082 = vmatprep.subr.mxu0 0.0
    %2083 = vmatpush2.msra.mxu0 0.0
    %2084 = vmatprep.subr.mxu0 0.0
    %2085 = vmatpush2.msra.mxu0 0.0
    %2086 = vmatprep.subr.mxu0 0.0
    %2087 = vmatpush2.msra.mxu0 0.0
    %2088 = vmatprep.subr.mxu0 0.0
    %2089 = vmatpush2.msra.mxu0 0.0
    %2090 = vmatprep.subr.mxu0 0.0
    %2091 = vmatpush2.msra.mxu0 0.0
    %2092 = vmatprep.subr.mxu0 0.0
    %2093 = vmatpush2.msra.mxu0 0.0
    %2094 = vmatprep.subr.mxu0 0.0
    %2095 = vmatpush2.msra.mxu0 0.0
    %2096 = vmatprep.subr.mxu0 0.0
    %2097 = vmatpush2.msra.mxu0 0.0
    %2098 = vmatprep.subr.mxu0 0.0
    %2099 = vmatpush2.msra.mxu0 0.0
    %2100 = vmatprep.subr.mxu0 0.0
    %2101 = vmatpush2.msra.mxu0 0.0
    %2102 = vmatprep.subr.mxu0 0.0
    %2103 = vmatpush2.msra.mxu0 0.0
    %2104 = vmatprep.subr.mxu0 0.0
    %2105 = vmatpush2.msra.mxu0 0.0
    %2106 = vmatprep.subr.mxu0 0.0
    %2107 = vmatpush2.msra.mxu0 0.0
    %2108 = vmatprep.subr.mxu0 0.0
    %2109 = vmatpush2.msra.mxu0 0.0
    %2110 = vmatprep.subr.mxu0 0.0
    %2111 = vmatpush2.msra.mxu0 0.0
    %2112 = vmatprep.subr.mxu0 0.0
    %2113 = vmatpush2.msra.mxu0 0.0
    %2114 = vmatprep.mubr.f32.mxu0 0.0
    %2115 = vmatmul.mubr.f32.gmra.mxu0 %v2048
    %v2116 = vpop.f32.mrf.mxu0
    %v2117 = vadd.f32 0.0, %v2116
    %v2118 = vpop.f32.mrf.mxu0
    %2119 = vdwg.mxu0
    %v2121 = vrot.slane %v2117, 1
    %v2122 = vrot.slane %v2117, 2
    %v2123 = vrot.slane %v2117, 3
    %v2124 = vrot.slane %v2117, 4
    %v2129 = vadd.f32 %v163, %v2121
    %v2130 = vadd.f32 %v169, %v2122
    %v2131 = vadd.f32 %v175, %v2123
    %v2132 = vadd.f32 %v181, %v2124
    %v2133 = vxor.u32 %v2129, 2147483648
    %v2134 = vxor.u32 %v2130, 2147483648
    %v2135 = vxor.u32 %v2131, 2147483648
    %v2136 = vxor.u32 %v2132, 2147483648
    %v2137 = vmul.f32 %v2133, 1.442695
    %v2138 = vpow.pop %v2137
    %v2139 = vmul.f32 %v2134, 1.442695
    %v2140 = vpow.pop %v2139
    %v2141 = vmul.f32 %v2135, 1.442695
    %v2142 = vpow.pop %v2141
    %v2143 = vmul.f32 %v2136, 1.442695
    %v2144 = vpow.pop %v2143
    %v2145 = vadd.f32 %v2138, 1.0
    %v2146 = vadd.f32 %v2140, 1.0
    %v2147 = vadd.f32 %v2142, 1.0
    %v2148 = vadd.f32 %v2144, 1.0
    %v2149 = vrcp.pop %v2145
    %v2150 = vmul.f32 1.0, %v2149
    %v2151 = vrcp.pop %v2146
    %v2152 = vmul.f32 1.0, %v2151
    %v2153 = vrcp.pop %v2147
    %v2154 = vmul.f32 1.0, %v2153
    %v2155 = vrcp.pop %v2148
    %v2156 = vmul.f32 1.0, %v2155
    %v2157 = vtanh.pop %v2129
    %v2158 = vtanh.pop %v2130
    %v2159 = vtanh.pop %v2131
    %v2160 = vtanh.pop %v2132
    %v2162 = vrot.slane %v2012, 1
    %v2163 = vrot.slane %v2012, 2
    %v2164 = vrot.slane %v2012, 3
    %v2165 = vrot.slane %v2012, 4
    %2166 = vrot.lane.b32.xlu0 %v2162, 32
    %v2167 = vpop.permute.xlu0 %2166
    %2168 = vrot.lane.b32.xlu0 %v2163, 32
    %v2169 = vpop.permute.xlu0 %2168
    %2170 = vrot.lane.b32.xlu0 %v2164, 32
    %v2171 = vpop.permute.xlu0 %2170
    %2172 = vrot.lane.b32.xlu0 %v2165, 32
    %v2173 = vpop.permute.xlu0 %2172
    %v2178 = vmul.f32 %v2150, %v2167
    %v2179 = vmul.f32 %v2152, %v2169
    %v2180 = vmul.f32 %v2154, %v2171
    %v2181 = vmul.f32 %v2156, %v2173
    %2186 = vrot.lane.b32.xlu0 %v2157, 32
    %v2187 = vpop.permute.xlu0 %2186
    %2188 = vrot.lane.b32.xlu0 %v2158, 32
    %v2189 = vpop.permute.xlu0 %2188
    %2190 = vrot.lane.b32.xlu0 %v2159, 32
    %v2191 = vpop.permute.xlu0 %2190
    %2192 = vrot.lane.b32.xlu0 %v2160, 32
    %v2193 = vpop.permute.xlu0 %2192
    %v2198 = vmul.f32 %v2150, %v2187
    %v2199 = vmul.f32 %v2152, %v2189
    %v2200 = vmul.f32 %v2154, %v2191
    %v2201 = vmul.f32 %v2156, %v2193
    %2206 = vrot.lane.b32.xlu0 %v2198, 32
    %v2207 = vpop.permute.xlu0 %2206
    %2208 = vrot.lane.b32.xlu0 %v2199, 32
    %v2209 = vpop.permute.xlu0 %2208
    %2210 = vrot.lane.b32.xlu0 %v2200, 32
    %v2211 = vpop.permute.xlu0 %2210
    %2212 = vrot.lane.b32.xlu0 %v2201, 32
    %v2213 = vpop.permute.xlu0 %2212
    %v2218 = vadd.f32 %v2178, %v2207
    %v2219 = vadd.f32 %v2179, %v2209
    %v2220 = vadd.f32 %v2180, %v2211
    %v2221 = vadd.f32 %v2181, %v2213
    %v2222 = vtanh.pop %v2218
    %v2223 = vtanh.pop %v2219
    %v2224 = vtanh.pop %v2220
    %v2225 = vtanh.pop %v2221
    %2230 = vrot.lane.b32.xlu0 %v2222, 32
    %v2231 = vpop.permute.xlu0 %2230
    %2232 = vrot.lane.b32.xlu0 %v2223, 32
    %v2233 = vpop.permute.xlu0 %2232
    %2234 = vrot.lane.b32.xlu0 %v2224, 32
    %v2235 = vpop.permute.xlu0 %2234
    %2236 = vrot.lane.b32.xlu0 %v2225, 32
    %v2237 = vpop.permute.xlu0 %2236
    %v2242 = vmul.f32 %v2150, %v2231
    %v2243 = vmul.f32 %v2152, %v2233
    %v2244 = vmul.f32 %v2154, %v2235
    %v2245 = vmul.f32 %v2156, %v2237
    %vm2246 = vcmp.gt.s32.totalorder %v66, 7
    %v2247 = vsel %vm2246, 1, 0
    %2248 = vset.pattern.permute.xlu0 0
    %2249 = vperm.xlu0 %2248, %v2247
    %v2250 = vpop.permute.xlu0 %2249
    %vm2251 = vcmp.eq.s32.totalorder %v2250, 1
    %v2256 = vrot.slane %v2242, 7
    %v2257 = vrot.slane %v2243, 6
    %v2258 = vsel %vm386, %v2257, %v2256
    %v2259 = vrot.slane %v2244, 5
    %v2260 = vsel %vm389, %v2259, %v2258
    %v2261 = vrot.slane %v2245, 4
    %v2262 = vsel %vm392, %v2261, %v2260
    %2263 = vrot.lane.b32.xlu0 %v2262, 64
    %v2264 = vpop.permute.xlu0 %2263
    %v2266 = vsel %vm2251, %v2264, 0.0
    %v2269 = vunpack.c.l.s4 1966171168
    %v2270 = vunpack.c.0.s8 %v2269
    %v2271 = vlaneseq
    %v2272 = vshrl.u32 %v2271, 7
    %v2273 = vsub.s32 %v2270, %v2272
    %v2274 = vrot.slane %v2266, %v2273
    %v2275 = vcombine.high %v2274, %v2274
    %v2277 = vunpack.c.l.s4 1966171168
    %v2278 = vunpack.c.0.s8 %v2277
    %v2279 = vlaneseq
    %v2280 = vshrl.u32 %v2279, 7
    %v2281 = vsub.s32 %v2278, %v2280
    %v2282 = vrot.slane %v2274, %v2281
    %v2284 = vunpack.c.l.s4 1966171168
    %v2285 = vunpack.c.0.s8 %v2284
    %v2286 = vlaneseq
    %v2287 = vshrl.u32 %v2286, 7
    %v2288 = vsub.s32 %v2285, %v2287
    %v2289 = vrot.slane %v2275, %v2288
    %v2290 = vcombine.high %v2282, %v2282
    %v2291 = vcombine.high %v2289, %v2289
    %2296 = vst.msk [vmem:[#allocation8 + $0x7] sm:$0x1] %vm441, %v2282
    %2297 = vst.msk [vmem:[#allocation8 + $0xf] sm:$0x1] %vm441, %v2289
    %2298 = vst.msk [vmem:[#allocation8 + $0x17] sm:$0x1] %vm441, %v2290
    %2299 = vst.msk [vmem:[#allocation8 + $0x1f] sm:$0x1] %vm441, %v2291
    %2300 = vmatprep.subr.mxu0 0.0
    %2301 = vmatpush1.msra.mxu0 0.0
    %2302 = vmatprep.subr.mxu0 0.0
    %2303 = vmatpush1.msra.mxu0 0.0
    %2304 = vmatprep.subr.mxu0 0.0
    %2305 = vmatpush1.msra.mxu0 0.0
    %2306 = vmatprep.subr.mxu0 0.0
    %2307 = vmatpush1.msra.mxu0 0.0
    %2308 = vmatprep.subr.mxu0 0.0
    %2309 = vmatpush1.msra.mxu0 0.0
    %2310 = vmatprep.subr.mxu0 0.0
    %2311 = vmatpush1.msra.mxu0 0.0
    %2312 = vmatprep.subr.mxu0 0.0
    %2313 = vmatpush1.msra.mxu0 0.0
    %2314 = vmatprep.subr.mxu0 0.0
    %2315 = vmatpush1.msra.mxu0 0.0
    %2316 = vmatprep.subr.mxu0 0.0
    %2317 = vmatpush1.msra.mxu0 0.0
    %2318 = vmatprep.subr.mxu0 0.0
    %2319 = vmatpush1.msra.mxu0 0.0
    %2320 = vmatprep.subr.mxu0 0.0
    %2321 = vmatpush1.msra.mxu0 0.0
    %2322 = vmatprep.subr.mxu0 0.0
    %2323 = vmatpush1.msra.mxu0 0.0
    %2324 = vmatprep.subr.mxu0 0.0
    %2325 = vmatpush1.msra.mxu0 %v192
    %2326 = vmatprep.subr.mxu0 0.0
    %2327 = vmatpush1.msra.mxu0 %v190
    %2328 = vmatprep.subr.mxu0 0.0
    %2329 = vmatpush1.msra.mxu0 %v188
    %2330 = vmatprep.subr.mxu0 0.0
    %2331 = vmatpush1.msra.mxu0 %v186
    %2332 = vmatprep.subr.mxu0 0.0
    %2333 = vmatpush2.msra.mxu0 0.0
    %2334 = vmatprep.subr.mxu0 0.0
    %2335 = vmatpush2.msra.mxu0 0.0
    %2336 = vmatprep.subr.mxu0 0.0
    %2337 = vmatpush2.msra.mxu0 0.0
    %2338 = vmatprep.subr.mxu0 0.0
    %2339 = vmatpush2.msra.mxu0 0.0
    %2340 = vmatprep.subr.mxu0 0.0
    %2341 = vmatpush2.msra.mxu0 0.0
    %2342 = vmatprep.subr.mxu0 0.0
    %2343 = vmatpush2.msra.mxu0 0.0
    %2344 = vmatprep.subr.mxu0 0.0
    %2345 = vmatpush2.msra.mxu0 0.0
    %2346 = vmatprep.subr.mxu0 0.0
    %2347 = vmatpush2.msra.mxu0 0.0
    %2348 = vmatprep.subr.mxu0 0.0
    %2349 = vmatpush2.msra.mxu0 0.0
    %2350 = vmatprep.subr.mxu0 0.0
    %2351 = vmatpush2.msra.mxu0 0.0
    %2352 = vmatprep.subr.mxu0 0.0
    %2353 = vmatpush2.msra.mxu0 0.0
    %2354 = vmatprep.subr.mxu0 0.0
    %2355 = vmatpush2.msra.mxu0 0.0
    %2356 = vmatprep.subr.mxu0 0.0
    %2357 = vmatpush2.msra.mxu0 0.0
    %2358 = vmatprep.subr.mxu0 0.0
    %2359 = vmatpush2.msra.mxu0 0.0
    %2360 = vmatprep.subr.mxu0 0.0
    %2361 = vmatpush2.msra.mxu0 0.0
    %2362 = vmatprep.subr.mxu0 0.0
    %2363 = vmatpush2.msra.mxu0 0.0
    %2364 = vmatprep.mubr.f32.mxu0 0.0
    %2365 = vmatmul.mubr.f32.gmra.mxu0 %v195
    %v2366 = vpop.f32.mrf.mxu0
    %v2367 = vadd.f32 0.0, %v2366
    %v2368 = vpop.f32.mrf.mxu0
    %2369 = vdwg.mxu0
    %v2371 = vrot.slane %v2367, 1
    %v2372 = vrot.slane %v2367, 2
    %v2373 = vrot.slane %v2367, 3
    %v2374 = vrot.slane %v2367, 4
    %v2379 = vadd.f32 %v165, %v2371
    %v2380 = vadd.f32 %v171, %v2372
    %v2381 = vadd.f32 %v177, %v2373
    %v2382 = vadd.f32 %v183, %v2374
    %v2383 = vxor.u32 %v2379, 2147483648
    %v2384 = vxor.u32 %v2380, 2147483648
    %v2385 = vxor.u32 %v2381, 2147483648
    %v2386 = vxor.u32 %v2382, 2147483648
    %v2387 = vmul.f32 %v2383, 1.442695
    %v2388 = vpow.pop %v2387
    %v2389 = vmul.f32 %v2384, 1.442695
    %v2390 = vpow.pop %v2389
    %v2391 = vmul.f32 %v2385, 1.442695
    %v2392 = vpow.pop %v2391
    %v2393 = vmul.f32 %v2386, 1.442695
    %v2394 = vpow.pop %v2393
    %v2395 = vadd.f32 %v2388, 1.0
    %v2396 = vadd.f32 %v2390, 1.0
    %v2397 = vadd.f32 %v2392, 1.0
    %v2398 = vadd.f32 %v2394, 1.0
    %v2399 = vrcp.pop %v2395
    %v2400 = vmul.f32 1.0, %v2399
    %v2401 = vrcp.pop %v2396
    %v2402 = vmul.f32 1.0, %v2401
    %v2403 = vrcp.pop %v2397
    %v2404 = vmul.f32 1.0, %v2403
    %v2405 = vrcp.pop %v2398
    %v2406 = vmul.f32 1.0, %v2405
    %v2407 = vtanh.pop %v2379
    %v2408 = vtanh.pop %v2380
    %v2409 = vtanh.pop %v2381
    %v2410 = vtanh.pop %v2382
    %v2411 = vmul.f32 %v2400, 0.0
    %v2412 = vmul.f32 %v2402, 0.0
    %v2413 = vmul.f32 %v2404, 0.0
    %v2414 = vmul.f32 %v2406, 0.0
    %2419 = vrot.lane.b32.xlu0 %v2407, 32
    %v2420 = vpop.permute.xlu0 %2419
    %2421 = vrot.lane.b32.xlu0 %v2408, 32
    %v2422 = vpop.permute.xlu0 %2421
    %2423 = vrot.lane.b32.xlu0 %v2409, 32
    %v2424 = vpop.permute.xlu0 %2423
    %2425 = vrot.lane.b32.xlu0 %v2410, 32
    %v2426 = vpop.permute.xlu0 %2425
    %v2431 = vmul.f32 %v2400, %v2420
    %v2432 = vmul.f32 %v2402, %v2422
    %v2433 = vmul.f32 %v2404, %v2424
    %v2434 = vmul.f32 %v2406, %v2426
    %2439 = vrot.lane.b32.xlu0 %v2431, 32
    %v2440 = vpop.permute.xlu0 %2439
    %2441 = vrot.lane.b32.xlu0 %v2432, 32
    %v2442 = vpop.permute.xlu0 %2441
    %2443 = vrot.lane.b32.xlu0 %v2433, 32
    %v2444 = vpop.permute.xlu0 %2443
    %2445 = vrot.lane.b32.xlu0 %v2434, 32
    %v2446 = vpop.permute.xlu0 %2445
    %v2451 = vadd.f32 %v2411, %v2440
    %v2452 = vadd.f32 %v2412, %v2442
    %v2453 = vadd.f32 %v2413, %v2444
    %v2454 = vadd.f32 %v2414, %v2446
    %v2455 = vtanh.pop %v2451
    %v2456 = vtanh.pop %v2452
    %v2457 = vtanh.pop %v2453
    %v2458 = vtanh.pop %v2454
    %2463 = vrot.lane.b32.xlu0 %v2455, 32
    %v2464 = vpop.permute.xlu0 %2463
    %2465 = vrot.lane.b32.xlu0 %v2456, 32
    %v2466 = vpop.permute.xlu0 %2465
    %2467 = vrot.lane.b32.xlu0 %v2457, 32
    %v2468 = vpop.permute.xlu0 %2467
    %2469 = vrot.lane.b32.xlu0 %v2458, 32
    %v2470 = vpop.permute.xlu0 %2469
    %v2475 = vmul.f32 %v2400, %v2464
    %v2476 = vmul.f32 %v2402, %v2466
    %v2477 = vmul.f32 %v2404, %v2468
    %v2478 = vmul.f32 %v2406, %v2470
    %v2483 = vrot.slane %v2475, 7
    %v2484 = vrot.slane %v2476, 6
    %v2485 = vsel %vm386, %v2484, %v2483
    %v2486 = vrot.slane %v2477, 5
    %v2487 = vsel %vm389, %v2486, %v2485
    %v2488 = vrot.slane %v2478, 4
    %v2489 = vsel %vm392, %v2488, %v2487
    %2490 = vrot.lane.b32.xlu0 %v2489, 64
    %v2491 = vpop.permute.xlu0 %2490
    %v2493 = vsel %vm2251, %v2491, 0.0
    %v2498 = vrot.slane %v2451, 7
    %v2499 = vrot.slane %v2452, 6
    %v2500 = vsel %vm386, %v2499, %v2498
    %v2501 = vrot.slane %v2453, 5
    %v2502 = vsel %vm389, %v2501, %v2500
    %v2503 = vrot.slane %v2454, 4
    %v2504 = vsel %vm392, %v2503, %v2502
    %2505 = vrot.lane.b32.xlu0 %v2504, 96
    %v2506 = vpop.permute.xlu0 %2505
    %v2508 = vsel %vm2251, %v2506, 0.0
    %v2511 = vunpack.c.l.s4 1966171168
    %v2512 = vunpack.c.0.s8 %v2511
    %v2513 = vlaneseq
    %v2514 = vshrl.u32 %v2513, 7
    %v2515 = vsub.s32 %v2512, %v2514
    %v2516 = vrot.slane %v2493, %v2515
    %v2517 = vcombine.high %v2516, %v2516
    %v2519 = vunpack.c.l.s4 1966171168
    %v2520 = vunpack.c.0.s8 %v2519
    %v2521 = vlaneseq
    %v2522 = vshrl.u32 %v2521, 7
    %v2523 = vsub.s32 %v2520, %v2522
    %v2524 = vrot.slane %v2516, %v2523
    %v2526 = vunpack.c.l.s4 1966171168
    %v2527 = vunpack.c.0.s8 %v2526
    %v2528 = vlaneseq
    %v2529 = vshrl.u32 %v2528, 7
    %v2530 = vsub.s32 %v2527, %v2529
    %v2531 = vrot.slane %v2517, %v2530
    %v2532 = vcombine.high %v2524, %v2524
    %v2533 = vcombine.high %v2531, %v2531
    %v2534 = vlaneseq
    %v2535 = vshrl.u32 %v2534, 7
    %v2536 = vsub.s32 0, %v2535
    %v2537 = vrot.slane %v2524, %v2536
    %v2538 = vlaneseq
    %v2539 = vshrl.u32 %v2538, 7
    %v2540 = vsub.s32 0, %v2539
    %v2541 = vrot.slane %v2531, %v2540
    %v2542 = vlaneseq
    %v2543 = vshrl.u32 %v2542, 7
    %v2544 = vsub.s32 0, %v2543
    %v2545 = vrot.slane %v2532, %v2544
    %v2546 = vlaneseq
    %v2547 = vshrl.u32 %v2546, 7
    %v2548 = vsub.s32 0, %v2547
    %v2549 = vrot.slane %v2533, %v2548
    %2550 = vrot.lane.b32.xlu0 %v2537, 32
    %v2551 = vpop.permute.xlu0 %2550
    %2552 = vrot.lane.b32.xlu0 %v2541, 32
    %v2553 = vpop.permute.xlu0 %2552
    %2554 = vrot.lane.b32.xlu0 %v2545, 32
    %v2555 = vpop.permute.xlu0 %2554
    %2556 = vrot.lane.b32.xlu0 %v2549, 32
    %v2557 = vpop.permute.xlu0 %2556
    %vm2562 = vcmask 516352
    %2563 = vst.msk [vmem:[#allocation8 + $0x7] sm:$0x1] %vm2562, %v2551
    %2564 = vst.msk [vmem:[#allocation8 + $0xf] sm:$0x1] %vm2562, %v2553
    %2565 = vst.msk [vmem:[#allocation8 + $0x17] sm:$0x1] %vm2562, %v2555
    %2566 = vst.msk [vmem:[#allocation8 + $0x1f] sm:$0x1] %vm2562, %v2557
    %v2567 = vsel %vm193, %v2493, 0
    %2569 = vmatprep.subr.mxu0 0.0
    %2570 = vmatpush1.msra.mxu0 0.0
    %2571 = vmatprep.subr.mxu0 0.0
    %2572 = vmatpush1.msra.mxu0 0.0
    %2573 = vmatprep.subr.mxu0 0.0
    %2574 = vmatpush1.msra.mxu0 0.0
    %2575 = vmatprep.subr.mxu0 0.0
    %2576 = vmatpush1.msra.mxu0 0.0
    %2577 = vmatprep.subr.mxu0 0.0
    %2578 = vmatpush1.msra.mxu0 0.0
    %2579 = vmatprep.subr.mxu0 0.0
    %2580 = vmatpush1.msra.mxu0 0.0
    %2581 = vmatprep.subr.mxu0 0.0
    %2582 = vmatpush1.msra.mxu0 0.0
    %2583 = vmatprep.subr.mxu0 0.0
    %2584 = vmatpush1.msra.mxu0 0.0
    %2585 = vmatprep.subr.mxu0 0.0
    %2586 = vmatpush1.msra.mxu0 0.0
    %2587 = vmatprep.subr.mxu0 0.0
    %2588 = vmatpush1.msra.mxu0 0.0
    %2589 = vmatprep.subr.mxu0 0.0
    %2590 = vmatpush1.msra.mxu0 0.0
    %2591 = vmatprep.subr.mxu0 0.0
    %2592 = vmatpush1.msra.mxu0 0.0
    %2593 = vmatprep.subr.mxu0 0.0
    %2594 = vmatpush1.msra.mxu0 %v192
    %2595 = vmatprep.subr.mxu0 0.0
    %2596 = vmatpush1.msra.mxu0 %v190
    %2597 = vmatprep.subr.mxu0 0.0
    %2598 = vmatpush1.msra.mxu0 %v188
    %2599 = vmatprep.subr.mxu0 0.0
    %2600 = vmatpush1.msra.mxu0 %v186
    %2601 = vmatprep.subr.mxu0 0.0
    %2602 = vmatpush2.msra.mxu0 0.0
    %2603 = vmatprep.subr.mxu0 0.0
    %2604 = vmatpush2.msra.mxu0 0.0
    %2605 = vmatprep.subr.mxu0 0.0
    %2606 = vmatpush2.msra.mxu0 0.0
    %2607 = vmatprep.subr.mxu0 0.0
    %2608 = vmatpush2.msra.mxu0 0.0
    %2609 = vmatprep.subr.mxu0 0.0
    %2610 = vmatpush2.msra.mxu0 0.0
    %2611 = vmatprep.subr.mxu0 0.0
    %2612 = vmatpush2.msra.mxu0 0.0
    %2613 = vmatprep.subr.mxu0 0.0
    %2614 = vmatpush2.msra.mxu0 0.0
    %2615 = vmatprep.subr.mxu0 0.0
    %2616 = vmatpush2.msra.mxu0 0.0
    %2617 = vmatprep.subr.mxu0 0.0
    %2618 = vmatpush2.msra.mxu0 0.0
    %2619 = vmatprep.subr.mxu0 0.0
    %2620 = vmatpush2.msra.mxu0 0.0
    %2621 = vmatprep.subr.mxu0 0.0
    %2622 = vmatpush2.msra.mxu0 0.0
    %2623 = vmatprep.subr.mxu0 0.0
    %2624 = vmatpush2.msra.mxu0 0.0
    %2625 = vmatprep.subr.mxu0 0.0
    %2626 = vmatpush2.msra.mxu0 0.0
    %2627 = vmatprep.subr.mxu0 0.0
    %2628 = vmatpush2.msra.mxu0 0.0
    %2629 = vmatprep.subr.mxu0 0.0
    %2630 = vmatpush2.msra.mxu0 0.0
    %2631 = vmatprep.subr.mxu0 0.0
    %2632 = vmatpush2.msra.mxu0 0.0
    %2633 = vmatprep.mubr.f32.mxu0 0.0
    %2634 = vmatmul.mubr.f32.gmra.mxu0 %v2567
    %v2635 = vpop.f32.mrf.mxu0
    %v2636 = vadd.f32 0.0, %v2635
    %v2637 = vpop.f32.mrf.mxu0
    %2638 = vdwg.mxu0
    %v2640 = vrot.slane %v2636, 2
    %v2641 = vrot.slane %v2636, 3
    %v2642 = vrot.slane %v2636, 4
    %v2643 = vrot.slane %v2636, 5
    %v2648 = vadd.f32 %v165, %v2640
    %v2649 = vadd.f32 %v171, %v2641
    %v2650 = vadd.f32 %v177, %v2642
    %v2651 = vadd.f32 %v183, %v2643
    %v2652 = vxor.u32 %v2648, 2147483648
    %v2653 = vxor.u32 %v2649, 2147483648
    %v2654 = vxor.u32 %v2650, 2147483648
    %v2655 = vxor.u32 %v2651, 2147483648
    %v2656 = vmul.f32 %v2652, 1.442695
    %v2657 = vpow.pop %v2656
    %v2658 = vmul.f32 %v2653, 1.442695
    %v2659 = vpow.pop %v2658
    %v2660 = vmul.f32 %v2654, 1.442695
    %v2661 = vpow.pop %v2660
    %v2662 = vmul.f32 %v2655, 1.442695
    %v2663 = vpow.pop %v2662
    %v2664 = vadd.f32 %v2657, 1.0
    %v2665 = vadd.f32 %v2659, 1.0
    %v2666 = vadd.f32 %v2661, 1.0
    %v2667 = vadd.f32 %v2663, 1.0
    %v2668 = vrcp.pop %v2664
    %v2669 = vmul.f32 1.0, %v2668
    %v2670 = vrcp.pop %v2665
    %v2671 = vmul.f32 1.0, %v2670
    %v2672 = vrcp.pop %v2666
    %v2673 = vmul.f32 1.0, %v2672
    %v2674 = vrcp.pop %v2667
    %v2675 = vmul.f32 1.0, %v2674
    %v2676 = vtanh.pop %v2648
    %v2677 = vtanh.pop %v2649
    %v2678 = vtanh.pop %v2650
    %v2679 = vtanh.pop %v2651
    %v2681 = vrot.slane %v2508, 2
    %v2682 = vrot.slane %v2508, 3
    %v2683 = vrot.slane %v2508, 4
    %v2684 = vrot.slane %v2508, 5
    %2685 = vrot.lane.b32.xlu0 %v2681, 32
    %v2686 = vpop.permute.xlu0 %2685
    %2687 = vrot.lane.b32.xlu0 %v2682, 32
    %v2688 = vpop.permute.xlu0 %2687
    %2689 = vrot.lane.b32.xlu0 %v2683, 32
    %v2690 = vpop.permute.xlu0 %2689
    %2691 = vrot.lane.b32.xlu0 %v2684, 32
    %v2692 = vpop.permute.xlu0 %2691
    %v2697 = vmul.f32 %v2669, %v2686
    %v2698 = vmul.f32 %v2671, %v2688
    %v2699 = vmul.f32 %v2673, %v2690
    %v2700 = vmul.f32 %v2675, %v2692
    %2705 = vrot.lane.b32.xlu0 %v2676, 32
    %v2706 = vpop.permute.xlu0 %2705
    %2707 = vrot.lane.b32.xlu0 %v2677, 32
    %v2708 = vpop.permute.xlu0 %2707
    %2709 = vrot.lane.b32.xlu0 %v2678, 32
    %v2710 = vpop.permute.xlu0 %2709
    %2711 = vrot.lane.b32.xlu0 %v2679, 32
    %v2712 = vpop.permute.xlu0 %2711
    %v2717 = vmul.f32 %v2669, %v2706
    %v2718 = vmul.f32 %v2671, %v2708
    %v2719 = vmul.f32 %v2673, %v2710
    %v2720 = vmul.f32 %v2675, %v2712
    %2725 = vrot.lane.b32.xlu0 %v2717, 32
    %v2726 = vpop.permute.xlu0 %2725
    %2727 = vrot.lane.b32.xlu0 %v2718, 32
    %v2728 = vpop.permute.xlu0 %2727
    %2729 = vrot.lane.b32.xlu0 %v2719, 32
    %v2730 = vpop.permute.xlu0 %2729
    %2731 = vrot.lane.b32.xlu0 %v2720, 32
    %v2732 = vpop.permute.xlu0 %2731
    %v2737 = vadd.f32 %v2697, %v2726
    %v2738 = vadd.f32 %v2698, %v2728
    %v2739 = vadd.f32 %v2699, %v2730
    %v2740 = vadd.f32 %v2700, %v2732
    %v2741 = vtanh.pop %v2737
    %v2742 = vtanh.pop %v2738
    %v2743 = vtanh.pop %v2739
    %v2744 = vtanh.pop %v2740
    %2749 = vrot.lane.b32.xlu0 %v2741, 32
    %v2750 = vpop.permute.xlu0 %2749
    %2751 = vrot.lane.b32.xlu0 %v2742, 32
    %v2752 = vpop.permute.xlu0 %2751
    %2753 = vrot.lane.b32.xlu0 %v2743, 32
    %v2754 = vpop.permute.xlu0 %2753
    %2755 = vrot.lane.b32.xlu0 %v2744, 32
    %v2756 = vpop.permute.xlu0 %2755
    %v2761 = vmul.f32 %v2669, %v2750
    %v2762 = vmul.f32 %v2671, %v2752
    %v2763 = vmul.f32 %v2673, %v2754
    %v2764 = vmul.f32 %v2675, %v2756
    %v2769 = vrot.slane %v2761, 6
    %v2770 = vrot.slane %v2762, 5
    %v2771 = vsel %vm386, %v2770, %v2769
    %v2772 = vrot.slane %v2763, 4
    %v2773 = vsel %vm389, %v2772, %v2771
    %v2774 = vrot.slane %v2764, 3
    %v2775 = vsel %vm392, %v2774, %v2773
    %2776 = vrot.lane.b32.xlu0 %v2775, 64
    %v2777 = vpop.permute.xlu0 %2776
    %v2779 = vsel %vm1982, %v2777, %v2493
    %v2784 = vrot.slane %v2737, 6
    %v2785 = vrot.slane %v2738, 5
    %v2786 = vsel %vm386, %v2785, %v2784
    %v2787 = vrot.slane %v2739, 4
    %v2788 = vsel %vm389, %v2787, %v2786
    %v2789 = vrot.slane %v2740, 3
    %v2790 = vsel %vm392, %v2789, %v2788
    %2791 = vrot.lane.b32.xlu0 %v2790, 96
    %v2792 = vpop.permute.xlu0 %2791
    %v2794 = vsel %vm1982, %v2792, %v2508
    %v2795 = vsel %vm1982, %v2777, 0.0
    %v2798 = vunpack.c.l.s4 1966171168
    %v2799 = vunpack.c.0.s8 %v2798
    %v2800 = vlaneseq
    %v2801 = vshrl.u32 %v2800, 7
    %v2802 = vsub.s32 %v2799, %v2801
    %v2803 = vrot.slane %v2795, %v2802
    %v2804 = vcombine.high %v2803, %v2803
    %v2806 = vunpack.c.l.s4 1966171168
    %v2807 = vunpack.c.0.s8 %v2806
    %v2808 = vlaneseq
    %v2809 = vshrl.u32 %v2808, 7
    %v2810 = vsub.s32 %v2807, %v2809
    %v2811 = vrot.slane %v2803, %v2810
    %v2813 = vunpack.c.l.s4 1966171168
    %v2814 = vunpack.c.0.s8 %v2813
    %v2815 = vlaneseq
    %v2816 = vshrl.u32 %v2815, 7
    %v2817 = vsub.s32 %v2814, %v2816
    %v2818 = vrot.slane %v2804, %v2817
    %v2819 = vcombine.high %v2811, %v2811
    %v2820 = vcombine.high %v2818, %v2818
    %v2821 = vlaneseq
    %v2822 = vshrl.u32 %v2821, 7
    %v2823 = vsub.s32 0, %v2822
    %v2824 = vrot.slane %v2811, %v2823
    %v2825 = vlaneseq
    %v2826 = vshrl.u32 %v2825, 7
    %v2827 = vsub.s32 0, %v2826
    %v2828 = vrot.slane %v2818, %v2827
    %v2829 = vlaneseq
    %v2830 = vshrl.u32 %v2829, 7
    %v2831 = vsub.s32 0, %v2830
    %v2832 = vrot.slane %v2819, %v2831
    %v2833 = vlaneseq
    %v2834 = vshrl.u32 %v2833, 7
    %v2835 = vsub.s32 0, %v2834
    %v2836 = vrot.slane %v2820, %v2835
    %2837 = vrot.lane.b32.xlu0 %v2824, 32
    %v2838 = vpop.permute.xlu0 %2837
    %2839 = vrot.lane.b32.xlu0 %v2828, 32
    %v2840 = vpop.permute.xlu0 %2839
    %2841 = vrot.lane.b32.xlu0 %v2832, 32
    %v2842 = vpop.permute.xlu0 %2841
    %2843 = vrot.lane.b32.xlu0 %v2836, 32
    %v2844 = vpop.permute.xlu0 %2843
    %2849 = vst.msk [vmem:[#allocation8 + $0x6] sm:$0x1] %vm2562, %v2838
    %2850 = vst.msk [vmem:[#allocation8 + $0xe] sm:$0x1] %vm2562, %v2840
    %2851 = vst.msk [vmem:[#allocation8 + $0x16] sm:$0x1] %vm2562, %v2842
    %2852 = vst.msk [vmem:[#allocation8 + $0x1e] sm:$0x1] %vm2562, %v2844
    %v2854 = vsel %vm193, %v2779, 0
    %2856 = vmatprep.subr.mxu0 0.0
    %2857 = vmatpush1.msra.mxu0 0.0
    %2858 = vmatprep.subr.mxu0 0.0
    %2859 = vmatpush1.msra.mxu0 0.0
    %2860 = vmatprep.subr.mxu0 0.0
    %2861 = vmatpush1.msra.mxu0 0.0
    %2862 = vmatprep.subr.mxu0 0.0
    %2863 = vmatpush1.msra.mxu0 0.0
    %2864 = vmatprep.subr.mxu0 0.0
    %2865 = vmatpush1.msra.mxu0 0.0
    %2866 = vmatprep.subr.mxu0 0.0
    %2867 = vmatpush1.msra.mxu0 0.0
    %2868 = vmatprep.subr.mxu0 0.0
    %2869 = vmatpush1.msra.mxu0 0.0
    %2870 = vmatprep.subr.mxu0 0.0
    %2871 = vmatpush1.msra.mxu0 0.0
    %2872 = vmatprep.subr.mxu0 0.0
    %2873 = vmatpush1.msra.mxu0 0.0
    %2874 = vmatprep.subr.mxu0 0.0
    %2875 = vmatpush1.msra.mxu0 0.0
    %2876 = vmatprep.subr.mxu0 0.0
    %2877 = vmatpush1.msra.mxu0 0.0
    %2878 = vmatprep.subr.mxu0 0.0
    %2879 = vmatpush1.msra.mxu0 0.0
    %2880 = vmatprep.subr.mxu0 0.0
    %2881 = vmatpush1.msra.mxu0 %v192
    %2882 = vmatprep.subr.mxu0 0.0
    %2883 = vmatpush1.msra.mxu0 %v190
    %2884 = vmatprep.subr.mxu0 0.0
    %2885 = vmatpush1.msra.mxu0 %v188
    %2886 = vmatprep.subr.mxu0 0.0
    %2887 = vmatpush1.msra.mxu0 %v186
    %2888 = vmatprep.subr.mxu0 0.0
    %2889 = vmatpush2.msra.mxu0 0.0
    %2890 = vmatprep.subr.mxu0 0.0
    %2891 = vmatpush2.msra.mxu0 0.0
    %2892 = vmatprep.subr.mxu0 0.0
    %2893 = vmatpush2.msra.mxu0 0.0
    %2894 = vmatprep.subr.mxu0 0.0
    %2895 = vmatpush2.msra.mxu0 0.0
    %2896 = vmatprep.subr.mxu0 0.0
    %2897 = vmatpush2.msra.mxu0 0.0
    %2898 = vmatprep.subr.mxu0 0.0
    %2899 = vmatpush2.msra.mxu0 0.0
    %2900 = vmatprep.subr.mxu0 0.0
    %2901 = vmatpush2.msra.mxu0 0.0
    %2902 = vmatprep.subr.mxu0 0.0
    %2903 = vmatpush2.msra.mxu0 0.0
    %2904 = vmatprep.subr.mxu0 0.0
    %2905 = vmatpush2.msra.mxu0 0.0
    %2906 = vmatprep.subr.mxu0 0.0
    %2907 = vmatpush2.msra.mxu0 0.0
    %2908 = vmatprep.subr.mxu0 0.0
    %2909 = vmatpush2.msra.mxu0 0.0
    %2910 = vmatprep.subr.mxu0 0.0
    %2911 = vmatpush2.msra.mxu0 0.0
    %2912 = vmatprep.subr.mxu0 0.0
    %2913 = vmatpush2.msra.mxu0 0.0
    %2914 = vmatprep.subr.mxu0 0.0
    %2915 = vmatpush2.msra.mxu0 0.0
    %2916 = vmatprep.subr.mxu0 0.0
    %2917 = vmatpush2.msra.mxu0 0.0
    %2918 = vmatprep.subr.mxu0 0.0
    %2919 = vmatpush2.msra.mxu0 0.0
    %2920 = vmatprep.mubr.f32.mxu0 0.0
    %2921 = vmatmul.mubr.f32.gmra.mxu0 %v2854
    %v2922 = vpop.f32.mrf.mxu0
    %v2923 = vadd.f32 0.0, %v2922
    %v2924 = vpop.f32.mrf.mxu0
    %2925 = vdwg.mxu0
    %v2927 = vrot.slane %v2923, 3
    %v2928 = vrot.slane %v2923, 4
    %v2929 = vrot.slane %v2923, 5
    %v2930 = vrot.slane %v2923, 6
    %v2935 = vadd.f32 %v165, %v2927
    %v2936 = vadd.f32 %v171, %v2928
    %v2937 = vadd.f32 %v177, %v2929
    %v2938 = vadd.f32 %v183, %v2930
    %v2939 = vxor.u32 %v2935, 2147483648
    %v2940 = vxor.u32 %v2936, 2147483648
    %v2941 = vxor.u32 %v2937, 2147483648
    %v2942 = vxor.u32 %v2938, 2147483648
    %v2943 = vmul.f32 %v2939, 1.442695
    %v2944 = vpow.pop %v2943
    %v2945 = vmul.f32 %v2940, 1.442695
    %v2946 = vpow.pop %v2945
    %v2947 = vmul.f32 %v2941, 1.442695
    %v2948 = vpow.pop %v2947
    %v2949 = vmul.f32 %v2942, 1.442695
    %v2950 = vpow.pop %v2949
    %v2951 = vadd.f32 %v2944, 1.0
    %v2952 = vadd.f32 %v2946, 1.0
    %v2953 = vadd.f32 %v2948, 1.0
    %v2954 = vadd.f32 %v2950, 1.0
    %v2955 = vrcp.pop %v2951
    %v2956 = vmul.f32 1.0, %v2955
    %v2957 = vrcp.pop %v2952
    %v2958 = vmul.f32 1.0, %v2957
    %v2959 = vrcp.pop %v2953
    %v2960 = vmul.f32 1.0, %v2959
    %v2961 = vrcp.pop %v2954
    %v2962 = vmul.f32 1.0, %v2961
    %v2963 = vtanh.pop %v2935
    %v2964 = vtanh.pop %v2936
    %v2965 = vtanh.pop %v2937
    %v2966 = vtanh.pop %v2938
    %v2968 = vrot.slane %v2794, 3
    %v2969 = vrot.slane %v2794, 4
    %v2970 = vrot.slane %v2794, 5
    %v2971 = vrot.slane %v2794, 6
    %2972 = vrot.lane.b32.xlu0 %v2968, 32
    %v2973 = vpop.permute.xlu0 %2972
    %2974 = vrot.lane.b32.xlu0 %v2969, 32
    %v2975 = vpop.permute.xlu0 %2974
    %2976 = vrot.lane.b32.xlu0 %v2970, 32
    %v2977 = vpop.permute.xlu0 %2976
    %2978 = vrot.lane.b32.xlu0 %v2971, 32
    %v2979 = vpop.permute.xlu0 %2978
    %v2984 = vmul.f32 %v2956, %v2973
    %v2985 = vmul.f32 %v2958, %v2975
    %v2986 = vmul.f32 %v2960, %v2977
    %v2987 = vmul.f32 %v2962, %v2979
    %2992 = vrot.lane.b32.xlu0 %v2963, 32
    %v2993 = vpop.permute.xlu0 %2992
    %2994 = vrot.lane.b32.xlu0 %v2964, 32
    %v2995 = vpop.permute.xlu0 %2994
    %2996 = vrot.lane.b32.xlu0 %v2965, 32
    %v2997 = vpop.permute.xlu0 %2996
    %2998 = vrot.lane.b32.xlu0 %v2966, 32
    %v2999 = vpop.permute.xlu0 %2998
    %v3004 = vmul.f32 %v2956, %v2993
    %v3005 = vmul.f32 %v2958, %v2995
    %v3006 = vmul.f32 %v2960, %v2997
    %v3007 = vmul.f32 %v2962, %v2999
    %3012 = vrot.lane.b32.xlu0 %v3004, 32
    %v3013 = vpop.permute.xlu0 %3012
    %3014 = vrot.lane.b32.xlu0 %v3005, 32
    %v3015 = vpop.permute.xlu0 %3014
    %3016 = vrot.lane.b32.xlu0 %v3006, 32
    %v3017 = vpop.permute.xlu0 %3016
    %3018 = vrot.lane.b32.xlu0 %v3007, 32
    %v3019 = vpop.permute.xlu0 %3018
    %v3024 = vadd.f32 %v2984, %v3013
    %v3025 = vadd.f32 %v2985, %v3015
    %v3026 = vadd.f32 %v2986, %v3017
    %v3027 = vadd.f32 %v2987, %v3019
    %v3028 = vtanh.pop %v3024
    %v3029 = vtanh.pop %v3025
    %v3030 = vtanh.pop %v3026
    %v3031 = vtanh.pop %v3027
    %3036 = vrot.lane.b32.xlu0 %v3028, 32
    %v3037 = vpop.permute.xlu0 %3036
    %3038 = vrot.lane.b32.xlu0 %v3029, 32
    %v3039 = vpop.permute.xlu0 %3038
    %3040 = vrot.lane.b32.xlu0 %v3030, 32
    %v3041 = vpop.permute.xlu0 %3040
    %3042 = vrot.lane.b32.xlu0 %v3031, 32
    %v3043 = vpop.permute.xlu0 %3042
    %v3048 = vmul.f32 %v2956, %v3037
    %v3049 = vmul.f32 %v2958, %v3039
    %v3050 = vmul.f32 %v2960, %v3041
    %v3051 = vmul.f32 %v2962, %v3043
    %v3056 = vrot.slane %v3048, 5
    %v3057 = vrot.slane %v3049, 4
    %v3058 = vsel %vm386, %v3057, %v3056
    %v3059 = vrot.slane %v3050, 3
    %v3060 = vsel %vm389, %v3059, %v3058
    %v3061 = vrot.slane %v3051, 2
    %v3062 = vsel %vm392, %v3061, %v3060
    %3063 = vrot.lane.b32.xlu0 %v3062, 64
    %v3064 = vpop.permute.xlu0 %3063
    %v3066 = vsel %vm1713, %v3064, %v2779
    %v3071 = vrot.slane %v3024, 5
    %v3072 = vrot.slane %v3025, 4
    %v3073 = vsel %vm386, %v3072, %v3071
    %v3074 = vrot.slane %v3026, 3
    %v3075 = vsel %vm389, %v3074, %v3073
    %v3076 = vrot.slane %v3027, 2
    %v3077 = vsel %vm392, %v3076, %v3075
    %3078 = vrot.lane.b32.xlu0 %v3077, 96
    %v3079 = vpop.permute.xlu0 %3078
    %v3081 = vsel %vm1713, %v3079, %v2794
    %v3082 = vsel %vm1713, %v3064, 0.0
    %v3085 = vunpack.c.l.s4 1966171168
    %v3086 = vunpack.c.0.s8 %v3085
    %v3087 = vlaneseq
    %v3088 = vshrl.u32 %v3087, 7
    %v3089 = vsub.s32 %v3086, %v3088
    %v3090 = vrot.slane %v3082, %v3089
    %v3091 = vcombine.high %v3090, %v3090
    %v3093 = vunpack.c.l.s4 1966171168
    %v3094 = vunpack.c.0.s8 %v3093
    %v3095 = vlaneseq
    %v3096 = vshrl.u32 %v3095, 7
    %v3097 = vsub.s32 %v3094, %v3096
    %v3098 = vrot.slane %v3090, %v3097
    %v3100 = vunpack.c.l.s4 1966171168
    %v3101 = vunpack.c.0.s8 %v3100
    %v3102 = vlaneseq
    %v3103 = vshrl.u32 %v3102, 7
    %v3104 = vsub.s32 %v3101, %v3103
    %v3105 = vrot.slane %v3091, %v3104
    %v3106 = vcombine.high %v3098, %v3098
    %v3107 = vcombine.high %v3105, %v3105
    %v3108 = vlaneseq
    %v3109 = vshrl.u32 %v3108, 7
    %v3110 = vsub.s32 0, %v3109
    %v3111 = vrot.slane %v3098, %v3110
    %v3112 = vlaneseq
    %v3113 = vshrl.u32 %v3112, 7
    %v3114 = vsub.s32 0, %v3113
    %v3115 = vrot.slane %v3105, %v3114
    %v3116 = vlaneseq
    %v3117 = vshrl.u32 %v3116, 7
    %v3118 = vsub.s32 0, %v3117
    %v3119 = vrot.slane %v3106, %v3118
    %v3120 = vlaneseq
    %v3121 = vshrl.u32 %v3120, 7
    %v3122 = vsub.s32 0, %v3121
    %v3123 = vrot.slane %v3107, %v3122
    %3124 = vrot.lane.b32.xlu0 %v3111, 32
    %v3125 = vpop.permute.xlu0 %3124
    %3126 = vrot.lane.b32.xlu0 %v3115, 32
    %v3127 = vpop.permute.xlu0 %3126
    %3128 = vrot.lane.b32.xlu0 %v3119, 32
    %v3129 = vpop.permute.xlu0 %3128
    %3130 = vrot.lane.b32.xlu0 %v3123, 32
    %v3131 = vpop.permute.xlu0 %3130
    %3136 = vst.msk [vmem:[#allocation8 + $0x5] sm:$0x1] %vm2562, %v3125
    %3137 = vst.msk [vmem:[#allocation8 + $0xd] sm:$0x1] %vm2562, %v3127
    %3138 = vst.msk [vmem:[#allocation8 + $0x15] sm:$0x1] %vm2562, %v3129
    %3139 = vst.msk [vmem:[#allocation8 + $0x1d] sm:$0x1] %vm2562, %v3131
    %v3141 = vsel %vm193, %v3066, 0
    %3143 = vmatprep.subr.mxu0 0.0
    %3144 = vmatpush1.msra.mxu0 0.0
    %3145 = vmatprep.subr.mxu0 0.0
    %3146 = vmatpush1.msra.mxu0 0.0
    %3147 = vmatprep.subr.mxu0 0.0
    %3148 = vmatpush1.msra.mxu0 0.0
    %3149 = vmatprep.subr.mxu0 0.0
    %3150 = vmatpush1.msra.mxu0 0.0
    %3151 = vmatprep.subr.mxu0 0.0
    %3152 = vmatpush1.msra.mxu0 0.0
    %3153 = vmatprep.subr.mxu0 0.0
    %3154 = vmatpush1.msra.mxu0 0.0
    %3155 = vmatprep.subr.mxu0 0.0
    %3156 = vmatpush1.msra.mxu0 0.0
    %3157 = vmatprep.subr.mxu0 0.0
    %3158 = vmatpush1.msra.mxu0 0.0
    %3159 = vmatprep.subr.mxu0 0.0
    %3160 = vmatpush1.msra.mxu0 0.0
    %3161 = vmatprep.subr.mxu0 0.0
    %3162 = vmatpush1.msra.mxu0 0.0
    %3163 = vmatprep.subr.mxu0 0.0
    %3164 = vmatpush1.msra.mxu0 0.0
    %3165 = vmatprep.subr.mxu0 0.0
    %3166 = vmatpush1.msra.mxu0 0.0
    %3167 = vmatprep.subr.mxu0 0.0
    %3168 = vmatpush1.msra.mxu0 %v192
    %3169 = vmatprep.subr.mxu0 0.0
    %3170 = vmatpush1.msra.mxu0 %v190
    %3171 = vmatprep.subr.mxu0 0.0
    %3172 = vmatpush1.msra.mxu0 %v188
    %3173 = vmatprep.subr.mxu0 0.0
    %3174 = vmatpush1.msra.mxu0 %v186
    %3175 = vmatprep.subr.mxu0 0.0
    %3176 = vmatpush2.msra.mxu0 0.0
    %3177 = vmatprep.subr.mxu0 0.0
    %3178 = vmatpush2.msra.mxu0 0.0
    %3179 = vmatprep.subr.mxu0 0.0
    %3180 = vmatpush2.msra.mxu0 0.0
    %3181 = vmatprep.subr.mxu0 0.0
    %3182 = vmatpush2.msra.mxu0 0.0
    %3183 = vmatprep.subr.mxu0 0.0
    %3184 = vmatpush2.msra.mxu0 0.0
    %3185 = vmatprep.subr.mxu0 0.0
    %3186 = vmatpush2.msra.mxu0 0.0
    %3187 = vmatprep.subr.mxu0 0.0
    %3188 = vmatpush2.msra.mxu0 0.0
    %3189 = vmatprep.subr.mxu0 0.0
    %3190 = vmatpush2.msra.mxu0 0.0
    %3191 = vmatprep.subr.mxu0 0.0
    %3192 = vmatpush2.msra.mxu0 0.0
    %3193 = vmatprep.subr.mxu0 0.0
    %3194 = vmatpush2.msra.mxu0 0.0
    %3195 = vmatprep.subr.mxu0 0.0
    %3196 = vmatpush2.msra.mxu0 0.0
    %3197 = vmatprep.subr.mxu0 0.0
    %3198 = vmatpush2.msra.mxu0 0.0
    %3199 = vmatprep.subr.mxu0 0.0
    %3200 = vmatpush2.msra.mxu0 0.0
    %3201 = vmatprep.subr.mxu0 0.0
    %3202 = vmatpush2.msra.mxu0 0.0
    %3203 = vmatprep.subr.mxu0 0.0
    %3204 = vmatpush2.msra.mxu0 0.0
    %3205 = vmatprep.subr.mxu0 0.0
    %3206 = vmatpush2.msra.mxu0 0.0
    %3207 = vmatprep.mubr.f32.mxu0 0.0
    %3208 = vmatmul.mubr.f32.gmra.mxu0 %v3141
    %v3209 = vpop.f32.mrf.mxu0
    %v3210 = vadd.f32 0.0, %v3209
    %v3211 = vpop.f32.mrf.mxu0
    %3212 = vdwg.mxu0
    %v3214 = vrot.slane %v3210, 4
    %v3215 = vrot.slane %v3210, 5
    %v3216 = vrot.slane %v3210, 6
    %v3217 = vrot.slane %v3210, 7
    %v3222 = vadd.f32 %v165, %v3214
    %v3223 = vadd.f32 %v171, %v3215
    %v3224 = vadd.f32 %v177, %v3216
    %v3225 = vadd.f32 %v183, %v3217
    %v3226 = vxor.u32 %v3222, 2147483648
    %v3227 = vxor.u32 %v3223, 2147483648
    %v3228 = vxor.u32 %v3224, 2147483648
    %v3229 = vxor.u32 %v3225, 2147483648
    %v3230 = vmul.f32 %v3226, 1.442695
    %v3231 = vpow.pop %v3230
    %v3232 = vmul.f32 %v3227, 1.442695
    %v3233 = vpow.pop %v3232
    %v3234 = vmul.f32 %v3228, 1.442695
    %v3235 = vpow.pop %v3234
    %v3236 = vmul.f32 %v3229, 1.442695
    %v3237 = vpow.pop %v3236
    %v3238 = vadd.f32 %v3231, 1.0
    %v3239 = vadd.f32 %v3233, 1.0
    %v3240 = vadd.f32 %v3235, 1.0
    %v3241 = vadd.f32 %v3237, 1.0
    %v3242 = vrcp.pop %v3238
    %v3243 = vmul.f32 1.0, %v3242
    %v3244 = vrcp.pop %v3239
    %v3245 = vmul.f32 1.0, %v3244
    %v3246 = vrcp.pop %v3240
    %v3247 = vmul.f32 1.0, %v3246
    %v3248 = vrcp.pop %v3241
    %v3249 = vmul.f32 1.0, %v3248
    %v3250 = vtanh.pop %v3222
    %v3251 = vtanh.pop %v3223
    %v3252 = vtanh.pop %v3224
    %v3253 = vtanh.pop %v3225
    %v3255 = vrot.slane %v3081, 4
    %v3256 = vrot.slane %v3081, 5
    %v3257 = vrot.slane %v3081, 6
    %v3258 = vrot.slane %v3081, 7
    %3259 = vrot.lane.b32.xlu0 %v3255, 32
    %v3260 = vpop.permute.xlu0 %3259
    %3261 = vrot.lane.b32.xlu0 %v3256, 32
    %v3262 = vpop.permute.xlu0 %3261
    %3263 = vrot.lane.b32.xlu0 %v3257, 32
    %v3264 = vpop.permute.xlu0 %3263
    %3265 = vrot.lane.b32.xlu0 %v3258, 32
    %v3266 = vpop.permute.xlu0 %3265
    %v3271 = vmul.f32 %v3243, %v3260
    %v3272 = vmul.f32 %v3245, %v3262
    %v3273 = vmul.f32 %v3247, %v3264
    %v3274 = vmul.f32 %v3249, %v3266
    %3279 = vrot.lane.b32.xlu0 %v3250, 32
    %v3280 = vpop.permute.xlu0 %3279
    %3281 = vrot.lane.b32.xlu0 %v3251, 32
    %v3282 = vpop.permute.xlu0 %3281
    %3283 = vrot.lane.b32.xlu0 %v3252, 32
    %v3284 = vpop.permute.xlu0 %3283
    %3285 = vrot.lane.b32.xlu0 %v3253, 32
    %v3286 = vpop.permute.xlu0 %3285
    %v3291 = vmul.f32 %v3243, %v3280
    %v3292 = vmul.f32 %v3245, %v3282
    %v3293 = vmul.f32 %v3247, %v3284
    %v3294 = vmul.f32 %v3249, %v3286
    %3299 = vrot.lane.b32.xlu0 %v3291, 32
    %v3300 = vpop.permute.xlu0 %3299
    %3301 = vrot.lane.b32.xlu0 %v3292, 32
    %v3302 = vpop.permute.xlu0 %3301
    %3303 = vrot.lane.b32.xlu0 %v3293, 32
    %v3304 = vpop.permute.xlu0 %3303
    %3305 = vrot.lane.b32.xlu0 %v3294, 32
    %v3306 = vpop.permute.xlu0 %3305
    %v3311 = vadd.f32 %v3271, %v3300
    %v3312 = vadd.f32 %v3272, %v3302
    %v3313 = vadd.f32 %v3273, %v3304
    %v3314 = vadd.f32 %v3274, %v3306
    %v3315 = vtanh.pop %v3311
    %v3316 = vtanh.pop %v3312
    %v3317 = vtanh.pop %v3313
    %v3318 = vtanh.pop %v3314
    %3323 = vrot.lane.b32.xlu0 %v3315, 32
    %v3324 = vpop.permute.xlu0 %3323
    %3325 = vrot.lane.b32.xlu0 %v3316, 32
    %v3326 = vpop.permute.xlu0 %3325
    %3327 = vrot.lane.b32.xlu0 %v3317, 32
    %v3328 = vpop.permute.xlu0 %3327
    %3329 = vrot.lane.b32.xlu0 %v3318, 32
    %v3330 = vpop.permute.xlu0 %3329
    %v3335 = vmul.f32 %v3243, %v3324
    %v3336 = vmul.f32 %v3245, %v3326
    %v3337 = vmul.f32 %v3247, %v3328
    %v3338 = vmul.f32 %v3249, %v3330
    %v3343 = vrot.slane %v3335, 4
    %v3344 = vrot.slane %v3336, 3
    %v3345 = vsel %vm386, %v3344, %v3343
    %v3346 = vrot.slane %v3337, 2
    %v3347 = vsel %vm389, %v3346, %v3345
    %v3348 = vrot.slane %v3338, 1
    %v3349 = vsel %vm392, %v3348, %v3347
    %3350 = vrot.lane.b32.xlu0 %v3349, 64
    %v3351 = vpop.permute.xlu0 %3350
    %v3353 = vsel %vm1444, %v3351, %v3066
    %v3358 = vrot.slane %v3311, 4
    %v3359 = vrot.slane %v3312, 3
    %v3360 = vsel %vm386, %v3359, %v3358
    %v3361 = vrot.slane %v3313, 2
    %v3362 = vsel %vm389, %v3361, %v3360
    %v3363 = vrot.slane %v3314, 1
    %v3364 = vsel %vm392, %v3363, %v3362
    %3365 = vrot.lane.b32.xlu0 %v3364, 96
    %v3366 = vpop.permute.xlu0 %3365
    %v3368 = vsel %vm1444, %v3366, %v3081
    %v3369 = vsel %vm1444, %v3351, 0.0
    %v3372 = vunpack.c.l.s4 1966171168
    %v3373 = vunpack.c.0.s8 %v3372
    %v3374 = vlaneseq
    %v3375 = vshrl.u32 %v3374, 7
    %v3376 = vsub.s32 %v3373, %v3375
    %v3377 = vrot.slane %v3369, %v3376
    %v3378 = vcombine.high %v3377, %v3377
    %v3380 = vunpack.c.l.s4 1966171168
    %v3381 = vunpack.c.0.s8 %v3380
    %v3382 = vlaneseq
    %v3383 = vshrl.u32 %v3382, 7
    %v3384 = vsub.s32 %v3381, %v3383
    %v3385 = vrot.slane %v3377, %v3384
    %v3387 = vunpack.c.l.s4 1966171168
    %v3388 = vunpack.c.0.s8 %v3387
    %v3389 = vlaneseq
    %v3390 = vshrl.u32 %v3389, 7
    %v3391 = vsub.s32 %v3388, %v3390
    %v3392 = vrot.slane %v3378, %v3391
    %v3393 = vcombine.high %v3385, %v3385
    %v3394 = vcombine.high %v3392, %v3392
    %v3395 = vlaneseq
    %v3396 = vshrl.u32 %v3395, 7
    %v3397 = vsub.s32 0, %v3396
    %v3398 = vrot.slane %v3385, %v3397
    %v3399 = vlaneseq
    %v3400 = vshrl.u32 %v3399, 7
    %v3401 = vsub.s32 0, %v3400
    %v3402 = vrot.slane %v3392, %v3401
    %v3403 = vlaneseq
    %v3404 = vshrl.u32 %v3403, 7
    %v3405 = vsub.s32 0, %v3404
    %v3406 = vrot.slane %v3393, %v3405
    %v3407 = vlaneseq
    %v3408 = vshrl.u32 %v3407, 7
    %v3409 = vsub.s32 0, %v3408
    %v3410 = vrot.slane %v3394, %v3409
    %3411 = vrot.lane.b32.xlu0 %v3398, 32
    %v3412 = vpop.permute.xlu0 %3411
    %3413 = vrot.lane.b32.xlu0 %v3402, 32
    %v3414 = vpop.permute.xlu0 %3413
    %3415 = vrot.lane.b32.xlu0 %v3406, 32
    %v3416 = vpop.permute.xlu0 %3415
    %3417 = vrot.lane.b32.xlu0 %v3410, 32
    %v3418 = vpop.permute.xlu0 %3417
    %3423 = vst.msk [vmem:[#allocation8 + $0x4] sm:$0x1] %vm2562, %v3412
    %3424 = vst.msk [vmem:[#allocation8 + $0xc] sm:$0x1] %vm2562, %v3414
    %3425 = vst.msk [vmem:[#allocation8 + $0x14] sm:$0x1] %vm2562, %v3416
    %3426 = vst.msk [vmem:[#allocation8 + $0x1c] sm:$0x1] %vm2562, %v3418
    %v3428 = vsel %vm193, %v3353, 0
    %3430 = vmatprep.subr.mxu0 0.0
    %3431 = vmatpush1.msra.mxu0 0.0
    %3432 = vmatprep.subr.mxu0 0.0
    %3433 = vmatpush1.msra.mxu0 0.0
    %3434 = vmatprep.subr.mxu0 0.0
    %3435 = vmatpush1.msra.mxu0 0.0
    %3436 = vmatprep.subr.mxu0 0.0
    %3437 = vmatpush1.msra.mxu0 0.0
    %3438 = vmatprep.subr.mxu0 0.0
    %3439 = vmatpush1.msra.mxu0 0.0
    %3440 = vmatprep.subr.mxu0 0.0
    %3441 = vmatpush1.msra.mxu0 0.0
    %3442 = vmatprep.subr.mxu0 0.0
    %3443 = vmatpush1.msra.mxu0 0.0
    %3444 = vmatprep.subr.mxu0 0.0
    %3445 = vmatpush1.msra.mxu0 0.0
    %3446 = vmatprep.subr.mxu0 0.0
    %3447 = vmatpush1.msra.mxu0 0.0
    %3448 = vmatprep.subr.mxu0 0.0
    %3449 = vmatpush1.msra.mxu0 0.0
    %3450 = vmatprep.subr.mxu0 0.0
    %3451 = vmatpush1.msra.mxu0 0.0
    %3452 = vmatprep.subr.mxu0 0.0
    %3453 = vmatpush1.msra.mxu0 0.0
    %3454 = vmatprep.subr.mxu0 0.0
    %3455 = vmatpush1.msra.mxu0 %v192
    %3456 = vmatprep.subr.mxu0 0.0
    %3457 = vmatpush1.msra.mxu0 %v190
    %3458 = vmatprep.subr.mxu0 0.0
    %3459 = vmatpush1.msra.mxu0 %v188
    %3460 = vmatprep.subr.mxu0 0.0
    %3461 = vmatpush1.msra.mxu0 %v186
    %3462 = vmatprep.subr.mxu0 0.0
    %3463 = vmatpush2.msra.mxu0 0.0
    %3464 = vmatprep.subr.mxu0 0.0
    %3465 = vmatpush2.msra.mxu0 0.0
    %3466 = vmatprep.subr.mxu0 0.0
    %3467 = vmatpush2.msra.mxu0 0.0
    %3468 = vmatprep.subr.mxu0 0.0
    %3469 = vmatpush2.msra.mxu0 0.0
    %3470 = vmatprep.subr.mxu0 0.0
    %3471 = vmatpush2.msra.mxu0 0.0
    %3472 = vmatprep.subr.mxu0 0.0
    %3473 = vmatpush2.msra.mxu0 0.0
    %3474 = vmatprep.subr.mxu0 0.0
    %3475 = vmatpush2.msra.mxu0 0.0
    %3476 = vmatprep.subr.mxu0 0.0
    %3477 = vmatpush2.msra.mxu0 0.0
    %3478 = vmatprep.subr.mxu0 0.0
    %3479 = vmatpush2.msra.mxu0 0.0
    %3480 = vmatprep.subr.mxu0 0.0
    %3481 = vmatpush2.msra.mxu0 0.0
    %3482 = vmatprep.subr.mxu0 0.0
    %3483 = vmatpush2.msra.mxu0 0.0
    %3484 = vmatprep.subr.mxu0 0.0
    %3485 = vmatpush2.msra.mxu0 0.0
    %3486 = vmatprep.subr.mxu0 0.0
    %3487 = vmatpush2.msra.mxu0 0.0
    %3488 = vmatprep.subr.mxu0 0.0
    %3489 = vmatpush2.msra.mxu0 0.0
    %3490 = vmatprep.subr.mxu0 0.0
    %3491 = vmatpush2.msra.mxu0 0.0
    %3492 = vmatprep.subr.mxu0 0.0
    %3493 = vmatpush2.msra.mxu0 0.0
    %3494 = vmatprep.mubr.f32.mxu0 0.0
    %3495 = vmatmul.mubr.f32.gmra.mxu0 %v3428
    %v3496 = vpop.f32.mrf.mxu0
    %v3497 = vadd.f32 0.0, %v3496
    %v3498 = vpop.f32.mrf.mxu0
    %3499 = vdwg.mxu0
    %v3501 = vrot.slane %v3497, 5
    %v3502 = vrot.slane %v3497, 6
    %v3503 = vrot.slane %v3497, 7
    %v3508 = vadd.f32 %v165, %v3501
    %v3509 = vadd.f32 %v171, %v3502
    %v3510 = vadd.f32 %v177, %v3503
    %v3511 = vadd.f32 %v183, %v3497
    %v3512 = vxor.u32 %v3508, 2147483648
    %v3513 = vxor.u32 %v3509, 2147483648
    %v3514 = vxor.u32 %v3510, 2147483648
    %v3515 = vxor.u32 %v3511, 2147483648
    %v3516 = vmul.f32 %v3512, 1.442695
    %v3517 = vpow.pop %v3516
    %v3518 = vmul.f32 %v3513, 1.442695
    %v3519 = vpow.pop %v3518
    %v3520 = vmul.f32 %v3514, 1.442695
    %v3521 = vpow.pop %v3520
    %v3522 = vmul.f32 %v3515, 1.442695
    %v3523 = vpow.pop %v3522
    %v3524 = vadd.f32 %v3517, 1.0
    %v3525 = vadd.f32 %v3519, 1.0
    %v3526 = vadd.f32 %v3521, 1.0
    %v3527 = vadd.f32 %v3523, 1.0
    %v3528 = vrcp.pop %v3524
    %v3529 = vmul.f32 1.0, %v3528
    %v3530 = vrcp.pop %v3525
    %v3531 = vmul.f32 1.0, %v3530
    %v3532 = vrcp.pop %v3526
    %v3533 = vmul.f32 1.0, %v3532
    %v3534 = vrcp.pop %v3527
    %v3535 = vmul.f32 1.0, %v3534
    %v3536 = vtanh.pop %v3508
    %v3537 = vtanh.pop %v3509
    %v3538 = vtanh.pop %v3510
    %v3539 = vtanh.pop %v3511
    %v3541 = vrot.slane %v3368, 5
    %v3542 = vrot.slane %v3368, 6
    %v3543 = vrot.slane %v3368, 7
    %3544 = vrot.lane.b32.xlu0 %v3541, 32
    %v3545 = vpop.permute.xlu0 %3544
    %3546 = vrot.lane.b32.xlu0 %v3542, 32
    %v3547 = vpop.permute.xlu0 %3546
    %3548 = vrot.lane.b32.xlu0 %v3543, 32
    %v3549 = vpop.permute.xlu0 %3548
    %3550 = vrot.lane.b32.xlu0 %v3368, 32
    %v3551 = vpop.permute.xlu0 %3550
    %v3556 = vmul.f32 %v3529, %v3545
    %v3557 = vmul.f32 %v3531, %v3547
    %v3558 = vmul.f32 %v3533, %v3549
    %v3559 = vmul.f32 %v3535, %v3551
    %3564 = vrot.lane.b32.xlu0 %v3536, 32
    %v3565 = vpop.permute.xlu0 %3564
    %3566 = vrot.lane.b32.xlu0 %v3537, 32
    %v3567 = vpop.permute.xlu0 %3566
    %3568 = vrot.lane.b32.xlu0 %v3538, 32
    %v3569 = vpop.permute.xlu0 %3568
    %3570 = vrot.lane.b32.xlu0 %v3539, 32
    %v3571 = vpop.permute.xlu0 %3570
    %v3576 = vmul.f32 %v3529, %v3565
    %v3577 = vmul.f32 %v3531, %v3567
    %v3578 = vmul.f32 %v3533, %v3569
    %v3579 = vmul.f32 %v3535, %v3571
    %3584 = vrot.lane.b32.xlu0 %v3576, 32
    %v3585 = vpop.permute.xlu0 %3584
    %3586 = vrot.lane.b32.xlu0 %v3577, 32
    %v3587 = vpop.permute.xlu0 %3586
    %3588 = vrot.lane.b32.xlu0 %v3578, 32
    %v3589 = vpop.permute.xlu0 %3588
    %3590 = vrot.lane.b32.xlu0 %v3579, 32
    %v3591 = vpop.permute.xlu0 %3590
    %v3596 = vadd.f32 %v3556, %v3585
    %v3597 = vadd.f32 %v3557, %v3587
    %v3598 = vadd.f32 %v3558, %v3589
    %v3599 = vadd.f32 %v3559, %v3591
    %v3600 = vtanh.pop %v3596
    %v3601 = vtanh.pop %v3597
    %v3602 = vtanh.pop %v3598
    %v3603 = vtanh.pop %v3599
    %3608 = vrot.lane.b32.xlu0 %v3600, 32
    %v3609 = vpop.permute.xlu0 %3608
    %3610 = vrot.lane.b32.xlu0 %v3601, 32
    %v3611 = vpop.permute.xlu0 %3610
    %3612 = vrot.lane.b32.xlu0 %v3602, 32
    %v3613 = vpop.permute.xlu0 %3612
    %3614 = vrot.lane.b32.xlu0 %v3603, 32
    %v3615 = vpop.permute.xlu0 %3614
    %v3620 = vmul.f32 %v3529, %v3609
    %v3621 = vmul.f32 %v3531, %v3611
    %v3622 = vmul.f32 %v3533, %v3613
    %v3623 = vmul.f32 %v3535, %v3615
    %v3628 = vrot.slane %v3620, 3
    %v3629 = vrot.slane %v3621, 2
    %v3630 = vsel %vm386, %v3629, %v3628
    %v3631 = vrot.slane %v3622, 1
    %v3632 = vsel %vm389, %v3631, %v3630
    %v3633 = vsel %vm392, %v3623, %v3632
    %3634 = vrot.lane.b32.xlu0 %v3633, 64
    %v3635 = vpop.permute.xlu0 %3634
    %v3637 = vsel %vm1177, %v3635, %v3353
    %v3642 = vrot.slane %v3596, 3
    %v3643 = vrot.slane %v3597, 2
    %v3644 = vsel %vm386, %v3643, %v3642
    %v3645 = vrot.slane %v3598, 1
    %v3646 = vsel %vm389, %v3645, %v3644
    %v3647 = vsel %vm392, %v3599, %v3646
    %3648 = vrot.lane.b32.xlu0 %v3647, 96
    %v3649 = vpop.permute.xlu0 %3648
    %v3651 = vsel %vm1177, %v3649, %v3368
    %v3652 = vsel %vm1177, %v3635, 0.0
    %v3655 = vunpack.c.l.s4 1966171168
    %v3656 = vunpack.c.0.s8 %v3655
    %v3657 = vlaneseq
    %v3658 = vshrl.u32 %v3657, 7
    %v3659 = vsub.s32 %v3656, %v3658
    %v3660 = vrot.slane %v3652, %v3659
    %v3661 = vcombine.high %v3660, %v3660
    %v3663 = vunpack.c.l.s4 1966171168
    %v3664 = vunpack.c.0.s8 %v3663
    %v3665 = vlaneseq
    %v3666 = vshrl.u32 %v3665, 7
    %v3667 = vsub.s32 %v3664, %v3666
    %v3668 = vrot.slane %v3660, %v3667
    %v3670 = vunpack.c.l.s4 1966171168
    %v3671 = vunpack.c.0.s8 %v3670
    %v3672 = vlaneseq
    %v3673 = vshrl.u32 %v3672, 7
    %v3674 = vsub.s32 %v3671, %v3673
    %v3675 = vrot.slane %v3661, %v3674
    %v3676 = vcombine.high %v3668, %v3668
    %v3677 = vcombine.high %v3675, %v3675
    %v3678 = vlaneseq
    %v3679 = vshrl.u32 %v3678, 7
    %v3680 = vsub.s32 0, %v3679
    %v3681 = vrot.slane %v3668, %v3680
    %v3682 = vlaneseq
    %v3683 = vshrl.u32 %v3682, 7
    %v3684 = vsub.s32 0, %v3683
    %v3685 = vrot.slane %v3675, %v3684
    %v3686 = vlaneseq
    %v3687 = vshrl.u32 %v3686, 7
    %v3688 = vsub.s32 0, %v3687
    %v3689 = vrot.slane %v3676, %v3688
    %v3690 = vlaneseq
    %v3691 = vshrl.u32 %v3690, 7
    %v3692 = vsub.s32 0, %v3691
    %v3693 = vrot.slane %v3677, %v3692
    %3694 = vrot.lane.b32.xlu0 %v3681, 32
    %v3695 = vpop.permute.xlu0 %3694
    %3696 = vrot.lane.b32.xlu0 %v3685, 32
    %v3697 = vpop.permute.xlu0 %3696
    %3698 = vrot.lane.b32.xlu0 %v3689, 32
    %v3699 = vpop.permute.xlu0 %3698
    %3700 = vrot.lane.b32.xlu0 %v3693, 32
    %v3701 = vpop.permute.xlu0 %3700
    %3706 = vst.msk [vmem:[#allocation8 + $0x3] sm:$0x1] %vm2562, %v3695
    %3707 = vst.msk [vmem:[#allocation8 + $0xb] sm:$0x1] %vm2562, %v3697
    %3708 = vst.msk [vmem:[#allocation8 + $0x13] sm:$0x1] %vm2562, %v3699
    %3709 = vst.msk [vmem:[#allocation8 + $0x1b] sm:$0x1] %vm2562, %v3701
    %v3711 = vsel %vm193, %v3637, 0
    %3713 = vmatprep.subr.mxu0 0.0
    %3714 = vmatpush1.msra.mxu0 0.0
    %3715 = vmatprep.subr.mxu0 0.0
    %3716 = vmatpush1.msra.mxu0 0.0
    %3717 = vmatprep.subr.mxu0 0.0
    %3718 = vmatpush1.msra.mxu0 0.0
    %3719 = vmatprep.subr.mxu0 0.0
    %3720 = vmatpush1.msra.mxu0 0.0
    %3721 = vmatprep.subr.mxu0 0.0
    %3722 = vmatpush1.msra.mxu0 0.0
    %3723 = vmatprep.subr.mxu0 0.0
    %3724 = vmatpush1.msra.mxu0 0.0
    %3725 = vmatprep.subr.mxu0 0.0
    %3726 = vmatpush1.msra.mxu0 0.0
    %3727 = vmatprep.subr.mxu0 0.0
    %3728 = vmatpush1.msra.mxu0 0.0
    %3729 = vmatprep.subr.mxu0 0.0
    %3730 = vmatpush1.msra.mxu0 0.0
    %3731 = vmatprep.subr.mxu0 0.0
    %3732 = vmatpush1.msra.mxu0 0.0
    %3733 = vmatprep.subr.mxu0 0.0
    %3734 = vmatpush1.msra.mxu0 0.0
    %3735 = vmatprep.subr.mxu0 0.0
    %3736 = vmatpush1.msra.mxu0 0.0
    %3737 = vmatprep.subr.mxu0 0.0
    %3738 = vmatpush1.msra.mxu0 %v192
    %3739 = vmatprep.subr.mxu0 0.0
    %3740 = vmatpush1.msra.mxu0 %v190
    %3741 = vmatprep.subr.mxu0 0.0
    %3742 = vmatpush1.msra.mxu0 %v188
    %3743 = vmatprep.subr.mxu0 0.0
    %3744 = vmatpush1.msra.mxu0 %v186
    %3745 = vmatprep.subr.mxu0 0.0
    %3746 = vmatpush2.msra.mxu0 0.0
    %3747 = vmatprep.subr.mxu0 0.0
    %3748 = vmatpush2.msra.mxu0 0.0
    %3749 = vmatprep.subr.mxu0 0.0
    %3750 = vmatpush2.msra.mxu0 0.0
    %3751 = vmatprep.subr.mxu0 0.0
    %3752 = vmatpush2.msra.mxu0 0.0
    %3753 = vmatprep.subr.mxu0 0.0
    %3754 = vmatpush2.msra.mxu0 0.0
    %3755 = vmatprep.subr.mxu0 0.0
    %3756 = vmatpush2.msra.mxu0 0.0
    %3757 = vmatprep.subr.mxu0 0.0
    %3758 = vmatpush2.msra.mxu0 0.0
    %3759 = vmatprep.subr.mxu0 0.0
    %3760 = vmatpush2.msra.mxu0 0.0
    %3761 = vmatprep.subr.mxu0 0.0
    %3762 = vmatpush2.msra.mxu0 0.0
    %3763 = vmatprep.subr.mxu0 0.0
    %3764 = vmatpush2.msra.mxu0 0.0
    %3765 = vmatprep.subr.mxu0 0.0
    %3766 = vmatpush2.msra.mxu0 0.0
    %3767 = vmatprep.subr.mxu0 0.0
    %3768 = vmatpush2.msra.mxu0 0.0
    %3769 = vmatprep.subr.mxu0 0.0
    %3770 = vmatpush2.msra.mxu0 0.0
    %3771 = vmatprep.subr.mxu0 0.0
    %3772 = vmatpush2.msra.mxu0 0.0
    %3773 = vmatprep.subr.mxu0 0.0
    %3774 = vmatpush2.msra.mxu0 0.0
    %3775 = vmatprep.subr.mxu0 0.0
    %3776 = vmatpush2.msra.mxu0 0.0
    %3777 = vmatprep.mubr.f32.mxu0 0.0
    %3778 = vmatmul.mubr.f32.gmra.mxu0 %v3711
    %v3779 = vpop.f32.mrf.mxu0
    %v3780 = vadd.f32 0.0, %v3779
    %v3781 = vpop.f32.mrf.mxu0
    %3782 = vdwg.mxu0
    %v3784 = vrot.slane %v3780, 6
    %v3785 = vrot.slane %v3780, 7
    %v3786 = vrot.slane %v3780, 1
    %v3791 = vadd.f32 %v165, %v3784
    %v3792 = vadd.f32 %v171, %v3785
    %v3793 = vadd.f32 %v177, %v3780
    %v3794 = vadd.f32 %v183, %v3786
    %v3795 = vxor.u32 %v3791, 2147483648
    %v3796 = vxor.u32 %v3792, 2147483648
    %v3797 = vxor.u32 %v3793, 2147483648
    %v3798 = vxor.u32 %v3794, 2147483648
    %v3799 = vmul.f32 %v3795, 1.442695
    %v3800 = vpow.pop %v3799
    %v3801 = vmul.f32 %v3796, 1.442695
    %v3802 = vpow.pop %v3801
    %v3803 = vmul.f32 %v3797, 1.442695
    %v3804 = vpow.pop %v3803
    %v3805 = vmul.f32 %v3798, 1.442695
    %v3806 = vpow.pop %v3805
    %v3807 = vadd.f32 %v3800, 1.0
    %v3808 = vadd.f32 %v3802, 1.0
    %v3809 = vadd.f32 %v3804, 1.0
    %v3810 = vadd.f32 %v3806, 1.0
    %v3811 = vrcp.pop %v3807
    %v3812 = vmul.f32 1.0, %v3811
    %v3813 = vrcp.pop %v3808
    %v3814 = vmul.f32 1.0, %v3813
    %v3815 = vrcp.pop %v3809
    %v3816 = vmul.f32 1.0, %v3815
    %v3817 = vrcp.pop %v3810
    %v3818 = vmul.f32 1.0, %v3817
    %v3819 = vtanh.pop %v3791
    %v3820 = vtanh.pop %v3792
    %v3821 = vtanh.pop %v3793
    %v3822 = vtanh.pop %v3794
    %v3824 = vrot.slane %v3651, 6
    %v3825 = vrot.slane %v3651, 7
    %v3826 = vrot.slane %v3651, 1
    %3827 = vrot.lane.b32.xlu0 %v3824, 32
    %v3828 = vpop.permute.xlu0 %3827
    %3829 = vrot.lane.b32.xlu0 %v3825, 32
    %v3830 = vpop.permute.xlu0 %3829
    %3831 = vrot.lane.b32.xlu0 %v3651, 32
    %v3832 = vpop.permute.xlu0 %3831
    %3833 = vrot.lane.b32.xlu0 %v3826, 32
    %v3834 = vpop.permute.xlu0 %3833
    %v3839 = vmul.f32 %v3812, %v3828
    %v3840 = vmul.f32 %v3814, %v3830
    %v3841 = vmul.f32 %v3816, %v3832
    %v3842 = vmul.f32 %v3818, %v3834
    %3847 = vrot.lane.b32.xlu0 %v3819, 32
    %v3848 = vpop.permute.xlu0 %3847
    %3849 = vrot.lane.b32.xlu0 %v3820, 32
    %v3850 = vpop.permute.xlu0 %3849
    %3851 = vrot.lane.b32.xlu0 %v3821, 32
    %v3852 = vpop.permute.xlu0 %3851
    %3853 = vrot.lane.b32.xlu0 %v3822, 32
    %v3854 = vpop.permute.xlu0 %3853
    %v3859 = vmul.f32 %v3812, %v3848
    %v3860 = vmul.f32 %v3814, %v3850
    %v3861 = vmul.f32 %v3816, %v3852
    %v3862 = vmul.f32 %v3818, %v3854
    %3867 = vrot.lane.b32.xlu0 %v3859, 32
    %v3868 = vpop.permute.xlu0 %3867
    %3869 = vrot.lane.b32.xlu0 %v3860, 32
    %v3870 = vpop.permute.xlu0 %3869
    %3871 = vrot.lane.b32.xlu0 %v3861, 32
    %v3872 = vpop.permute.xlu0 %3871
    %3873 = vrot.lane.b32.xlu0 %v3862, 32
    %v3874 = vpop.permute.xlu0 %3873
    %v3879 = vadd.f32 %v3839, %v3868
    %v3880 = vadd.f32 %v3840, %v3870
    %v3881 = vadd.f32 %v3841, %v3872
    %v3882 = vadd.f32 %v3842, %v3874
    %v3883 = vtanh.pop %v3879
    %v3884 = vtanh.pop %v3880
    %v3885 = vtanh.pop %v3881
    %v3886 = vtanh.pop %v3882
    %3891 = vrot.lane.b32.xlu0 %v3883, 32
    %v3892 = vpop.permute.xlu0 %3891
    %3893 = vrot.lane.b32.xlu0 %v3884, 32
    %v3894 = vpop.permute.xlu0 %3893
    %3895 = vrot.lane.b32.xlu0 %v3885, 32
    %v3896 = vpop.permute.xlu0 %3895
    %3897 = vrot.lane.b32.xlu0 %v3886, 32
    %v3898 = vpop.permute.xlu0 %3897
    %v3903 = vmul.f32 %v3812, %v3892
    %v3904 = vmul.f32 %v3814, %v3894
    %v3905 = vmul.f32 %v3816, %v3896
    %v3906 = vmul.f32 %v3818, %v3898
    %v3911 = vrot.slane %v3903, 2
    %v3912 = vrot.slane %v3904, 1
    %v3913 = vsel %vm386, %v3912, %v3911
    %v3914 = vsel %vm389, %v3905, %v3913
    %v3915 = vrot.slane %v3906, 7
    %v3916 = vsel %vm392, %v3915, %v3914
    %3917 = vrot.lane.b32.xlu0 %v3916, 64
    %v3918 = vpop.permute.xlu0 %3917
    %v3920 = vsel %vm912, %v3918, %v3637
    %v3925 = vrot.slane %v3879, 2
    %v3926 = vrot.slane %v3880, 1
    %v3927 = vsel %vm386, %v3926, %v3925
    %v3928 = vsel %vm389, %v3881, %v3927
    %v3929 = vrot.slane %v3882, 7
    %v3930 = vsel %vm392, %v3929, %v3928
    %3931 = vrot.lane.b32.xlu0 %v3930, 96
    %v3932 = vpop.permute.xlu0 %3931
    %v3934 = vsel %vm912, %v3932, %v3651
    %v3935 = vsel %vm912, %v3918, 0.0
    %v3938 = vunpack.c.l.s4 1966171168
    %v3939 = vunpack.c.0.s8 %v3938
    %v3940 = vlaneseq
    %v3941 = vshrl.u32 %v3940, 7
    %v3942 = vsub.s32 %v3939, %v3941
    %v3943 = vrot.slane %v3935, %v3942
    %v3944 = vcombine.high %v3943, %v3943
    %v3946 = vunpack.c.l.s4 1966171168
    %v3947 = vunpack.c.0.s8 %v3946
    %v3948 = vlaneseq
    %v3949 = vshrl.u32 %v3948, 7
    %v3950 = vsub.s32 %v3947, %v3949
    %v3951 = vrot.slane %v3943, %v3950
    %v3953 = vunpack.c.l.s4 1966171168
    %v3954 = vunpack.c.0.s8 %v3953
    %v3955 = vlaneseq
    %v3956 = vshrl.u32 %v3955, 7
    %v3957 = vsub.s32 %v3954, %v3956
    %v3958 = vrot.slane %v3944, %v3957
    %v3959 = vcombine.high %v3951, %v3951
    %v3960 = vcombine.high %v3958, %v3958
    %v3961 = vlaneseq
    %v3962 = vshrl.u32 %v3961, 7
    %v3963 = vsub.s32 0, %v3962
    %v3964 = vrot.slane %v3951, %v3963
    %v3965 = vlaneseq
    %v3966 = vshrl.u32 %v3965, 7
    %v3967 = vsub.s32 0, %v3966
    %v3968 = vrot.slane %v3958, %v3967
    %v3969 = vlaneseq
    %v3970 = vshrl.u32 %v3969, 7
    %v3971 = vsub.s32 0, %v3970
    %v3972 = vrot.slane %v3959, %v3971
    %v3973 = vlaneseq
    %v3974 = vshrl.u32 %v3973, 7
    %v3975 = vsub.s32 0, %v3974
    %v3976 = vrot.slane %v3960, %v3975
    %3977 = vrot.lane.b32.xlu0 %v3964, 32
    %v3978 = vpop.permute.xlu0 %3977
    %3979 = vrot.lane.b32.xlu0 %v3968, 32
    %v3980 = vpop.permute.xlu0 %3979
    %3981 = vrot.lane.b32.xlu0 %v3972, 32
    %v3982 = vpop.permute.xlu0 %3981
    %3983 = vrot.lane.b32.xlu0 %v3976, 32
    %v3984 = vpop.permute.xlu0 %3983
    %3989 = vst.msk [vmem:[#allocation8 + $0x2] sm:$0x1] %vm2562, %v3978
    %3990 = vst.msk [vmem:[#allocation8 + $0xa] sm:$0x1] %vm2562, %v3980
    %3991 = vst.msk [vmem:[#allocation8 + $0x12] sm:$0x1] %vm2562, %v3982
    %3992 = vst.msk [vmem:[#allocation8 + $0x1a] sm:$0x1] %vm2562, %v3984
    %v3994 = vsel %vm193, %v3920, 0
    %3996 = vmatprep.subr.mxu0 0.0
    %3997 = vmatpush1.msra.mxu0 0.0
    %3998 = vmatprep.subr.mxu0 0.0
    %3999 = vmatpush1.msra.mxu0 0.0
    %4000 = vmatprep.subr.mxu0 0.0
    %4001 = vmatpush1.msra.mxu0 0.0
    %4002 = vmatprep.subr.mxu0 0.0
    %4003 = vmatpush1.msra.mxu0 0.0
    %4004 = vmatprep.subr.mxu0 0.0
    %4005 = vmatpush1.msra.mxu0 0.0
    %4006 = vmatprep.subr.mxu0 0.0
    %4007 = vmatpush1.msra.mxu0 0.0
    %4008 = vmatprep.subr.mxu0 0.0
    %4009 = vmatpush1.msra.mxu0 0.0
    %4010 = vmatprep.subr.mxu0 0.0
    %4011 = vmatpush1.msra.mxu0 0.0
    %4012 = vmatprep.subr.mxu0 0.0
    %4013 = vmatpush1.msra.mxu0 0.0
    %4014 = vmatprep.subr.mxu0 0.0
    %4015 = vmatpush1.msra.mxu0 0.0
    %4016 = vmatprep.subr.mxu0 0.0
    %4017 = vmatpush1.msra.mxu0 0.0
    %4018 = vmatprep.subr.mxu0 0.0
    %4019 = vmatpush1.msra.mxu0 0.0
    %4020 = vmatprep.subr.mxu0 0.0
    %4021 = vmatpush1.msra.mxu0 %v192
    %4022 = vmatprep.subr.mxu0 0.0
    %4023 = vmatpush1.msra.mxu0 %v190
    %4024 = vmatprep.subr.mxu0 0.0
    %4025 = vmatpush1.msra.mxu0 %v188
    %4026 = vmatprep.subr.mxu0 0.0
    %4027 = vmatpush1.msra.mxu0 %v186
    %4028 = vmatprep.subr.mxu0 0.0
    %4029 = vmatpush2.msra.mxu0 0.0
    %4030 = vmatprep.subr.mxu0 0.0
    %4031 = vmatpush2.msra.mxu0 0.0
    %4032 = vmatprep.subr.mxu0 0.0
    %4033 = vmatpush2.msra.mxu0 0.0
    %4034 = vmatprep.subr.mxu0 0.0
    %4035 = vmatpush2.msra.mxu0 0.0
    %4036 = vmatprep.subr.mxu0 0.0
    %4037 = vmatpush2.msra.mxu0 0.0
    %4038 = vmatprep.subr.mxu0 0.0
    %4039 = vmatpush2.msra.mxu0 0.0
    %4040 = vmatprep.subr.mxu0 0.0
    %4041 = vmatpush2.msra.mxu0 0.0
    %4042 = vmatprep.subr.mxu0 0.0
    %4043 = vmatpush2.msra.mxu0 0.0
    %4044 = vmatprep.subr.mxu0 0.0
    %4045 = vmatpush2.msra.mxu0 0.0
    %4046 = vmatprep.subr.mxu0 0.0
    %4047 = vmatpush2.msra.mxu0 0.0
    %4048 = vmatprep.subr.mxu0 0.0
    %4049 = vmatpush2.msra.mxu0 0.0
    %4050 = vmatprep.subr.mxu0 0.0
    %4051 = vmatpush2.msra.mxu0 0.0
    %4052 = vmatprep.subr.mxu0 0.0
    %4053 = vmatpush2.msra.mxu0 0.0
    %4054 = vmatprep.subr.mxu0 0.0
    %4055 = vmatpush2.msra.mxu0 0.0
    %4056 = vmatprep.subr.mxu0 0.0
    %4057 = vmatpush2.msra.mxu0 0.0
    %4058 = vmatprep.subr.mxu0 0.0
    %4059 = vmatpush2.msra.mxu0 0.0
    %4060 = vmatprep.mubr.f32.mxu0 0.0
    %4061 = vmatmul.mubr.f32.gmra.mxu0 %v3994
    %v4062 = vpop.f32.mrf.mxu0
    %v4063 = vadd.f32 0.0, %v4062
    %v4064 = vpop.f32.mrf.mxu0
    %4065 = vdwg.mxu0
    %v4067 = vrot.slane %v4063, 7
    %v4068 = vrot.slane %v4063, 1
    %v4069 = vrot.slane %v4063, 2
    %v4074 = vadd.f32 %v165, %v4067
    %v4075 = vadd.f32 %v171, %v4063
    %v4076 = vadd.f32 %v177, %v4068
    %v4077 = vadd.f32 %v183, %v4069
    %v4078 = vxor.u32 %v4074, 2147483648
    %v4079 = vxor.u32 %v4075, 2147483648
    %v4080 = vxor.u32 %v4076, 2147483648
    %v4081 = vxor.u32 %v4077, 2147483648
    %v4082 = vmul.f32 %v4078, 1.442695
    %v4083 = vpow.pop %v4082
    %v4084 = vmul.f32 %v4079, 1.442695
    %v4085 = vpow.pop %v4084
    %v4086 = vmul.f32 %v4080, 1.442695
    %v4087 = vpow.pop %v4086
    %v4088 = vmul.f32 %v4081, 1.442695
    %v4089 = vpow.pop %v4088
    %v4090 = vadd.f32 %v4083, 1.0
    %v4091 = vadd.f32 %v4085, 1.0
    %v4092 = vadd.f32 %v4087, 1.0
    %v4093 = vadd.f32 %v4089, 1.0
    %v4094 = vrcp.pop %v4090
    %v4095 = vmul.f32 1.0, %v4094
    %v4096 = vrcp.pop %v4091
    %v4097 = vmul.f32 1.0, %v4096
    %v4098 = vrcp.pop %v4092
    %v4099 = vmul.f32 1.0, %v4098
    %v4100 = vrcp.pop %v4093
    %v4101 = vmul.f32 1.0, %v4100
    %v4102 = vtanh.pop %v4074
    %v4103 = vtanh.pop %v4075
    %v4104 = vtanh.pop %v4076
    %v4105 = vtanh.pop %v4077
    %v4107 = vrot.slane %v3934, 7
    %v4108 = vrot.slane %v3934, 1
    %v4109 = vrot.slane %v3934, 2
    %4110 = vrot.lane.b32.xlu0 %v4107, 32
    %v4111 = vpop.permute.xlu0 %4110
    %4112 = vrot.lane.b32.xlu0 %v3934, 32
    %v4113 = vpop.permute.xlu0 %4112
    %4114 = vrot.lane.b32.xlu0 %v4108, 32
    %v4115 = vpop.permute.xlu0 %4114
    %4116 = vrot.lane.b32.xlu0 %v4109, 32
    %v4117 = vpop.permute.xlu0 %4116
    %v4122 = vmul.f32 %v4095, %v4111
    %v4123 = vmul.f32 %v4097, %v4113
    %v4124 = vmul.f32 %v4099, %v4115
    %v4125 = vmul.f32 %v4101, %v4117
    %4130 = vrot.lane.b32.xlu0 %v4102, 32
    %v4131 = vpop.permute.xlu0 %4130
    %4132 = vrot.lane.b32.xlu0 %v4103, 32
    %v4133 = vpop.permute.xlu0 %4132
    %4134 = vrot.lane.b32.xlu0 %v4104, 32
    %v4135 = vpop.permute.xlu0 %4134
    %4136 = vrot.lane.b32.xlu0 %v4105, 32
    %v4137 = vpop.permute.xlu0 %4136
    %v4142 = vmul.f32 %v4095, %v4131
    %v4143 = vmul.f32 %v4097, %v4133
    %v4144 = vmul.f32 %v4099, %v4135
    %v4145 = vmul.f32 %v4101, %v4137
    %4150 = vrot.lane.b32.xlu0 %v4142, 32
    %v4151 = vpop.permute.xlu0 %4150
    %4152 = vrot.lane.b32.xlu0 %v4143, 32
    %v4153 = vpop.permute.xlu0 %4152
    %4154 = vrot.lane.b32.xlu0 %v4144, 32
    %v4155 = vpop.permute.xlu0 %4154
    %4156 = vrot.lane.b32.xlu0 %v4145, 32
    %v4157 = vpop.permute.xlu0 %4156
    %v4162 = vadd.f32 %v4122, %v4151
    %v4163 = vadd.f32 %v4123, %v4153
    %v4164 = vadd.f32 %v4124, %v4155
    %v4165 = vadd.f32 %v4125, %v4157
    %v4166 = vtanh.pop %v4162
    %v4167 = vtanh.pop %v4163
    %v4168 = vtanh.pop %v4164
    %v4169 = vtanh.pop %v4165
    %4174 = vrot.lane.b32.xlu0 %v4166, 32
    %v4175 = vpop.permute.xlu0 %4174
    %4176 = vrot.lane.b32.xlu0 %v4167, 32
    %v4177 = vpop.permute.xlu0 %4176
    %4178 = vrot.lane.b32.xlu0 %v4168, 32
    %v4179 = vpop.permute.xlu0 %4178
    %4180 = vrot.lane.b32.xlu0 %v4169, 32
    %v4181 = vpop.permute.xlu0 %4180
    %v4186 = vmul.f32 %v4095, %v4175
    %v4187 = vmul.f32 %v4097, %v4177
    %v4188 = vmul.f32 %v4099, %v4179
    %v4189 = vmul.f32 %v4101, %v4181
    %v4194 = vrot.slane %v4186, 1
    %v4195 = vsel %vm386, %v4187, %v4194
    %v4196 = vrot.slane %v4188, 7
    %v4197 = vsel %vm389, %v4196, %v4195
    %v4198 = vrot.slane %v4189, 6
    %v4199 = vsel %vm392, %v4198, %v4197
    %4200 = vrot.lane.b32.xlu0 %v4199, 64
    %v4201 = vpop.permute.xlu0 %4200
    %v4203 = vsel %vm647, %v4201, %v3920
    %v4208 = vrot.slane %v4162, 1
    %v4209 = vsel %vm386, %v4163, %v4208
    %v4210 = vrot.slane %v4164, 7
    %v4211 = vsel %vm389, %v4210, %v4209
    %v4212 = vrot.slane %v4165, 6
    %v4213 = vsel %vm392, %v4212, %v4211
    %4214 = vrot.lane.b32.xlu0 %v4213, 96
    %v4215 = vpop.permute.xlu0 %4214
    %v4217 = vsel %vm647, %v4215, %v3934
    %v4218 = vsel %vm647, %v4201, 0.0
    %v4221 = vunpack.c.l.s4 1966171168
    %v4222 = vunpack.c.0.s8 %v4221
    %v4223 = vlaneseq
    %v4224 = vshrl.u32 %v4223, 7
    %v4225 = vsub.s32 %v4222, %v4224
    %v4226 = vrot.slane %v4218, %v4225
    %v4227 = vcombine.high %v4226, %v4226
    %v4229 = vunpack.c.l.s4 1966171168
    %v4230 = vunpack.c.0.s8 %v4229
    %v4231 = vlaneseq
    %v4232 = vshrl.u32 %v4231, 7
    %v4233 = vsub.s32 %v4230, %v4232
    %v4234 = vrot.slane %v4226, %v4233
    %v4236 = vunpack.c.l.s4 1966171168
    %v4237 = vunpack.c.0.s8 %v4236
    %v4238 = vlaneseq
    %v4239 = vshrl.u32 %v4238, 7
    %v4240 = vsub.s32 %v4237, %v4239
    %v4241 = vrot.slane %v4227, %v4240
    %v4242 = vcombine.high %v4234, %v4234
    %v4243 = vcombine.high %v4241, %v4241
    %v4244 = vlaneseq
    %v4245 = vshrl.u32 %v4244, 7
    %v4246 = vsub.s32 0, %v4245
    %v4247 = vrot.slane %v4234, %v4246
    %v4248 = vlaneseq
    %v4249 = vshrl.u32 %v4248, 7
    %v4250 = vsub.s32 0, %v4249
    %v4251 = vrot.slane %v4241, %v4250
    %v4252 = vlaneseq
    %v4253 = vshrl.u32 %v4252, 7
    %v4254 = vsub.s32 0, %v4253
    %v4255 = vrot.slane %v4242, %v4254
    %v4256 = vlaneseq
    %v4257 = vshrl.u32 %v4256, 7
    %v4258 = vsub.s32 0, %v4257
    %v4259 = vrot.slane %v4243, %v4258
    %4260 = vrot.lane.b32.xlu0 %v4247, 32
    %v4261 = vpop.permute.xlu0 %4260
    %4262 = vrot.lane.b32.xlu0 %v4251, 32
    %v4263 = vpop.permute.xlu0 %4262
    %4264 = vrot.lane.b32.xlu0 %v4255, 32
    %v4265 = vpop.permute.xlu0 %4264
    %4266 = vrot.lane.b32.xlu0 %v4259, 32
    %v4267 = vpop.permute.xlu0 %4266
    %4272 = vst.msk [vmem:[#allocation8 + $0x1] sm:$0x1] %vm2562, %v4261
    %4273 = vst.msk [vmem:[#allocation8 + $0x9] sm:$0x1] %vm2562, %v4263
    %4274 = vst.msk [vmem:[#allocation8 + $0x11] sm:$0x1] %vm2562, %v4265
    %4275 = vst.msk [vmem:[#allocation8 + $0x19] sm:$0x1] %vm2562, %v4267
    %v4277 = vsel %vm193, %v4203, 0
    %4279 = vmatprep.subr.mxu0 0.0
    %4280 = vmatpush1.msra.mxu0 0.0
    %4281 = vmatprep.subr.mxu0 0.0
    %4282 = vmatpush1.msra.mxu0 0.0
    %4283 = vmatprep.subr.mxu0 0.0
    %4284 = vmatpush1.msra.mxu0 0.0
    %4285 = vmatprep.subr.mxu0 0.0
    %4286 = vmatpush1.msra.mxu0 0.0
    %4287 = vmatprep.subr.mxu0 0.0
    %4288 = vmatpush1.msra.mxu0 0.0
    %4289 = vmatprep.subr.mxu0 0.0
    %4290 = vmatpush1.msra.mxu0 0.0
    %4291 = vmatprep.subr.mxu0 0.0
    %4292 = vmatpush1.msra.mxu0 0.0
    %4293 = vmatprep.subr.mxu0 0.0
    %4294 = vmatpush1.msra.mxu0 0.0
    %4295 = vmatprep.subr.mxu0 0.0
    %4296 = vmatpush1.msra.mxu0 0.0
    %4297 = vmatprep.subr.mxu0 0.0
    %4298 = vmatpush1.msra.mxu0 0.0
    %4299 = vmatprep.subr.mxu0 0.0
    %4300 = vmatpush1.msra.mxu0 0.0
    %4301 = vmatprep.subr.mxu0 0.0
    %4302 = vmatpush1.msra.mxu0 0.0
    %4303 = vmatprep.subr.mxu0 0.0
    %4304 = vmatpush1.msra.mxu0 %v192
    %4305 = vmatprep.subr.mxu0 0.0
    %4306 = vmatpush1.msra.mxu0 %v190
    %4307 = vmatprep.subr.mxu0 0.0
    %4308 = vmatpush1.msra.mxu0 %v188
    %4309 = vmatprep.subr.mxu0 0.0
    %4310 = vmatpush1.msra.mxu0 %v186
    %4311 = vmatprep.subr.mxu0 0.0
    %4312 = vmatpush2.msra.mxu0 0.0
    %4313 = vmatprep.subr.mxu0 0.0
    %4314 = vmatpush2.msra.mxu0 0.0
    %4315 = vmatprep.subr.mxu0 0.0
    %4316 = vmatpush2.msra.mxu0 0.0
    %4317 = vmatprep.subr.mxu0 0.0
    %4318 = vmatpush2.msra.mxu0 0.0
    %4319 = vmatprep.subr.mxu0 0.0
    %4320 = vmatpush2.msra.mxu0 0.0
    %4321 = vmatprep.subr.mxu0 0.0
    %4322 = vmatpush2.msra.mxu0 0.0
    %4323 = vmatprep.subr.mxu0 0.0
    %4324 = vmatpush2.msra.mxu0 0.0
    %4325 = vmatprep.subr.mxu0 0.0
    %4326 = vmatpush2.msra.mxu0 0.0
    %4327 = vmatprep.subr.mxu0 0.0
    %4328 = vmatpush2.msra.mxu0 0.0
    %4329 = vmatprep.subr.mxu0 0.0
    %4330 = vmatpush2.msra.mxu0 0.0
    %4331 = vmatprep.subr.mxu0 0.0
    %4332 = vmatpush2.msra.mxu0 0.0
    %4333 = vmatprep.subr.mxu0 0.0
    %4334 = vmatpush2.msra.mxu0 0.0
    %4335 = vmatprep.subr.mxu0 0.0
    %4336 = vmatpush2.msra.mxu0 0.0
    %4337 = vmatprep.subr.mxu0 0.0
    %4338 = vmatpush2.msra.mxu0 0.0
    %4339 = vmatprep.subr.mxu0 0.0
    %4340 = vmatpush2.msra.mxu0 0.0
    %4341 = vmatprep.subr.mxu0 0.0
    %4342 = vmatpush2.msra.mxu0 0.0
    %4343 = vmatprep.mubr.f32.mxu0 0.0
    %4344 = vmatmul.mubr.f32.gmra.mxu0 %v4277
    %v4345 = vpop.f32.mrf.mxu0
    %v4346 = vadd.f32 0.0, %v4345
    %v4347 = vpop.f32.mrf.mxu0
    %4348 = vdwg.mxu0
    %v4350 = vrot.slane %v4346, 1
    %v4351 = vrot.slane %v4346, 2
    %v4352 = vrot.slane %v4346, 3
    %v4357 = vadd.f32 %v165, %v4346
    %v4358 = vadd.f32 %v171, %v4350
    %v4359 = vadd.f32 %v177, %v4351
    %v4360 = vadd.f32 %v183, %v4352
    %v4361 = vxor.u32 %v4357, 2147483648
    %v4362 = vxor.u32 %v4358, 2147483648
    %v4363 = vxor.u32 %v4359, 2147483648
    %v4364 = vxor.u32 %v4360, 2147483648
    %v4365 = vmul.f32 %v4361, 1.442695
    %v4366 = vpow.pop %v4365
    %v4367 = vmul.f32 %v4362, 1.442695
    %v4368 = vpow.pop %v4367
    %v4369 = vmul.f32 %v4363, 1.442695
    %v4370 = vpow.pop %v4369
    %v4371 = vmul.f32 %v4364, 1.442695
    %v4372 = vpow.pop %v4371
    %v4373 = vadd.f32 %v4366, 1.0
    %v4374 = vadd.f32 %v4368, 1.0
    %v4375 = vadd.f32 %v4370, 1.0
    %v4376 = vadd.f32 %v4372, 1.0
    %v4377 = vrcp.pop %v4373
    %v4378 = vmul.f32 1.0, %v4377
    %v4379 = vrcp.pop %v4374
    %v4380 = vmul.f32 1.0, %v4379
    %v4381 = vrcp.pop %v4375
    %v4382 = vmul.f32 1.0, %v4381
    %v4383 = vrcp.pop %v4376
    %v4384 = vmul.f32 1.0, %v4383
    %v4385 = vtanh.pop %v4357
    %v4386 = vtanh.pop %v4358
    %v4387 = vtanh.pop %v4359
    %v4388 = vtanh.pop %v4360
    %v4390 = vrot.slane %v4217, 1
    %v4391 = vrot.slane %v4217, 2
    %v4392 = vrot.slane %v4217, 3
    %4393 = vrot.lane.b32.xlu0 %v4217, 32
    %v4394 = vpop.permute.xlu0 %4393
    %4395 = vrot.lane.b32.xlu0 %v4390, 32
    %v4396 = vpop.permute.xlu0 %4395
    %4397 = vrot.lane.b32.xlu0 %v4391, 32
    %v4398 = vpop.permute.xlu0 %4397
    %4399 = vrot.lane.b32.xlu0 %v4392, 32
    %v4400 = vpop.permute.xlu0 %4399
    %v4405 = vmul.f32 %v4378, %v4394
    %v4406 = vmul.f32 %v4380, %v4396
    %v4407 = vmul.f32 %v4382, %v4398
    %v4408 = vmul.f32 %v4384, %v4400
    %4413 = vrot.lane.b32.xlu0 %v4385, 32
    %v4414 = vpop.permute.xlu0 %4413
    %4415 = vrot.lane.b32.xlu0 %v4386, 32
    %v4416 = vpop.permute.xlu0 %4415
    %4417 = vrot.lane.b32.xlu0 %v4387, 32
    %v4418 = vpop.permute.xlu0 %4417
    %4419 = vrot.lane.b32.xlu0 %v4388, 32
    %v4420 = vpop.permute.xlu0 %4419
    %v4425 = vmul.f32 %v4378, %v4414
    %v4426 = vmul.f32 %v4380, %v4416
    %v4427 = vmul.f32 %v4382, %v4418
    %v4428 = vmul.f32 %v4384, %v4420
    %4433 = vrot.lane.b32.xlu0 %v4425, 32
    %v4434 = vpop.permute.xlu0 %4433
    %4435 = vrot.lane.b32.xlu0 %v4426, 32
    %v4436 = vpop.permute.xlu0 %4435
    %4437 = vrot.lane.b32.xlu0 %v4427, 32
    %v4438 = vpop.permute.xlu0 %4437
    %4439 = vrot.lane.b32.xlu0 %v4428, 32
    %v4440 = vpop.permute.xlu0 %4439
    %v4445 = vadd.f32 %v4405, %v4434
    %v4446 = vadd.f32 %v4406, %v4436
    %v4447 = vadd.f32 %v4407, %v4438
    %v4448 = vadd.f32 %v4408, %v4440
    %v4449 = vtanh.pop %v4445
    %v4450 = vtanh.pop %v4446
    %v4451 = vtanh.pop %v4447
    %v4452 = vtanh.pop %v4448
    %4457 = vrot.lane.b32.xlu0 %v4449, 32
    %v4458 = vpop.permute.xlu0 %4457
    %4459 = vrot.lane.b32.xlu0 %v4450, 32
    %v4460 = vpop.permute.xlu0 %4459
    %4461 = vrot.lane.b32.xlu0 %v4451, 32
    %v4462 = vpop.permute.xlu0 %4461
    %4463 = vrot.lane.b32.xlu0 %v4452, 32
    %v4464 = vpop.permute.xlu0 %4463
    %v4469 = vmul.f32 %v4378, %v4458
    %v4470 = vmul.f32 %v4380, %v4460
    %v4471 = vmul.f32 %v4382, %v4462
    %v4472 = vmul.f32 %v4384, %v4464
    %v4477 = vrot.slane %v4470, 7
    %v4478 = vsel %vm386, %v4477, %v4469
    %v4479 = vrot.slane %v4471, 6
    %v4480 = vsel %vm389, %v4479, %v4478
    %v4481 = vrot.slane %v4472, 5
    %v4482 = vsel %vm392, %v4481, %v4480
    %4483 = vrot.lane.b32.xlu0 %v4482, 64
    %v4484 = vpop.permute.xlu0 %4483
    %v4486 = vsel %vm380, %v4484, 0.0
    %v4489 = vunpack.c.l.s4 1966171168
    %v4490 = vunpack.c.0.s8 %v4489
    %v4491 = vlaneseq
    %v4492 = vshrl.u32 %v4491, 7
    %v4493 = vsub.s32 %v4490, %v4492
    %v4494 = vrot.slane %v4486, %v4493
    %v4495 = vcombine.high %v4494, %v4494
    %v4497 = vunpack.c.l.s4 1966171168
    %v4498 = vunpack.c.0.s8 %v4497
    %v4499 = vlaneseq
    %v4500 = vshrl.u32 %v4499, 7
    %v4501 = vsub.s32 %v4498, %v4500
    %v4502 = vrot.slane %v4494, %v4501
    %v4504 = vunpack.c.l.s4 1966171168
    %v4505 = vunpack.c.0.s8 %v4504
    %v4506 = vlaneseq
    %v4507 = vshrl.u32 %v4506, 7
    %v4508 = vsub.s32 %v4505, %v4507
    %v4509 = vrot.slane %v4495, %v4508
    %v4510 = vcombine.high %v4502, %v4502
    %v4511 = vcombine.high %v4509, %v4509
    %v4512 = vlaneseq
    %v4513 = vshrl.u32 %v4512, 7
    %v4514 = vsub.s32 0, %v4513
    %v4515 = vrot.slane %v4502, %v4514
    %v4516 = vlaneseq
    %v4517 = vshrl.u32 %v4516, 7
    %v4518 = vsub.s32 0, %v4517
    %v4519 = vrot.slane %v4509, %v4518
    %v4520 = vlaneseq
    %v4521 = vshrl.u32 %v4520, 7
    %v4522 = vsub.s32 0, %v4521
    %v4523 = vrot.slane %v4510, %v4522
    %v4524 = vlaneseq
    %v4525 = vshrl.u32 %v4524, 7
    %v4526 = vsub.s32 0, %v4525
    %v4527 = vrot.slane %v4511, %v4526
    %4528 = vrot.lane.b32.xlu0 %v4515, 32
    %v4529 = vpop.permute.xlu0 %4528
    %4530 = vrot.lane.b32.xlu0 %v4519, 32
    %v4531 = vpop.permute.xlu0 %4530
    %4532 = vrot.lane.b32.xlu0 %v4523, 32
    %v4533 = vpop.permute.xlu0 %4532
    %4534 = vrot.lane.b32.xlu0 %v4527, 32
    %v4535 = vpop.permute.xlu0 %4534
    %4540 = vst.msk [vmem:[#allocation8] sm:$0x1] %vm2562, %v4529
    %4541 = vst.msk [vmem:[#allocation8 + $0x8] sm:$0x1] %vm2562, %v4531
    %4542 = vst.msk [vmem:[#allocation8 + $0x10] sm:$0x1] %vm2562, %v4533
    %4543 = vst.msk [vmem:[#allocation8 + $0x18] sm:$0x1] %vm2562, %v4535
    // Predicated region
    $region34: #{seq_encoder_forward.1} parent=1 // pred_check
      _
    $region35: #{seq_encoder_forward.1} parent=1 // pred_check_branch
      %4545 = sbr.rel (0) target = $region37
    $region36: #{seq_encoder_forward.1} parent=1 // pred_region
      %s4547 = ssub.s32 512, 512
      %4548 = vsyncadd [#allocation4], %s4547
      %s4549 = sshll.u32 [#allocation8], 4
      %s4550 = int_to_ptr.vmem [resolvable:$true] %s4549
      %4555 = dma.vmem_to_hbm [thread:$0]  %s4550, 512, %s5, [#allocation4], 128, 128, 8
    $region37: #{seq_encoder_forward.1} parent=1 // pred_fallthru
      _
    // Predicated region
    $region38: #{seq_encoder_forward.1} parent=1 // pred_check
      _
    $region39: #{seq_encoder_forward.1} parent=1 // pred_check_branch
      %4557 = sbr.rel (0) target = $region41
    $region40: #{seq_encoder_forward.1} parent=1 // pred_region
      %4558 = dma.done [#allocation4], 512
    $region41: #{seq_encoder_forward.1} parent=1 // pred_fallthru
      _
    %4559 = vsyncpa [#allocation3], 1
    %4560 = vsyncpa [#allocation6], 1
    %4561 = vsyncpa [#allocation4], 1

</llo_original>
